<compile_context>
chip_gen: v5e
topology: v5e:2x2
jax: 0.10.0
libtpu: 0.0.40
codegen_flags: <defaults>
</compile_context>

<pallas_src>
import functools

import jax
import jax.numpy as jnp
from jax.experimental import pallas as pl
from jax.experimental.pallas import tpu as pltpu

NEG_SLOPE = 0.01  # F.leaky_relu default negative slope


# ----------------------------- fused Pallas kernel --------------------------------

def _critic2_kernel(xb1_ref, xb2_ref,
                    w11_ref, b11_ref, w12_ref, b12_ref,
                    w21_ref, b21_ref, w22_ref, b22_ref,
                    w1t_ref, b1_ref, w2t_ref, b2_ref, w3t_ref, b3_ref,
                    o_ref, *, h, w):
    n_batch = xb1_ref.shape[0]
    k = w11_ref.shape[0]          # conv taps (5)
    oc = w11_ref.shape[1]         # conv out channels (32)

    def lrelu(v):
        return jnp.maximum(v, NEG_SLOPE * v)

    def conv_pair(x2d, wa_ref, ba_ref, wb_ref, bb_ref, conv_len, inner_len):
        # x2d: (C_in, conv_len*inner_len), columns ordered (conv_axis, other_axis).
        s1 = conv_len - k + 1
        s2 = s1 - k + 1
        acc = jnp.zeros((oc, s1 * inner_len), jnp.float32)
        for t in range(k):   # tap-wise accumulation: static lane slices, no im2col buffer
            acc += jnp.dot(wa_ref[t], x2d[:, t * inner_len:(t + s1) * inner_len],
                           preferred_element_type=jnp.float32)
        a = lrelu(acc + ba_ref[...])
        acc2 = jnp.zeros((oc, s2 * inner_len), jnp.float32)
        for t in range(k):
            acc2 += jnp.dot(wb_ref[t], a[:, t * inner_len:(t + s2) * inner_len],
                            preferred_element_type=jnp.float32)
        return lrelu(acc2 + bb_ref[...])            # (oc, s2*inner_len) = (32, 20)

    rows = []
    for n in range(n_batch):                        # N is tiny & static
        a12 = conv_pair(xb1_ref[n], w11_ref, b11_ref, w12_ref, b12_ref, h, w)  # (o,(i,j))
        a22 = conv_pair(xb2_ref[n], w21_ref, b21_ref, w22_ref, b22_ref, w, h)  # (o,(j,i))
        ab = jnp.concatenate([a12, a22], axis=1)    # (32, 40): per-o [branch1 | branch2]
        # flatten to one lane-dense feature row; fc1 columns were permuted to this order
        rows.append(jnp.concatenate([ab[o:o + 1, :] for o in range(oc)], axis=1))
    feat = jnp.concatenate(rows, axis=0)            # (N, 1280)

    hdn = lrelu(jnp.dot(feat, w1t_ref[...], preferred_element_type=jnp.float32)
                + b1_ref[...])
    hdn = lrelu(jnp.dot(hdn, w2t_ref[...], preferred_element_type=jnp.float32)
                + b2_ref[...])
    o_ref[...] = (jnp.dot(hdn, w3t_ref[...], preferred_element_type=jnp.float32)
                  + b3_ref[...])                    # (N, 128); column 0 is the value


# ----------------------------- one-time parameter packing -------------------------

def prepare_params(p):
    """Pack PyTorch-layout parameters into kernel layouts. Call ONCE (off hot path)."""
    oc = p["conv1_1_w"].shape[0]
    f1, f1_in = p["fc1_w"].shape
    f2 = p["fc2_w"].shape[0]

    # conv weights as (tap, out_ch, in_ch) so w[t] @ x_slice contracts input channels
    w11 = jnp.transpose(p["conv1_1_w"][:, :, :, 0], (2, 0, 1))   # (5, 32, 5)
    w12 = jnp.transpose(p["conv1_2_w"][:, :, :, 0], (2, 0, 1))   # (5, 32, 32)
    w21 = jnp.transpose(p["conv2_1_w"][:, :, 0, :], (2, 0, 1))   # (5, 32, 5)
    w22 = jnp.transpose(p["conv2_2_w"][:, :, 0, :], (2, 0, 1))   # (5, 32, 32)

    # fc1: permute columns from PyTorch flatten order ([branch1 (o,i,j)][branch2 (o,i,j)])
    # to the kernel's feature order (o, [branch1 (i,j) | branch2 (j,i)]).
    half = f1_in // 2            # 640
    per_o = half // oc           # 20
    w1a = p["fc1_w"][:, :half].reshape(f1, oc, per_o)             # (f, o, (i,j))
    w1b = p["fc1_w"][:, half:].reshape(f1, oc, per_o // 2, 2)     # (f, o, i, j)
    w1b = jnp.transpose(w1b, (0, 1, 3, 2)).reshape(f1, oc, per_o)  # (f, o, (j,i))
    w1t = jnp.concatenate([w1a, w1b], axis=2).reshape(f1, f1_in).T  # (1280, 512)

    # state-value head zero-padded to 128 output lanes (lane-dense final store)
    w3t = jnp.zeros((f2, 128), jnp.float32).at[:, 0].set(p["sv_w"][0])
    b3 = jnp.zeros((1, 128), jnp.float32).at[0, 0].set(p["sv_b"][0])

    return {
        "w11": w11, "b11": p["conv1_1_b"].reshape(oc, 1),
        "w12": w12, "b12": p["conv1_2_b"].reshape(oc, 1),
        "w21": w21, "b21": p["conv2_1_b"].reshape(oc, 1),
        "w22": w22, "b22": p["conv2_2_b"].reshape(oc, 1),
        "w1t": w1t, "b1": p["fc1_b"].reshape(1, f1),
        "w2t": p["fc2_w"].T, "b2": p["fc2_b"].reshape(1, f2),
        "w3t": w3t, "b3": b3,
    }


# ----------------------------- forward (wrapper) ----------------------------------

def critic2_forward(x, pp):
    """x: (N, 5, H, W) float32 NCHW; pp: output of prepare_params. Returns (N, 1)."""
    n, c, h, w = x.shape
    # two tiny (4 KB) layouts of x: columns ordered (h, w) for branch 1, (w, h) for branch 2
    xb1 = x.reshape(n, c, h * w)
    xb2 = jnp.transpose(x, (0, 1, 3, 2)).reshape(n, c, h * w)

    args = (xb1, xb2,
            pp["w11"], pp["b11"], pp["w12"], pp["b12"],
            pp["w21"], pp["b21"], pp["w22"], pp["b22"],
            pp["w1t"], pp["b1"], pp["w2t"], pp["b2"], pp["w3t"], pp["b3"])

    def full_spec(a):
        nd = a.ndim
        return pl.BlockSpec(a.shape, lambda *_: (0,) * nd)

    k = pp["w11"].shape[0]
    oc = pp["w11"].shape[1]
    s1, s2 = h - k + 1, h - 2 * (k - 1)
    f1, f2 = pp["w2t"].shape
    flops = 2 * n * (2 * (oc * s1 * w * (c * k) + oc * s2 * w * (oc * k))
                     + pp["w1t"].shape[0] * f1 + f1 * f2 + f2 * 128)
    bytes_accessed = sum(int(a.size) * a.dtype.itemsize for a in args) + n * 128 * 4

    out = pl.pallas_call(
        functools.partial(_critic2_kernel, h=h, w=w),
        out_shape=jax.ShapeDtypeStruct((n, 128), jnp.float32),
        grid=(1,),
        in_specs=[full_spec(a) for a in args],
        out_specs=pl.BlockSpec((n, 128), lambda *_: (0, 0)),
        compiler_params=pltpu.CompilerParams(dimension_semantics=("arbitrary",)),
        cost_estimate=pl.CostEstimate(flops=flops, transcendentals=0,
                                      bytes_accessed=bytes_accessed),
    )(*args)
    return out[:, :1]


# ----------------------------- pure-JAX reference (PyTorch semantics) --------------

def critic2_reference(x, p):
    def conv(v, wgt, b):
        y = jax.lax.conv_general_dilated(
            v, wgt, window_strides=(1, 1), padding="VALID",
            dimension_numbers=("NCHW", "OIHW", "NCHW"))
        return y + b[None, :, None, None]

    lrelu = lambda v: jnp.where(v > 0, v, NEG_SLOPE * v)
    x11 = lrelu(conv(x, p["conv1_1_w"], p["conv1_1_b"]))
    x12 = lrelu(conv(x11, p["conv1_2_w"], p["conv1_2_b"]))
    x21 = lrelu(conv(x, p["conv2_1_w"], p["conv2_1_b"]))
    x22 = lrelu(conv(x21, p["conv2_2_w"], p["conv2_2_b"]))
    n = x.shape[0]
    f = jnp.concatenate([x12.reshape(n, -1), x22.reshape(n, -1)], axis=1)
    hdn = lrelu(f @ p["fc1_w"].T + p["fc1_b"])
    hdn = lrelu(hdn @ p["fc2_w"].T + p["fc2_b"])
    return hdn @ p["sv_w"].T + p["sv_b"]


# ----------------------------- main -------------------------------------------------

if __name__ == "__main__":
    # Shapes implied by the module: fc1 in_features 1280 = 32*(H-8)*W + 32*H*(W-8)
    # with 5 input channels  =>  H = W = 10.  Small batch of 2.
    N, C, H, W = 2, 5, 10, 10
    OC, K = 32, 5
    F1_IN = OC * (H - 2 * (K - 1)) * W + OC * H * (W - 2 * (K - 1))  # 1280
    F1, F2 = 512, 256
    assert F1_IN == 1280

    key = jax.random.PRNGKey(0)
    ks = jax.random.split(key, 15)
    params = {
        "conv1_1_w": 0.1 * jax.random.normal(ks[0], (OC, C, K, 1), jnp.float32),
        "conv1_1_b": 0.1 * jax.random.normal(ks[1], (OC,), jnp.float32),
        "conv1_2_w": 0.1 * jax.random.normal(ks[2], (OC, OC, K, 1), jnp.float32),
        "conv1_2_b": 0.1 * jax.random.normal(ks[3], (OC,), jnp.float32),
        "conv2_1_w": 0.1 * jax.random.normal(ks[4], (OC, C, 1, K), jnp.float32),
        "conv2_1_b": 0.1 * jax.random.normal(ks[5], (OC,), jnp.float32),
        "conv2_2_w": 0.1 * jax.random.normal(ks[6], (OC, OC, 1, K), jnp.float32),
        "conv2_2_b": 0.1 * jax.random.normal(ks[7], (OC,), jnp.float32),
        "fc1_w": 0.05 * jax.random.normal(ks[8], (F1, F1_IN), jnp.float32),
        "fc1_b": 0.05 * jax.random.normal(ks[9], (F1,), jnp.float32),
        "fc2_w": 0.05 * jax.random.normal(ks[10], (F2, F1), jnp.float32),
        "fc2_b": 0.05 * jax.random.normal(ks[11], (F2,), jnp.float32),
        "sv_w": 0.1 * jax.random.normal(ks[12], (1, F2), jnp.float32),
        "sv_b": 0.1 * jax.random.normal(ks[13], (1,), jnp.float32),
    }
    x = jax.random.normal(ks[14], (N, C, H, W), jnp.float32)

    prepped = prepare_params(params)               # one-time packing, off the hot path
    value = jax.block_until_ready(jax.jit(critic2_forward)(x, prepped))

    ref = jax.block_until_ready(critic2_reference(x, params))
    assert value.shape == (N, 1), value.shape
    assert jnp.allclose(value, ref, atol=2e-4, rtol=2e-4), (value, ref)

    print("KERNEL_OK")
</pallas_src>

<mosaic_0001>
module attributes {stable_mosaic.version = 11 : i64} {
  func.func @_critic2_kernel(%arg0: i32, %arg1: memref<2x5x100xf32, #tpu.memory_space<vmem>>, %arg2: memref<2x5x100xf32, #tpu.memory_space<vmem>>, %arg3: memref<5x32x5xf32, #tpu.memory_space<vmem>>, %arg4: memref<32x1xf32, #tpu.memory_space<vmem>>, %arg5: memref<5x32x32xf32, #tpu.memory_space<vmem>>, %arg6: memref<32x1xf32, #tpu.memory_space<vmem>>, %arg7: memref<5x32x5xf32, #tpu.memory_space<vmem>>, %arg8: memref<32x1xf32, #tpu.memory_space<vmem>>, %arg9: memref<5x32x32xf32, #tpu.memory_space<vmem>>, %arg10: memref<32x1xf32, #tpu.memory_space<vmem>>, %arg11: memref<1280x512xf32, #tpu.memory_space<vmem>>, %arg12: memref<1x512xf32, #tpu.memory_space<vmem>>, %arg13: memref<512x256xf32, #tpu.memory_space<vmem>>, %arg14: memref<1x256xf32, #tpu.memory_space<vmem>>, %arg15: memref<256x128xf32, #tpu.memory_space<vmem>>, %arg16: memref<1x128xf32, #tpu.memory_space<vmem>>, %arg17: memref<2x128xf32, #tpu.memory_space<vmem>>) attributes {dimension_semantics = [#tpu.dimension_semantics<arbitrary>], iteration_bounds = array<i64: 1>, scalar_prefetch = 0 : i64, scratch_operands = 0 : i64, tpu.core_type = #tpu.core_type<tc>, window_params = [{pipeline_mode = #tpu.pipeline_mode<synchronous>, transform_indices = @transform_0, window_bounds = array<i64: 2, 5, 100>}, {pipeline_mode = #tpu.pipeline_mode<synchronous>, transform_indices = @transform_1, window_bounds = array<i64: 2, 5, 100>}, {pipeline_mode = #tpu.pipeline_mode<synchronous>, transform_indices = @transform_2, window_bounds = array<i64: 5, 32, 5>}, {pipeline_mode = #tpu.pipeline_mode<synchronous>, transform_indices = @transform_3, window_bounds = array<i64: 32, 1>}, {pipeline_mode = #tpu.pipeline_mode<synchronous>, transform_indices = @transform_4, window_bounds = array<i64: 5, 32, 32>}, {pipeline_mode = #tpu.pipeline_mode<synchronous>, transform_indices = @transform_5, window_bounds = array<i64: 32, 1>}, {pipeline_mode = #tpu.pipeline_mode<synchronous>, transform_indices = @transform_6, window_bounds = array<i64: 5, 32, 5>}, {pipeline_mode = #tpu.pipeline_mode<synchronous>, transform_indices = @transform_7, window_bounds = array<i64: 32, 1>}, {pipeline_mode = #tpu.pipeline_mode<synchronous>, transform_indices = @transform_8, window_bounds = array<i64: 5, 32, 32>}, {pipeline_mode = #tpu.pipeline_mode<synchronous>, transform_indices = @transform_9, window_bounds = array<i64: 32, 1>}, {pipeline_mode = #tpu.pipeline_mode<synchronous>, transform_indices = @transform_10, window_bounds = array<i64: 1280, 512>}, {pipeline_mode = #tpu.pipeline_mode<synchronous>, transform_indices = @transform_11, window_bounds = array<i64: 1, 512>}, {pipeline_mode = #tpu.pipeline_mode<synchronous>, transform_indices = @transform_12, window_bounds = array<i64: 512, 256>}, {pipeline_mode = #tpu.pipeline_mode<synchronous>, transform_indices = @transform_13, window_bounds = array<i64: 1, 256>}, {pipeline_mode = #tpu.pipeline_mode<synchronous>, transform_indices = @transform_14, window_bounds = array<i64: 256, 128>}, {pipeline_mode = #tpu.pipeline_mode<synchronous>, transform_indices = @transform_15, window_bounds = array<i64: 1, 128>}, {pipeline_mode = #tpu.pipeline_mode<synchronous>, transform_indices = @transform_16, window_bounds = array<i64: 2, 128>}]} {
    %c0 = arith.constant 0 : index
    %c0_0 = arith.constant 0 : index
    %c0_1 = arith.constant 0 : index
    %0 = vector.load %arg1[%c0, %c0_0, %c0_1] : memref<2x5x100xf32, #tpu.memory_space<vmem>>, vector<1x5x100xf32>
    %1 = vector.shape_cast %0 : vector<1x5x100xf32> to vector<5x100xf32>
    %cst = arith.constant 0.000000e+00 : f32
    %2 = vector.broadcast %cst : f32 to vector<32x60xf32>
    %c0_2 = arith.constant 0 : index
    %c0_3 = arith.constant 0 : index
    %c0_4 = arith.constant 0 : index
    %3 = vector.load %arg3[%c0_2, %c0_3, %c0_4] : memref<5x32x5xf32, #tpu.memory_space<vmem>>, vector<1x32x5xf32>
    %4 = vector.shape_cast %3 : vector<1x32x5xf32> to vector<32x5xf32>
    %5 = vector.extract_strided_slice %1 {offsets = [0, 0], sizes = [5, 60], strides = [1, 1]} : vector<5x100xf32> to vector<5x60xf32>
    %cst_5 = arith.constant dense<0.000000e+00> : vector<32x60xf32>
    %6 = tpu.matmul %4, %5, %cst_5 {dimension_numbers = #tpu.dot_dimension_numbers<[1], [0], [0], [1], [0, 0, 1, 1], [], []>} : vector<32x5xf32>, vector<5x60xf32>, vector<32x60xf32> -> vector<32x60xf32>
    %7 = arith.addf %2, %6 : vector<32x60xf32>
    %c1 = arith.constant 1 : index
    %c0_6 = arith.constant 0 : index
    %c0_7 = arith.constant 0 : index
    %8 = vector.load %arg3[%c1, %c0_6, %c0_7] : memref<5x32x5xf32, #tpu.memory_space<vmem>>, vector<1x32x5xf32>
    %9 = vector.shape_cast %8 : vector<1x32x5xf32> to vector<32x5xf32>
    %10 = vector.extract_strided_slice %1 {offsets = [0, 10], sizes = [5, 60], strides = [1, 1]} : vector<5x100xf32> to vector<5x60xf32>
    %cst_8 = arith.constant dense<0.000000e+00> : vector<32x60xf32>
    %11 = tpu.matmul %9, %10, %cst_8 {dimension_numbers = #tpu.dot_dimension_numbers<[1], [0], [0], [1], [0, 0, 1, 1], [], []>} : vector<32x5xf32>, vector<5x60xf32>, vector<32x60xf32> -> vector<32x60xf32>
    %12 = arith.addf %7, %11 : vector<32x60xf32>
    %c2 = arith.constant 2 : index
    %c0_9 = arith.constant 0 : index
    %c0_10 = arith.constant 0 : index
    %13 = vector.load %arg3[%c2, %c0_9, %c0_10] : memref<5x32x5xf32, #tpu.memory_space<vmem>>, vector<1x32x5xf32>
    %14 = vector.shape_cast %13 : vector<1x32x5xf32> to vector<32x5xf32>
    %15 = vector.extract_strided_slice %1 {offsets = [0, 20], sizes = [5, 60], strides = [1, 1]} : vector<5x100xf32> to vector<5x60xf32>
    %cst_11 = arith.constant dense<0.000000e+00> : vector<32x60xf32>
    %16 = tpu.matmul %14, %15, %cst_11 {dimension_numbers = #tpu.dot_dimension_numbers<[1], [0], [0], [1], [0, 0, 1, 1], [], []>} : vector<32x5xf32>, vector<5x60xf32>, vector<32x60xf32> -> vector<32x60xf32>
    %17 = arith.addf %12, %16 : vector<32x60xf32>
    %c3 = arith.constant 3 : index
    %c0_12 = arith.constant 0 : index
    %c0_13 = arith.constant 0 : index
    %18 = vector.load %arg3[%c3, %c0_12, %c0_13] : memref<5x32x5xf32, #tpu.memory_space<vmem>>, vector<1x32x5xf32>
    %19 = vector.shape_cast %18 : vector<1x32x5xf32> to vector<32x5xf32>
    %20 = vector.extract_strided_slice %1 {offsets = [0, 30], sizes = [5, 60], strides = [1, 1]} : vector<5x100xf32> to vector<5x60xf32>
    %cst_14 = arith.constant dense<0.000000e+00> : vector<32x60xf32>
    %21 = tpu.matmul %19, %20, %cst_14 {dimension_numbers = #tpu.dot_dimension_numbers<[1], [0], [0], [1], [0, 0, 1, 1], [], []>} : vector<32x5xf32>, vector<5x60xf32>, vector<32x60xf32> -> vector<32x60xf32>
    %22 = arith.addf %17, %21 : vector<32x60xf32>
    %c4 = arith.constant 4 : index
    %c0_15 = arith.constant 0 : index
    %c0_16 = arith.constant 0 : index
    %23 = vector.load %arg3[%c4, %c0_15, %c0_16] : memref<5x32x5xf32, #tpu.memory_space<vmem>>, vector<1x32x5xf32>
    %24 = vector.shape_cast %23 : vector<1x32x5xf32> to vector<32x5xf32>
    %25 = vector.extract_strided_slice %1 {offsets = [0, 40], sizes = [5, 60], strides = [1, 1]} : vector<5x100xf32> to vector<5x60xf32>
    %cst_17 = arith.constant dense<0.000000e+00> : vector<32x60xf32>
    %26 = tpu.matmul %24, %25, %cst_17 {dimension_numbers = #tpu.dot_dimension_numbers<[1], [0], [0], [1], [0, 0, 1, 1], [], []>} : vector<32x5xf32>, vector<5x60xf32>, vector<32x60xf32> -> vector<32x60xf32>
    %27 = arith.addf %22, %26 : vector<32x60xf32>
    %c0_18 = arith.constant 0 : index
    %c0_19 = arith.constant 0 : index
    %28 = vector.load %arg4[%c0_18, %c0_19] : memref<32x1xf32, #tpu.memory_space<vmem>>, vector<32x1xf32>
    %29 = vector.broadcast %28 : vector<32x1xf32> to vector<32x60xf32>
    %30 = arith.addf %27, %29 : vector<32x60xf32>
    %cst_20 = arith.constant 0.00999999977 : f32
    %31 = vector.broadcast %cst_20 : f32 to vector<32x60xf32>
    %32 = arith.mulf %31, %30 : vector<32x60xf32>
    %33 = arith.maximumf %30, %32 : vector<32x60xf32>
    %cst_21 = arith.constant 0.000000e+00 : f32
    %34 = vector.broadcast %cst_21 : f32 to vector<32x20xf32>
    %c0_22 = arith.constant 0 : index
    %c0_23 = arith.constant 0 : index
    %c0_24 = arith.constant 0 : index
    %35 = vector.load %arg5[%c0_22, %c0_23, %c0_24] : memref<5x32x32xf32, #tpu.memory_space<vmem>>, vector<1x32x32xf32>
    %36 = vector.shape_cast %35 : vector<1x32x32xf32> to vector<32x32xf32>
    %37 = vector.extract_strided_slice %33 {offsets = [0, 0], sizes = [32, 20], strides = [1, 1]} : vector<32x60xf32> to vector<32x20xf32>
    %cst_25 = arith.constant dense<0.000000e+00> : vector<32x20xf32>
    %38 = tpu.matmul %36, %37, %cst_25 {dimension_numbers = #tpu.dot_dimension_numbers<[1], [0], [0], [1], [0, 0, 1, 1], [], []>} : vector<32x32xf32>, vector<32x20xf32>, vector<32x20xf32> -> vector<32x20xf32>
    %39 = arith.addf %34, %38 : vector<32x20xf32>
    %c1_26 = arith.constant 1 : index
    %c0_27 = arith.constant 0 : index
    %c0_28 = arith.constant 0 : index
    %40 = vector.load %arg5[%c1_26, %c0_27, %c0_28] : memref<5x32x32xf32, #tpu.memory_space<vmem>>, vector<1x32x32xf32>
    %41 = vector.shape_cast %40 : vector<1x32x32xf32> to vector<32x32xf32>
    %42 = vector.extract_strided_slice %33 {offsets = [0, 10], sizes = [32, 20], strides = [1, 1]} : vector<32x60xf32> to vector<32x20xf32>
    %cst_29 = arith.constant dense<0.000000e+00> : vector<32x20xf32>
    %43 = tpu.matmul %41, %42, %cst_29 {dimension_numbers = #tpu.dot_dimension_numbers<[1], [0], [0], [1], [0, 0, 1, 1], [], []>} : vector<32x32xf32>, vector<32x20xf32>, vector<32x20xf32> -> vector<32x20xf32>
    %44 = arith.addf %39, %43 : vector<32x20xf32>
    %c2_30 = arith.constant 2 : index
    %c0_31 = arith.constant 0 : index
    %c0_32 = arith.constant 0 : index
    %45 = vector.load %arg5[%c2_30, %c0_31, %c0_32] : memref<5x32x32xf32, #tpu.memory_space<vmem>>, vector<1x32x32xf32>
    %46 = vector.shape_cast %45 : vector<1x32x32xf32> to vector<32x32xf32>
    %47 = vector.extract_strided_slice %33 {offsets = [0, 20], sizes = [32, 20], strides = [1, 1]} : vector<32x60xf32> to vector<32x20xf32>
    %cst_33 = arith.constant dense<0.000000e+00> : vector<32x20xf32>
    %48 = tpu.matmul %46, %47, %cst_33 {dimension_numbers = #tpu.dot_dimension_numbers<[1], [0], [0], [1], [0, 0, 1, 1], [], []>} : vector<32x32xf32>, vector<32x20xf32>, vector<32x20xf32> -> vector<32x20xf32>
    %49 = arith.addf %44, %48 : vector<32x20xf32>
    %c3_34 = arith.constant 3 : index
    %c0_35 = arith.constant 0 : index
    %c0_36 = arith.constant 0 : index
    %50 = vector.load %arg5[%c3_34, %c0_35, %c0_36] : memref<5x32x32xf32, #tpu.memory_space<vmem>>, vector<1x32x32xf32>
    %51 = vector.shape_cast %50 : vector<1x32x32xf32> to vector<32x32xf32>
    %52 = vector.extract_strided_slice %33 {offsets = [0, 30], sizes = [32, 20], strides = [1, 1]} : vector<32x60xf32> to vector<32x20xf32>
    %cst_37 = arith.constant dense<0.000000e+00> : vector<32x20xf32>
    %53 = tpu.matmul %51, %52, %cst_37 {dimension_numbers = #tpu.dot_dimension_numbers<[1], [0], [0], [1], [0, 0, 1, 1], [], []>} : vector<32x32xf32>, vector<32x20xf32>, vector<32x20xf32> -> vector<32x20xf32>
    %54 = arith.addf %49, %53 : vector<32x20xf32>
    %c4_38 = arith.constant 4 : index
    %c0_39 = arith.constant 0 : index
    %c0_40 = arith.constant 0 : index
    %55 = vector.load %arg5[%c4_38, %c0_39, %c0_40] : memref<5x32x32xf32, #tpu.memory_space<vmem>>, vector<1x32x32xf32>
    %56 = vector.shape_cast %55 : vector<1x32x32xf32> to vector<32x32xf32>
    %57 = vector.extract_strided_slice %33 {offsets = [0, 40], sizes = [32, 20], strides = [1, 1]} : vector<32x60xf32> to vector<32x20xf32>
    %cst_41 = arith.constant dense<0.000000e+00> : vector<32x20xf32>
    %58 = tpu.matmul %56, %57, %cst_41 {dimension_numbers = #tpu.dot_dimension_numbers<[1], [0], [0], [1], [0, 0, 1, 1], [], []>} : vector<32x32xf32>, vector<32x20xf32>, vector<32x20xf32> -> vector<32x20xf32>
    %59 = arith.addf %54, %58 : vector<32x20xf32>
    %c0_42 = arith.constant 0 : index
    %c0_43 = arith.constant 0 : index
    %60 = vector.load %arg6[%c0_42, %c0_43] : memref<32x1xf32, #tpu.memory_space<vmem>>, vector<32x1xf32>
    %61 = vector.broadcast %60 : vector<32x1xf32> to vector<32x20xf32>
    %62 = arith.addf %59, %61 : vector<32x20xf32>
    %cst_44 = arith.constant 0.00999999977 : f32
    %63 = vector.broadcast %cst_44 : f32 to vector<32x20xf32>
    %64 = arith.mulf %63, %62 : vector<32x20xf32>
    %65 = arith.maximumf %62, %64 : vector<32x20xf32>
    %c0_45 = arith.constant 0 : index
    %c0_46 = arith.constant 0 : index
    %c0_47 = arith.constant 0 : index
    %66 = vector.load %arg2[%c0_45, %c0_46, %c0_47] : memref<2x5x100xf32, #tpu.memory_space<vmem>>, vector<1x5x100xf32>
    %67 = vector.shape_cast %66 : vector<1x5x100xf32> to vector<5x100xf32>
    %cst_48 = arith.constant 0.000000e+00 : f32
    %68 = vector.broadcast %cst_48 : f32 to vector<32x60xf32>
    %c0_49 = arith.constant 0 : index
    %c0_50 = arith.constant 0 : index
    %c0_51 = arith.constant 0 : index
    %69 = vector.load %arg7[%c0_49, %c0_50, %c0_51] : memref<5x32x5xf32, #tpu.memory_space<vmem>>, vector<1x32x5xf32>
    %70 = vector.shape_cast %69 : vector<1x32x5xf32> to vector<32x5xf32>
    %71 = vector.extract_strided_slice %67 {offsets = [0, 0], sizes = [5, 60], strides = [1, 1]} : vector<5x100xf32> to vector<5x60xf32>
    %cst_52 = arith.constant dense<0.000000e+00> : vector<32x60xf32>
    %72 = tpu.matmul %70, %71, %cst_52 {dimension_numbers = #tpu.dot_dimension_numbers<[1], [0], [0], [1], [0, 0, 1, 1], [], []>} : vector<32x5xf32>, vector<5x60xf32>, vector<32x60xf32> -> vector<32x60xf32>
    %73 = arith.addf %68, %72 : vector<32x60xf32>
    %c1_53 = arith.constant 1 : index
    %c0_54 = arith.constant 0 : index
    %c0_55 = arith.constant 0 : index
    %74 = vector.load %arg7[%c1_53, %c0_54, %c0_55] : memref<5x32x5xf32, #tpu.memory_space<vmem>>, vector<1x32x5xf32>
    %75 = vector.shape_cast %74 : vector<1x32x5xf32> to vector<32x5xf32>
    %76 = vector.extract_strided_slice %67 {offsets = [0, 10], sizes = [5, 60], strides = [1, 1]} : vector<5x100xf32> to vector<5x60xf32>
    %cst_56 = arith.constant dense<0.000000e+00> : vector<32x60xf32>
    %77 = tpu.matmul %75, %76, %cst_56 {dimension_numbers = #tpu.dot_dimension_numbers<[1], [0], [0], [1], [0, 0, 1, 1], [], []>} : vector<32x5xf32>, vector<5x60xf32>, vector<32x60xf32> -> vector<32x60xf32>
    %78 = arith.addf %73, %77 : vector<32x60xf32>
    %c2_57 = arith.constant 2 : index
    %c0_58 = arith.constant 0 : index
    %c0_59 = arith.constant 0 : index
    %79 = vector.load %arg7[%c2_57, %c0_58, %c0_59] : memref<5x32x5xf32, #tpu.memory_space<vmem>>, vector<1x32x5xf32>
    %80 = vector.shape_cast %79 : vector<1x32x5xf32> to vector<32x5xf32>
    %81 = vector.extract_strided_slice %67 {offsets = [0, 20], sizes = [5, 60], strides = [1, 1]} : vector<5x100xf32> to vector<5x60xf32>
    %cst_60 = arith.constant dense<0.000000e+00> : vector<32x60xf32>
    %82 = tpu.matmul %80, %81, %cst_60 {dimension_numbers = #tpu.dot_dimension_numbers<[1], [0], [0], [1], [0, 0, 1, 1], [], []>} : vector<32x5xf32>, vector<5x60xf32>, vector<32x60xf32> -> vector<32x60xf32>
    %83 = arith.addf %78, %82 : vector<32x60xf32>
    %c3_61 = arith.constant 3 : index
    %c0_62 = arith.constant 0 : index
    %c0_63 = arith.constant 0 : index
    %84 = vector.load %arg7[%c3_61, %c0_62, %c0_63] : memref<5x32x5xf32, #tpu.memory_space<vmem>>, vector<1x32x5xf32>
    %85 = vector.shape_cast %84 : vector<1x32x5xf32> to vector<32x5xf32>
    %86 = vector.extract_strided_slice %67 {offsets = [0, 30], sizes = [5, 60], strides = [1, 1]} : vector<5x100xf32> to vector<5x60xf32>
    %cst_64 = arith.constant dense<0.000000e+00> : vector<32x60xf32>
    %87 = tpu.matmul %85, %86, %cst_64 {dimension_numbers = #tpu.dot_dimension_numbers<[1], [0], [0], [1], [0, 0, 1, 1], [], []>} : vector<32x5xf32>, vector<5x60xf32>, vector<32x60xf32> -> vector<32x60xf32>
    %88 = arith.addf %83, %87 : vector<32x60xf32>
    %c4_65 = arith.constant 4 : index
    %c0_66 = arith.constant 0 : index
    %c0_67 = arith.constant 0 : index
    %89 = vector.load %arg7[%c4_65, %c0_66, %c0_67] : memref<5x32x5xf32, #tpu.memory_space<vmem>>, vector<1x32x5xf32>
    %90 = vector.shape_cast %89 : vector<1x32x5xf32> to vector<32x5xf32>
    %91 = vector.extract_strided_slice %67 {offsets = [0, 40], sizes = [5, 60], strides = [1, 1]} : vector<5x100xf32> to vector<5x60xf32>
    %cst_68 = arith.constant dense<0.000000e+00> : vector<32x60xf32>
    %92 = tpu.matmul %90, %91, %cst_68 {dimension_numbers = #tpu.dot_dimension_numbers<[1], [0], [0], [1], [0, 0, 1, 1], [], []>} : vector<32x5xf32>, vector<5x60xf32>, vector<32x60xf32> -> vector<32x60xf32>
    %93 = arith.addf %88, %92 : vector<32x60xf32>
    %c0_69 = arith.constant 0 : index
    %c0_70 = arith.constant 0 : index
    %94 = vector.load %arg8[%c0_69, %c0_70] : memref<32x1xf32, #tpu.memory_space<vmem>>, vector<32x1xf32>
    %95 = vector.broadcast %94 : vector<32x1xf32> to vector<32x60xf32>
    %96 = arith.addf %93, %95 : vector<32x60xf32>
    %cst_71 = arith.constant 0.00999999977 : f32
    %97 = vector.broadcast %cst_71 : f32 to vector<32x60xf32>
    %98 = arith.mulf %97, %96 : vector<32x60xf32>
    %99 = arith.maximumf %96, %98 : vector<32x60xf32>
    %cst_72 = arith.constant 0.000000e+00 : f32
    %100 = vector.broadcast %cst_72 : f32 to vector<32x20xf32>
    %c0_73 = arith.constant 0 : index
    %c0_74 = arith.constant 0 : index
    %c0_75 = arith.constant 0 : index
    %101 = vector.load %arg9[%c0_73, %c0_74, %c0_75] : memref<5x32x32xf32, #tpu.memory_space<vmem>>, vector<1x32x32xf32>
    %102 = vector.shape_cast %101 : vector<1x32x32xf32> to vector<32x32xf32>
    %103 = vector.extract_strided_slice %99 {offsets = [0, 0], sizes = [32, 20], strides = [1, 1]} : vector<32x60xf32> to vector<32x20xf32>
    %cst_76 = arith.constant dense<0.000000e+00> : vector<32x20xf32>
    %104 = tpu.matmul %102, %103, %cst_76 {dimension_numbers = #tpu.dot_dimension_numbers<[1], [0], [0], [1], [0, 0, 1, 1], [], []>} : vector<32x32xf32>, vector<32x20xf32>, vector<32x20xf32> -> vector<32x20xf32>
    %105 = arith.addf %100, %104 : vector<32x20xf32>
    %c1_77 = arith.constant 1 : index
    %c0_78 = arith.constant 0 : index
    %c0_79 = arith.constant 0 : index
    %106 = vector.load %arg9[%c1_77, %c0_78, %c0_79] : memref<5x32x32xf32, #tpu.memory_space<vmem>>, vector<1x32x32xf32>
    %107 = vector.shape_cast %106 : vector<1x32x32xf32> to vector<32x32xf32>
    %108 = vector.extract_strided_slice %99 {offsets = [0, 10], sizes = [32, 20], strides = [1, 1]} : vector<32x60xf32> to vector<32x20xf32>
    %cst_80 = arith.constant dense<0.000000e+00> : vector<32x20xf32>
    %109 = tpu.matmul %107, %108, %cst_80 {dimension_numbers = #tpu.dot_dimension_numbers<[1], [0], [0], [1], [0, 0, 1, 1], [], []>} : vector<32x32xf32>, vector<32x20xf32>, vector<32x20xf32> -> vector<32x20xf32>
    %110 = arith.addf %105, %109 : vector<32x20xf32>
    %c2_81 = arith.constant 2 : index
    %c0_82 = arith.constant 0 : index
    %c0_83 = arith.constant 0 : index
    %111 = vector.load %arg9[%c2_81, %c0_82, %c0_83] : memref<5x32x32xf32, #tpu.memory_space<vmem>>, vector<1x32x32xf32>
    %112 = vector.shape_cast %111 : vector<1x32x32xf32> to vector<32x32xf32>
    %113 = vector.extract_strided_slice %99 {offsets = [0, 20], sizes = [32, 20], strides = [1, 1]} : vector<32x60xf32> to vector<32x20xf32>
    %cst_84 = arith.constant dense<0.000000e+00> : vector<32x20xf32>
    %114 = tpu.matmul %112, %113, %cst_84 {dimension_numbers = #tpu.dot_dimension_numbers<[1], [0], [0], [1], [0, 0, 1, 1], [], []>} : vector<32x32xf32>, vector<32x20xf32>, vector<32x20xf32> -> vector<32x20xf32>
    %115 = arith.addf %110, %114 : vector<32x20xf32>
    %c3_85 = arith.constant 3 : index
    %c0_86 = arith.constant 0 : index
    %c0_87 = arith.constant 0 : index
    %116 = vector.load %arg9[%c3_85, %c0_86, %c0_87] : memref<5x32x32xf32, #tpu.memory_space<vmem>>, vector<1x32x32xf32>
    %117 = vector.shape_cast %116 : vector<1x32x32xf32> to vector<32x32xf32>
    %118 = vector.extract_strided_slice %99 {offsets = [0, 30], sizes = [32, 20], strides = [1, 1]} : vector<32x60xf32> to vector<32x20xf32>
    %cst_88 = arith.constant dense<0.000000e+00> : vector<32x20xf32>
    %119 = tpu.matmul %117, %118, %cst_88 {dimension_numbers = #tpu.dot_dimension_numbers<[1], [0], [0], [1], [0, 0, 1, 1], [], []>} : vector<32x32xf32>, vector<32x20xf32>, vector<32x20xf32> -> vector<32x20xf32>
    %120 = arith.addf %115, %119 : vector<32x20xf32>
    %c4_89 = arith.constant 4 : index
    %c0_90 = arith.constant 0 : index
    %c0_91 = arith.constant 0 : index
    %121 = vector.load %arg9[%c4_89, %c0_90, %c0_91] : memref<5x32x32xf32, #tpu.memory_space<vmem>>, vector<1x32x32xf32>
    %122 = vector.shape_cast %121 : vector<1x32x32xf32> to vector<32x32xf32>
    %123 = vector.extract_strided_slice %99 {offsets = [0, 40], sizes = [32, 20], strides = [1, 1]} : vector<32x60xf32> to vector<32x20xf32>
    %cst_92 = arith.constant dense<0.000000e+00> : vector<32x20xf32>
    %124 = tpu.matmul %122, %123, %cst_92 {dimension_numbers = #tpu.dot_dimension_numbers<[1], [0], [0], [1], [0, 0, 1, 1], [], []>} : vector<32x32xf32>, vector<32x20xf32>, vector<32x20xf32> -> vector<32x20xf32>
    %125 = arith.addf %120, %124 : vector<32x20xf32>
    %c0_93 = arith.constant 0 : index
    %c0_94 = arith.constant 0 : index
    %126 = vector.load %arg10[%c0_93, %c0_94] : memref<32x1xf32, #tpu.memory_space<vmem>>, vector<32x1xf32>
    %127 = vector.broadcast %126 : vector<32x1xf32> to vector<32x20xf32>
    %128 = arith.addf %125, %127 : vector<32x20xf32>
    %cst_95 = arith.constant 0.00999999977 : f32
    %129 = vector.broadcast %cst_95 : f32 to vector<32x20xf32>
    %130 = arith.mulf %129, %128 : vector<32x20xf32>
    %131 = arith.maximumf %128, %130 : vector<32x20xf32>
    %132 = tpu.concatenate %65, %131 in 1 : vector<32x20xf32>, vector<32x20xf32> -> vector<32x40xf32>
    %133 = vector.extract_strided_slice %132 {offsets = [0, 0], sizes = [1, 40], strides = [1, 1]} : vector<32x40xf32> to vector<1x40xf32>
    %134 = vector.extract_strided_slice %132 {offsets = [1, 0], sizes = [1, 40], strides = [1, 1]} : vector<32x40xf32> to vector<1x40xf32>
    %135 = vector.extract_strided_slice %132 {offsets = [2, 0], sizes = [1, 40], strides = [1, 1]} : vector<32x40xf32> to vector<1x40xf32>
    %136 = vector.extract_strided_slice %132 {offsets = [3, 0], sizes = [1, 40], strides = [1, 1]} : vector<32x40xf32> to vector<1x40xf32>
    %137 = vector.extract_strided_slice %132 {offsets = [4, 0], sizes = [1, 40], strides = [1, 1]} : vector<32x40xf32> to vector<1x40xf32>
    %138 = vector.extract_strided_slice %132 {offsets = [5, 0], sizes = [1, 40], strides = [1, 1]} : vector<32x40xf32> to vector<1x40xf32>
    %139 = vector.extract_strided_slice %132 {offsets = [6, 0], sizes = [1, 40], strides = [1, 1]} : vector<32x40xf32> to vector<1x40xf32>
    %140 = vector.extract_strided_slice %132 {offsets = [7, 0], sizes = [1, 40], strides = [1, 1]} : vector<32x40xf32> to vector<1x40xf32>
    %141 = vector.extract_strided_slice %132 {offsets = [8, 0], sizes = [1, 40], strides = [1, 1]} : vector<32x40xf32> to vector<1x40xf32>
    %142 = vector.extract_strided_slice %132 {offsets = [9, 0], sizes = [1, 40], strides = [1, 1]} : vector<32x40xf32> to vector<1x40xf32>
    %143 = vector.extract_strided_slice %132 {offsets = [10, 0], sizes = [1, 40], strides = [1, 1]} : vector<32x40xf32> to vector<1x40xf32>
    %144 = vector.extract_strided_slice %132 {offsets = [11, 0], sizes = [1, 40], strides = [1, 1]} : vector<32x40xf32> to vector<1x40xf32>
    %145 = vector.extract_strided_slice %132 {offsets = [12, 0], sizes = [1, 40], strides = [1, 1]} : vector<32x40xf32> to vector<1x40xf32>
    %146 = vector.extract_strided_slice %132 {offsets = [13, 0], sizes = [1, 40], strides = [1, 1]} : vector<32x40xf32> to vector<1x40xf32>
    %147 = vector.extract_strided_slice %132 {offsets = [14, 0], sizes = [1, 40], strides = [1, 1]} : vector<32x40xf32> to vector<1x40xf32>
    %148 = vector.extract_strided_slice %132 {offsets = [15, 0], sizes = [1, 40], strides = [1, 1]} : vector<32x40xf32> to vector<1x40xf32>
    %149 = vector.extract_strided_slice %132 {offsets = [16, 0], sizes = [1, 40], strides = [1, 1]} : vector<32x40xf32> to vector<1x40xf32>
    %150 = vector.extract_strided_slice %132 {offsets = [17, 0], sizes = [1, 40], strides = [1, 1]} : vector<32x40xf32> to vector<1x40xf32>
    %151 = vector.extract_strided_slice %132 {offsets = [18, 0], sizes = [1, 40], strides = [1, 1]} : vector<32x40xf32> to vector<1x40xf32>
    %152 = vector.extract_strided_slice %132 {offsets = [19, 0], sizes = [1, 40], strides = [1, 1]} : vector<32x40xf32> to vector<1x40xf32>
    %153 = vector.extract_strided_slice %132 {offsets = [20, 0], sizes = [1, 40], strides = [1, 1]} : vector<32x40xf32> to vector<1x40xf32>
    %154 = vector.extract_strided_slice %132 {offsets = [21, 0], sizes = [1, 40], strides = [1, 1]} : vector<32x40xf32> to vector<1x40xf32>
    %155 = vector.extract_strided_slice %132 {offsets = [22, 0], sizes = [1, 40], strides = [1, 1]} : vector<32x40xf32> to vector<1x40xf32>
    %156 = vector.extract_strided_slice %132 {offsets = [23, 0], sizes = [1, 40], strides = [1, 1]} : vector<32x40xf32> to vector<1x40xf32>
    %157 = vector.extract_strided_slice %132 {offsets = [24, 0], sizes = [1, 40], strides = [1, 1]} : vector<32x40xf32> to vector<1x40xf32>
    %158 = vector.extract_strided_slice %132 {offsets = [25, 0], sizes = [1, 40], strides = [1, 1]} : vector<32x40xf32> to vector<1x40xf32>
    %159 = vector.extract_strided_slice %132 {offsets = [26, 0], sizes = [1, 40], strides = [1, 1]} : vector<32x40xf32> to vector<1x40xf32>
    %160 = vector.extract_strided_slice %132 {offsets = [27, 0], sizes = [1, 40], strides = [1, 1]} : vector<32x40xf32> to vector<1x40xf32>
    %161 = vector.extract_strided_slice %132 {offsets = [28, 0], sizes = [1, 40], strides = [1, 1]} : vector<32x40xf32> to vector<1x40xf32>
    %162 = vector.extract_strided_slice %132 {offsets = [29, 0], sizes = [1, 40], strides = [1, 1]} : vector<32x40xf32> to vector<1x40xf32>
    %163 = vector.extract_strided_slice %132 {offsets = [30, 0], sizes = [1, 40], strides = [1, 1]} : vector<32x40xf32> to vector<1x40xf32>
    %164 = vector.extract_strided_slice %132 {offsets = [31, 0], sizes = [1, 40], strides = [1, 1]} : vector<32x40xf32> to vector<1x40xf32>
    %165 = tpu.concatenate %133, %134, %135, %136, %137, %138, %139, %140, %141, %142, %143, %144, %145, %146, %147, %148 in 1 : vector<1x40xf32>, vector<1x40xf32>, vector<1x40xf32>, vector<1x40xf32>, vector<1x40xf32>, vector<1x40xf32>, vector<1x40xf32>, vector<1x40xf32>, vector<1x40xf32>, vector<1x40xf32>, vector<1x40xf32>, vector<1x40xf32>, vector<1x40xf32>, vector<1x40xf32>, vector<1x40xf32>, vector<1x40xf32> -> vector<1x640xf32>
    %166 = tpu.concatenate %149, %150, %151, %152, %153, %154, %155, %156, %157, %158, %159, %160, %161, %162, %163, %164 in 1 : vector<1x40xf32>, vector<1x40xf32>, vector<1x40xf32>, vector<1x40xf32>, vector<1x40xf32>, vector<1x40xf32>, vector<1x40xf32>, vector<1x40xf32>, vector<1x40xf32>, vector<1x40xf32>, vector<1x40xf32>, vector<1x40xf32>, vector<1x40xf32>, vector<1x40xf32>, vector<1x40xf32>, vector<1x40xf32> -> vector<1x640xf32>
    %167 = tpu.concatenate %165, %166 in 1 : vector<1x640xf32>, vector<1x640xf32> -> vector<1x1280xf32>
    %c1_96 = arith.constant 1 : index
    %c0_97 = arith.constant 0 : index
    %c0_98 = arith.constant 0 : index
    %168 = vector.load %arg1[%c1_96, %c0_97, %c0_98] : memref<2x5x100xf32, #tpu.memory_space<vmem>>, vector<1x5x100xf32>
    %169 = vector.shape_cast %168 : vector<1x5x100xf32> to vector<5x100xf32>
    %cst_99 = arith.constant 0.000000e+00 : f32
    %170 = vector.broadcast %cst_99 : f32 to vector<32x60xf32>
    %c0_100 = arith.constant 0 : index
    %c0_101 = arith.constant 0 : index
    %c0_102 = arith.constant 0 : index
    %171 = vector.load %arg3[%c0_100, %c0_101, %c0_102] : memref<5x32x5xf32, #tpu.memory_space<vmem>>, vector<1x32x5xf32>
    %172 = vector.shape_cast %171 : vector<1x32x5xf32> to vector<32x5xf32>
    %173 = vector.extract_strided_slice %169 {offsets = [0, 0], sizes = [5, 60], strides = [1, 1]} : vector<5x100xf32> to vector<5x60xf32>
    %cst_103 = arith.constant dense<0.000000e+00> : vector<32x60xf32>
    %174 = tpu.matmul %172, %173, %cst_103 {dimension_numbers = #tpu.dot_dimension_numbers<[1], [0], [0], [1], [0, 0, 1, 1], [], []>} : vector<32x5xf32>, vector<5x60xf32>, vector<32x60xf32> -> vector<32x60xf32>
    %175 = arith.addf %170, %174 : vector<32x60xf32>
    %c1_104 = arith.constant 1 : index
    %c0_105 = arith.constant 0 : index
    %c0_106 = arith.constant 0 : index
    %176 = vector.load %arg3[%c1_104, %c0_105, %c0_106] : memref<5x32x5xf32, #tpu.memory_space<vmem>>, vector<1x32x5xf32>
    %177 = vector.shape_cast %176 : vector<1x32x5xf32> to vector<32x5xf32>
    %178 = vector.extract_strided_slice %169 {offsets = [0, 10], sizes = [5, 60], strides = [1, 1]} : vector<5x100xf32> to vector<5x60xf32>
    %cst_107 = arith.constant dense<0.000000e+00> : vector<32x60xf32>
    %179 = tpu.matmul %177, %178, %cst_107 {dimension_numbers = #tpu.dot_dimension_numbers<[1], [0], [0], [1], [0, 0, 1, 1], [], []>} : vector<32x5xf32>, vector<5x60xf32>, vector<32x60xf32> -> vector<32x60xf32>
    %180 = arith.addf %175, %179 : vector<32x60xf32>
    %c2_108 = arith.constant 2 : index
    %c0_109 = arith.constant 0 : index
    %c0_110 = arith.constant 0 : index
    %181 = vector.load %arg3[%c2_108, %c0_109, %c0_110] : memref<5x32x5xf32, #tpu.memory_space<vmem>>, vector<1x32x5xf32>
    %182 = vector.shape_cast %181 : vector<1x32x5xf32> to vector<32x5xf32>
    %183 = vector.extract_strided_slice %169 {offsets = [0, 20], sizes = [5, 60], strides = [1, 1]} : vector<5x100xf32> to vector<5x60xf32>
    %cst_111 = arith.constant dense<0.000000e+00> : vector<32x60xf32>
    %184 = tpu.matmul %182, %183, %cst_111 {dimension_numbers = #tpu.dot_dimension_numbers<[1], [0], [0], [1], [0, 0, 1, 1], [], []>} : vector<32x5xf32>, vector<5x60xf32>, vector<32x60xf32> -> vector<32x60xf32>
    %185 = arith.addf %180, %184 : vector<32x60xf32>
    %c3_112 = arith.constant 3 : index
    %c0_113 = arith.constant 0 : index
    %c0_114 = arith.constant 0 : index
    %186 = vector.load %arg3[%c3_112, %c0_113, %c0_114] : memref<5x32x5xf32, #tpu.memory_space<vmem>>, vector<1x32x5xf32>
    %187 = vector.shape_cast %186 : vector<1x32x5xf32> to vector<32x5xf32>
    %188 = vector.extract_strided_slice %169 {offsets = [0, 30], sizes = [5, 60], strides = [1, 1]} : vector<5x100xf32> to vector<5x60xf32>
    %cst_115 = arith.constant dense<0.000000e+00> : vector<32x60xf32>
    %189 = tpu.matmul %187, %188, %cst_115 {dimension_numbers = #tpu.dot_dimension_numbers<[1], [0], [0], [1], [0, 0, 1, 1], [], []>} : vector<32x5xf32>, vector<5x60xf32>, vector<32x60xf32> -> vector<32x60xf32>
    %190 = arith.addf %185, %189 : vector<32x60xf32>
    %c4_116 = arith.constant 4 : index
    %c0_117 = arith.constant 0 : index
    %c0_118 = arith.constant 0 : index
    %191 = vector.load %arg3[%c4_116, %c0_117, %c0_118] : memref<5x32x5xf32, #tpu.memory_space<vmem>>, vector<1x32x5xf32>
    %192 = vector.shape_cast %191 : vector<1x32x5xf32> to vector<32x5xf32>
    %193 = vector.extract_strided_slice %169 {offsets = [0, 40], sizes = [5, 60], strides = [1, 1]} : vector<5x100xf32> to vector<5x60xf32>
    %cst_119 = arith.constant dense<0.000000e+00> : vector<32x60xf32>
    %194 = tpu.matmul %192, %193, %cst_119 {dimension_numbers = #tpu.dot_dimension_numbers<[1], [0], [0], [1], [0, 0, 1, 1], [], []>} : vector<32x5xf32>, vector<5x60xf32>, vector<32x60xf32> -> vector<32x60xf32>
    %195 = arith.addf %190, %194 : vector<32x60xf32>
    %c0_120 = arith.constant 0 : index
    %c0_121 = arith.constant 0 : index
    %196 = vector.load %arg4[%c0_120, %c0_121] : memref<32x1xf32, #tpu.memory_space<vmem>>, vector<32x1xf32>
    %197 = vector.broadcast %196 : vector<32x1xf32> to vector<32x60xf32>
    %198 = arith.addf %195, %197 : vector<32x60xf32>
    %cst_122 = arith.constant 0.00999999977 : f32
    %199 = vector.broadcast %cst_122 : f32 to vector<32x60xf32>
    %200 = arith.mulf %199, %198 : vector<32x60xf32>
    %201 = arith.maximumf %198, %200 : vector<32x60xf32>
    %cst_123 = arith.constant 0.000000e+00 : f32
    %202 = vector.broadcast %cst_123 : f32 to vector<32x20xf32>
    %c0_124 = arith.constant 0 : index
    %c0_125 = arith.constant 0 : index
    %c0_126 = arith.constant 0 : index
    %203 = vector.load %arg5[%c0_124, %c0_125, %c0_126] : memref<5x32x32xf32, #tpu.memory_space<vmem>>, vector<1x32x32xf32>
    %204 = vector.shape_cast %203 : vector<1x32x32xf32> to vector<32x32xf32>
    %205 = vector.extract_strided_slice %201 {offsets = [0, 0], sizes = [32, 20], strides = [1, 1]} : vector<32x60xf32> to vector<32x20xf32>
    %cst_127 = arith.constant dense<0.000000e+00> : vector<32x20xf32>
    %206 = tpu.matmul %204, %205, %cst_127 {dimension_numbers = #tpu.dot_dimension_numbers<[1], [0], [0], [1], [0, 0, 1, 1], [], []>} : vector<32x32xf32>, vector<32x20xf32>, vector<32x20xf32> -> vector<32x20xf32>
    %207 = arith.addf %202, %206 : vector<32x20xf32>
    %c1_128 = arith.constant 1 : index
    %c0_129 = arith.constant 0 : index
    %c0_130 = arith.constant 0 : index
    %208 = vector.load %arg5[%c1_128, %c0_129, %c0_130] : memref<5x32x32xf32, #tpu.memory_space<vmem>>, vector<1x32x32xf32>
    %209 = vector.shape_cast %208 : vector<1x32x32xf32> to vector<32x32xf32>
    %210 = vector.extract_strided_slice %201 {offsets = [0, 10], sizes = [32, 20], strides = [1, 1]} : vector<32x60xf32> to vector<32x20xf32>
    %cst_131 = arith.constant dense<0.000000e+00> : vector<32x20xf32>
    %211 = tpu.matmul %209, %210, %cst_131 {dimension_numbers = #tpu.dot_dimension_numbers<[1], [0], [0], [1], [0, 0, 1, 1], [], []>} : vector<32x32xf32>, vector<32x20xf32>, vector<32x20xf32> -> vector<32x20xf32>
    %212 = arith.addf %207, %211 : vector<32x20xf32>
    %c2_132 = arith.constant 2 : index
    %c0_133 = arith.constant 0 : index
    %c0_134 = arith.constant 0 : index
    %213 = vector.load %arg5[%c2_132, %c0_133, %c0_134] : memref<5x32x32xf32, #tpu.memory_space<vmem>>, vector<1x32x32xf32>
    %214 = vector.shape_cast %213 : vector<1x32x32xf32> to vector<32x32xf32>
    %215 = vector.extract_strided_slice %201 {offsets = [0, 20], sizes = [32, 20], strides = [1, 1]} : vector<32x60xf32> to vector<32x20xf32>
    %cst_135 = arith.constant dense<0.000000e+00> : vector<32x20xf32>
    %216 = tpu.matmul %214, %215, %cst_135 {dimension_numbers = #tpu.dot_dimension_numbers<[1], [0], [0], [1], [0, 0, 1, 1], [], []>} : vector<32x32xf32>, vector<32x20xf32>, vector<32x20xf32> -> vector<32x20xf32>
    %217 = arith.addf %212, %216 : vector<32x20xf32>
    %c3_136 = arith.constant 3 : index
    %c0_137 = arith.constant 0 : index
    %c0_138 = arith.constant 0 : index
    %218 = vector.load %arg5[%c3_136, %c0_137, %c0_138] : memref<5x32x32xf32, #tpu.memory_space<vmem>>, vector<1x32x32xf32>
    %219 = vector.shape_cast %218 : vector<1x32x32xf32> to vector<32x32xf32>
    %220 = vector.extract_strided_slice %201 {offsets = [0, 30], sizes = [32, 20], strides = [1, 1]} : vector<32x60xf32> to vector<32x20xf32>
    %cst_139 = arith.constant dense<0.000000e+00> : vector<32x20xf32>
    %221 = tpu.matmul %219, %220, %cst_139 {dimension_numbers = #tpu.dot_dimension_numbers<[1], [0], [0], [1], [0, 0, 1, 1], [], []>} : vector<32x32xf32>, vector<32x20xf32>, vector<32x20xf32> -> vector<32x20xf32>
    %222 = arith.addf %217, %221 : vector<32x20xf32>
    %c4_140 = arith.constant 4 : index
    %c0_141 = arith.constant 0 : index
    %c0_142 = arith.constant 0 : index
    %223 = vector.load %arg5[%c4_140, %c0_141, %c0_142] : memref<5x32x32xf32, #tpu.memory_space<vmem>>, vector<1x32x32xf32>
    %224 = vector.shape_cast %223 : vector<1x32x32xf32> to vector<32x32xf32>
    %225 = vector.extract_strided_slice %201 {offsets = [0, 40], sizes = [32, 20], strides = [1, 1]} : vector<32x60xf32> to vector<32x20xf32>
    %cst_143 = arith.constant dense<0.000000e+00> : vector<32x20xf32>
    %226 = tpu.matmul %224, %225, %cst_143 {dimension_numbers = #tpu.dot_dimension_numbers<[1], [0], [0], [1], [0, 0, 1, 1], [], []>} : vector<32x32xf32>, vector<32x20xf32>, vector<32x20xf32> -> vector<32x20xf32>
    %227 = arith.addf %222, %226 : vector<32x20xf32>
    %c0_144 = arith.constant 0 : index
    %c0_145 = arith.constant 0 : index
    %228 = vector.load %arg6[%c0_144, %c0_145] : memref<32x1xf32, #tpu.memory_space<vmem>>, vector<32x1xf32>
    %229 = vector.broadcast %228 : vector<32x1xf32> to vector<32x20xf32>
    %230 = arith.addf %227, %229 : vector<32x20xf32>
    %cst_146 = arith.constant 0.00999999977 : f32
    %231 = vector.broadcast %cst_146 : f32 to vector<32x20xf32>
    %232 = arith.mulf %231, %230 : vector<32x20xf32>
    %233 = arith.maximumf %230, %232 : vector<32x20xf32>
    %c1_147 = arith.constant 1 : index
    %c0_148 = arith.constant 0 : index
    %c0_149 = arith.constant 0 : index
    %234 = vector.load %arg2[%c1_147, %c0_148, %c0_149] : memref<2x5x100xf32, #tpu.memory_space<vmem>>, vector<1x5x100xf32>
    %235 = vector.shape_cast %234 : vector<1x5x100xf32> to vector<5x100xf32>
    %cst_150 = arith.constant 0.000000e+00 : f32
    %236 = vector.broadcast %cst_150 : f32 to vector<32x60xf32>
    %c0_151 = arith.constant 0 : index
    %c0_152 = arith.constant 0 : index
    %c0_153 = arith.constant 0 : index
    %237 = vector.load %arg7[%c0_151, %c0_152, %c0_153] : memref<5x32x5xf32, #tpu.memory_space<vmem>>, vector<1x32x5xf32>
    %238 = vector.shape_cast %237 : vector<1x32x5xf32> to vector<32x5xf32>
    %239 = vector.extract_strided_slice %235 {offsets = [0, 0], sizes = [5, 60], strides = [1, 1]} : vector<5x100xf32> to vector<5x60xf32>
    %cst_154 = arith.constant dense<0.000000e+00> : vector<32x60xf32>
    %240 = tpu.matmul %238, %239, %cst_154 {dimension_numbers = #tpu.dot_dimension_numbers<[1], [0], [0], [1], [0, 0, 1, 1], [], []>} : vector<32x5xf32>, vector<5x60xf32>, vector<32x60xf32> -> vector<32x60xf32>
    %241 = arith.addf %236, %240 : vector<32x60xf32>
    %c1_155 = arith.constant 1 : index
    %c0_156 = arith.constant 0 : index
    %c0_157 = arith.constant 0 : index
    %242 = vector.load %arg7[%c1_155, %c0_156, %c0_157] : memref<5x32x5xf32, #tpu.memory_space<vmem>>, vector<1x32x5xf32>
    %243 = vector.shape_cast %242 : vector<1x32x5xf32> to vector<32x5xf32>
    %244 = vector.extract_strided_slice %235 {offsets = [0, 10], sizes = [5, 60], strides = [1, 1]} : vector<5x100xf32> to vector<5x60xf32>
    %cst_158 = arith.constant dense<0.000000e+00> : vector<32x60xf32>
    %245 = tpu.matmul %243, %244, %cst_158 {dimension_numbers = #tpu.dot_dimension_numbers<[1], [0], [0], [1], [0, 0, 1, 1], [], []>} : vector<32x5xf32>, vector<5x60xf32>, vector<32x60xf32> -> vector<32x60xf32>
    %246 = arith.addf %241, %245 : vector<32x60xf32>
    %c2_159 = arith.constant 2 : index
    %c0_160 = arith.constant 0 : index
    %c0_161 = arith.constant 0 : index
    %247 = vector.load %arg7[%c2_159, %c0_160, %c0_161] : memref<5x32x5xf32, #tpu.memory_space<vmem>>, vector<1x32x5xf32>
    %248 = vector.shape_cast %247 : vector<1x32x5xf32> to vector<32x5xf32>
    %249 = vector.extract_strided_slice %235 {offsets = [0, 20], sizes = [5, 60], strides = [1, 1]} : vector<5x100xf32> to vector<5x60xf32>
    %cst_162 = arith.constant dense<0.000000e+00> : vector<32x60xf32>
    %250 = tpu.matmul %248, %249, %cst_162 {dimension_numbers = #tpu.dot_dimension_numbers<[1], [0], [0], [1], [0, 0, 1, 1], [], []>} : vector<32x5xf32>, vector<5x60xf32>, vector<32x60xf32> -> vector<32x60xf32>
    %251 = arith.addf %246, %250 : vector<32x60xf32>
    %c3_163 = arith.constant 3 : index
    %c0_164 = arith.constant 0 : index
    %c0_165 = arith.constant 0 : index
    %252 = vector.load %arg7[%c3_163, %c0_164, %c0_165] : memref<5x32x5xf32, #tpu.memory_space<vmem>>, vector<1x32x5xf32>
    %253 = vector.shape_cast %252 : vector<1x32x5xf32> to vector<32x5xf32>
    %254 = vector.extract_strided_slice %235 {offsets = [0, 30], sizes = [5, 60], strides = [1, 1]} : vector<5x100xf32> to vector<5x60xf32>
    %cst_166 = arith.constant dense<0.000000e+00> : vector<32x60xf32>
    %255 = tpu.matmul %253, %254, %cst_166 {dimension_numbers = #tpu.dot_dimension_numbers<[1], [0], [0], [1], [0, 0, 1, 1], [], []>} : vector<32x5xf32>, vector<5x60xf32>, vector<32x60xf32> -> vector<32x60xf32>
    %256 = arith.addf %251, %255 : vector<32x60xf32>
    %c4_167 = arith.constant 4 : index
    %c0_168 = arith.constant 0 : index
    %c0_169 = arith.constant 0 : index
    %257 = vector.load %arg7[%c4_167, %c0_168, %c0_169] : memref<5x32x5xf32, #tpu.memory_space<vmem>>, vector<1x32x5xf32>
    %258 = vector.shape_cast %257 : vector<1x32x5xf32> to vector<32x5xf32>
    %259 = vector.extract_strided_slice %235 {offsets = [0, 40], sizes = [5, 60], strides = [1, 1]} : vector<5x100xf32> to vector<5x60xf32>
    %cst_170 = arith.constant dense<0.000000e+00> : vector<32x60xf32>
    %260 = tpu.matmul %258, %259, %cst_170 {dimension_numbers = #tpu.dot_dimension_numbers<[1], [0], [0], [1], [0, 0, 1, 1], [], []>} : vector<32x5xf32>, vector<5x60xf32>, vector<32x60xf32> -> vector<32x60xf32>
    %261 = arith.addf %256, %260 : vector<32x60xf32>
    %c0_171 = arith.constant 0 : index
    %c0_172 = arith.constant 0 : index
    %262 = vector.load %arg8[%c0_171, %c0_172] : memref<32x1xf32, #tpu.memory_space<vmem>>, vector<32x1xf32>
    %263 = vector.broadcast %262 : vector<32x1xf32> to vector<32x60xf32>
    %264 = arith.addf %261, %263 : vector<32x60xf32>
    %cst_173 = arith.constant 0.00999999977 : f32
    %265 = vector.broadcast %cst_173 : f32 to vector<32x60xf32>
    %266 = arith.mulf %265, %264 : vector<32x60xf32>
    %267 = arith.maximumf %264, %266 : vector<32x60xf32>
    %cst_174 = arith.constant 0.000000e+00 : f32
    %268 = vector.broadcast %cst_174 : f32 to vector<32x20xf32>
    %c0_175 = arith.constant 0 : index
    %c0_176 = arith.constant 0 : index
    %c0_177 = arith.constant 0 : index
    %269 = vector.load %arg9[%c0_175, %c0_176, %c0_177] : memref<5x32x32xf32, #tpu.memory_space<vmem>>, vector<1x32x32xf32>
    %270 = vector.shape_cast %269 : vector<1x32x32xf32> to vector<32x32xf32>
    %271 = vector.extract_strided_slice %267 {offsets = [0, 0], sizes = [32, 20], strides = [1, 1]} : vector<32x60xf32> to vector<32x20xf32>
    %cst_178 = arith.constant dense<0.000000e+00> : vector<32x20xf32>
    %272 = tpu.matmul %270, %271, %cst_178 {dimension_numbers = #tpu.dot_dimension_numbers<[1], [0], [0], [1], [0, 0, 1, 1], [], []>} : vector<32x32xf32>, vector<32x20xf32>, vector<32x20xf32> -> vector<32x20xf32>
    %273 = arith.addf %268, %272 : vector<32x20xf32>
    %c1_179 = arith.constant 1 : index
    %c0_180 = arith.constant 0 : index
    %c0_181 = arith.constant 0 : index
    %274 = vector.load %arg9[%c1_179, %c0_180, %c0_181] : memref<5x32x32xf32, #tpu.memory_space<vmem>>, vector<1x32x32xf32>
    %275 = vector.shape_cast %274 : vector<1x32x32xf32> to vector<32x32xf32>
    %276 = vector.extract_strided_slice %267 {offsets = [0, 10], sizes = [32, 20], strides = [1, 1]} : vector<32x60xf32> to vector<32x20xf32>
    %cst_182 = arith.constant dense<0.000000e+00> : vector<32x20xf32>
    %277 = tpu.matmul %275, %276, %cst_182 {dimension_numbers = #tpu.dot_dimension_numbers<[1], [0], [0], [1], [0, 0, 1, 1], [], []>} : vector<32x32xf32>, vector<32x20xf32>, vector<32x20xf32> -> vector<32x20xf32>
    %278 = arith.addf %273, %277 : vector<32x20xf32>
    %c2_183 = arith.constant 2 : index
    %c0_184 = arith.constant 0 : index
    %c0_185 = arith.constant 0 : index
    %279 = vector.load %arg9[%c2_183, %c0_184, %c0_185] : memref<5x32x32xf32, #tpu.memory_space<vmem>>, vector<1x32x32xf32>
    %280 = vector.shape_cast %279 : vector<1x32x32xf32> to vector<32x32xf32>
    %281 = vector.extract_strided_slice %267 {offsets = [0, 20], sizes = [32, 20], strides = [1, 1]} : vector<32x60xf32> to vector<32x20xf32>
    %cst_186 = arith.constant dense<0.000000e+00> : vector<32x20xf32>
    %282 = tpu.matmul %280, %281, %cst_186 {dimension_numbers = #tpu.dot_dimension_numbers<[1], [0], [0], [1], [0, 0, 1, 1], [], []>} : vector<32x32xf32>, vector<32x20xf32>, vector<32x20xf32> -> vector<32x20xf32>
    %283 = arith.addf %278, %282 : vector<32x20xf32>
    %c3_187 = arith.constant 3 : index
    %c0_188 = arith.constant 0 : index
    %c0_189 = arith.constant 0 : index
    %284 = vector.load %arg9[%c3_187, %c0_188, %c0_189] : memref<5x32x32xf32, #tpu.memory_space<vmem>>, vector<1x32x32xf32>
    %285 = vector.shape_cast %284 : vector<1x32x32xf32> to vector<32x32xf32>
    %286 = vector.extract_strided_slice %267 {offsets = [0, 30], sizes = [32, 20], strides = [1, 1]} : vector<32x60xf32> to vector<32x20xf32>
    %cst_190 = arith.constant dense<0.000000e+00> : vector<32x20xf32>
    %287 = tpu.matmul %285, %286, %cst_190 {dimension_numbers = #tpu.dot_dimension_numbers<[1], [0], [0], [1], [0, 0, 1, 1], [], []>} : vector<32x32xf32>, vector<32x20xf32>, vector<32x20xf32> -> vector<32x20xf32>
    %288 = arith.addf %283, %287 : vector<32x20xf32>
    %c4_191 = arith.constant 4 : index
    %c0_192 = arith.constant 0 : index
    %c0_193 = arith.constant 0 : index
    %289 = vector.load %arg9[%c4_191, %c0_192, %c0_193] : memref<5x32x32xf32, #tpu.memory_space<vmem>>, vector<1x32x32xf32>
    %290 = vector.shape_cast %289 : vector<1x32x32xf32> to vector<32x32xf32>
    %291 = vector.extract_strided_slice %267 {offsets = [0, 40], sizes = [32, 20], strides = [1, 1]} : vector<32x60xf32> to vector<32x20xf32>
    %cst_194 = arith.constant dense<0.000000e+00> : vector<32x20xf32>
    %292 = tpu.matmul %290, %291, %cst_194 {dimension_numbers = #tpu.dot_dimension_numbers<[1], [0], [0], [1], [0, 0, 1, 1], [], []>} : vector<32x32xf32>, vector<32x20xf32>, vector<32x20xf32> -> vector<32x20xf32>
    %293 = arith.addf %288, %292 : vector<32x20xf32>
    %c0_195 = arith.constant 0 : index
    %c0_196 = arith.constant 0 : index
    %294 = vector.load %arg10[%c0_195, %c0_196] : memref<32x1xf32, #tpu.memory_space<vmem>>, vector<32x1xf32>
    %295 = vector.broadcast %294 : vector<32x1xf32> to vector<32x20xf32>
    %296 = arith.addf %293, %295 : vector<32x20xf32>
    %cst_197 = arith.constant 0.00999999977 : f32
    %297 = vector.broadcast %cst_197 : f32 to vector<32x20xf32>
    %298 = arith.mulf %297, %296 : vector<32x20xf32>
    %299 = arith.maximumf %296, %298 : vector<32x20xf32>
    %300 = tpu.concatenate %233, %299 in 1 : vector<32x20xf32>, vector<32x20xf32> -> vector<32x40xf32>
    %301 = vector.extract_strided_slice %300 {offsets = [0, 0], sizes = [1, 40], strides = [1, 1]} : vector<32x40xf32> to vector<1x40xf32>
    %302 = vector.extract_strided_slice %300 {offsets = [1, 0], sizes = [1, 40], strides = [1, 1]} : vector<32x40xf32> to vector<1x40xf32>
    %303 = vector.extract_strided_slice %300 {offsets = [2, 0], sizes = [1, 40], strides = [1, 1]} : vector<32x40xf32> to vector<1x40xf32>
    %304 = vector.extract_strided_slice %300 {offsets = [3, 0], sizes = [1, 40], strides = [1, 1]} : vector<32x40xf32> to vector<1x40xf32>
    %305 = vector.extract_strided_slice %300 {offsets = [4, 0], sizes = [1, 40], strides = [1, 1]} : vector<32x40xf32> to vector<1x40xf32>
    %306 = vector.extract_strided_slice %300 {offsets = [5, 0], sizes = [1, 40], strides = [1, 1]} : vector<32x40xf32> to vector<1x40xf32>
    %307 = vector.extract_strided_slice %300 {offsets = [6, 0], sizes = [1, 40], strides = [1, 1]} : vector<32x40xf32> to vector<1x40xf32>
    %308 = vector.extract_strided_slice %300 {offsets = [7, 0], sizes = [1, 40], strides = [1, 1]} : vector<32x40xf32> to vector<1x40xf32>
    %309 = vector.extract_strided_slice %300 {offsets = [8, 0], sizes = [1, 40], strides = [1, 1]} : vector<32x40xf32> to vector<1x40xf32>
    %310 = vector.extract_strided_slice %300 {offsets = [9, 0], sizes = [1, 40], strides = [1, 1]} : vector<32x40xf32> to vector<1x40xf32>
    %311 = vector.extract_strided_slice %300 {offsets = [10, 0], sizes = [1, 40], strides = [1, 1]} : vector<32x40xf32> to vector<1x40xf32>
    %312 = vector.extract_strided_slice %300 {offsets = [11, 0], sizes = [1, 40], strides = [1, 1]} : vector<32x40xf32> to vector<1x40xf32>
    %313 = vector.extract_strided_slice %300 {offsets = [12, 0], sizes = [1, 40], strides = [1, 1]} : vector<32x40xf32> to vector<1x40xf32>
    %314 = vector.extract_strided_slice %300 {offsets = [13, 0], sizes = [1, 40], strides = [1, 1]} : vector<32x40xf32> to vector<1x40xf32>
    %315 = vector.extract_strided_slice %300 {offsets = [14, 0], sizes = [1, 40], strides = [1, 1]} : vector<32x40xf32> to vector<1x40xf32>
    %316 = vector.extract_strided_slice %300 {offsets = [15, 0], sizes = [1, 40], strides = [1, 1]} : vector<32x40xf32> to vector<1x40xf32>
    %317 = vector.extract_strided_slice %300 {offsets = [16, 0], sizes = [1, 40], strides = [1, 1]} : vector<32x40xf32> to vector<1x40xf32>
    %318 = vector.extract_strided_slice %300 {offsets = [17, 0], sizes = [1, 40], strides = [1, 1]} : vector<32x40xf32> to vector<1x40xf32>
    %319 = vector.extract_strided_slice %300 {offsets = [18, 0], sizes = [1, 40], strides = [1, 1]} : vector<32x40xf32> to vector<1x40xf32>
    %320 = vector.extract_strided_slice %300 {offsets = [19, 0], sizes = [1, 40], strides = [1, 1]} : vector<32x40xf32> to vector<1x40xf32>
    %321 = vector.extract_strided_slice %300 {offsets = [20, 0], sizes = [1, 40], strides = [1, 1]} : vector<32x40xf32> to vector<1x40xf32>
    %322 = vector.extract_strided_slice %300 {offsets = [21, 0], sizes = [1, 40], strides = [1, 1]} : vector<32x40xf32> to vector<1x40xf32>
    %323 = vector.extract_strided_slice %300 {offsets = [22, 0], sizes = [1, 40], strides = [1, 1]} : vector<32x40xf32> to vector<1x40xf32>
    %324 = vector.extract_strided_slice %300 {offsets = [23, 0], sizes = [1, 40], strides = [1, 1]} : vector<32x40xf32> to vector<1x40xf32>
    %325 = vector.extract_strided_slice %300 {offsets = [24, 0], sizes = [1, 40], strides = [1, 1]} : vector<32x40xf32> to vector<1x40xf32>
    %326 = vector.extract_strided_slice %300 {offsets = [25, 0], sizes = [1, 40], strides = [1, 1]} : vector<32x40xf32> to vector<1x40xf32>
    %327 = vector.extract_strided_slice %300 {offsets = [26, 0], sizes = [1, 40], strides = [1, 1]} : vector<32x40xf32> to vector<1x40xf32>
    %328 = vector.extract_strided_slice %300 {offsets = [27, 0], sizes = [1, 40], strides = [1, 1]} : vector<32x40xf32> to vector<1x40xf32>
    %329 = vector.extract_strided_slice %300 {offsets = [28, 0], sizes = [1, 40], strides = [1, 1]} : vector<32x40xf32> to vector<1x40xf32>
    %330 = vector.extract_strided_slice %300 {offsets = [29, 0], sizes = [1, 40], strides = [1, 1]} : vector<32x40xf32> to vector<1x40xf32>
    %331 = vector.extract_strided_slice %300 {offsets = [30, 0], sizes = [1, 40], strides = [1, 1]} : vector<32x40xf32> to vector<1x40xf32>
    %332 = vector.extract_strided_slice %300 {offsets = [31, 0], sizes = [1, 40], strides = [1, 1]} : vector<32x40xf32> to vector<1x40xf32>
    %333 = tpu.concatenate %301, %302, %303, %304, %305, %306, %307, %308, %309, %310, %311, %312, %313, %314, %315, %316 in 1 : vector<1x40xf32>, vector<1x40xf32>, vector<1x40xf32>, vector<1x40xf32>, vector<1x40xf32>, vector<1x40xf32>, vector<1x40xf32>, vector<1x40xf32>, vector<1x40xf32>, vector<1x40xf32>, vector<1x40xf32>, vector<1x40xf32>, vector<1x40xf32>, vector<1x40xf32>, vector<1x40xf32>, vector<1x40xf32> -> vector<1x640xf32>
    %334 = tpu.concatenate %317, %318, %319, %320, %321, %322, %323, %324, %325, %326, %327, %328, %329, %330, %331, %332 in 1 : vector<1x40xf32>, vector<1x40xf32>, vector<1x40xf32>, vector<1x40xf32>, vector<1x40xf32>, vector<1x40xf32>, vector<1x40xf32>, vector<1x40xf32>, vector<1x40xf32>, vector<1x40xf32>, vector<1x40xf32>, vector<1x40xf32>, vector<1x40xf32>, vector<1x40xf32>, vector<1x40xf32>, vector<1x40xf32> -> vector<1x640xf32>
    %335 = tpu.concatenate %333, %334 in 1 : vector<1x640xf32>, vector<1x640xf32> -> vector<1x1280xf32>
    %336 = tpu.concatenate %167, %335 in 0 : vector<1x1280xf32>, vector<1x1280xf32> -> vector<2x1280xf32>
    %c0_198 = arith.constant 0 : index
    %c0_199 = arith.constant 0 : index
    %337 = vector.load %arg11[%c0_198, %c0_199] : memref<1280x512xf32, #tpu.memory_space<vmem>>, vector<1280x512xf32>
    %cst_200 = arith.constant dense<0.000000e+00> : vector<2x512xf32>
    %338 = tpu.matmul %336, %337, %cst_200 {dimension_numbers = #tpu.dot_dimension_numbers<[1], [0], [0], [1], [0, 0, 1, 1], [], []>} : vector<2x1280xf32>, vector<1280x512xf32>, vector<2x512xf32> -> vector<2x512xf32>
    %c0_201 = arith.constant 0 : index
    %c0_202 = arith.constant 0 : index
    %339 = vector.load %arg12[%c0_201, %c0_202] : memref<1x512xf32, #tpu.memory_space<vmem>>, vector<1x512xf32>
    %340 = vector.broadcast %339 : vector<1x512xf32> to vector<2x512xf32>
    %341 = arith.addf %338, %340 : vector<2x512xf32>
    %cst_203 = arith.constant 0.00999999977 : f32
    %342 = vector.broadcast %cst_203 : f32 to vector<2x512xf32>
    %343 = arith.mulf %342, %341 : vector<2x512xf32>
    %344 = arith.maximumf %341, %343 : vector<2x512xf32>
    %c0_204 = arith.constant 0 : index
    %c0_205 = arith.constant 0 : index
    %345 = vector.load %arg13[%c0_204, %c0_205] : memref<512x256xf32, #tpu.memory_space<vmem>>, vector<512x256xf32>
    %cst_206 = arith.constant dense<0.000000e+00> : vector<2x256xf32>
    %346 = tpu.matmul %344, %345, %cst_206 {dimension_numbers = #tpu.dot_dimension_numbers<[1], [0], [0], [1], [0, 0, 1, 1], [], []>} : vector<2x512xf32>, vector<512x256xf32>, vector<2x256xf32> -> vector<2x256xf32>
    %c0_207 = arith.constant 0 : index
    %c0_208 = arith.constant 0 : index
    %347 = vector.load %arg14[%c0_207, %c0_208] : memref<1x256xf32, #tpu.memory_space<vmem>>, vector<1x256xf32>
    %348 = vector.broadcast %347 : vector<1x256xf32> to vector<2x256xf32>
    %349 = arith.addf %346, %348 : vector<2x256xf32>
    %cst_209 = arith.constant 0.00999999977 : f32
    %350 = vector.broadcast %cst_209 : f32 to vector<2x256xf32>
    %351 = arith.mulf %350, %349 : vector<2x256xf32>
    %352 = arith.maximumf %349, %351 : vector<2x256xf32>
    %c0_210 = arith.constant 0 : index
    %c0_211 = arith.constant 0 : index
    %353 = vector.load %arg15[%c0_210, %c0_211] : memref<256x128xf32, #tpu.memory_space<vmem>>, vector<256x128xf32>
    %cst_212 = arith.constant dense<0.000000e+00> : vector<2x128xf32>
    %354 = tpu.matmul %352, %353, %cst_212 {dimension_numbers = #tpu.dot_dimension_numbers<[1], [0], [0], [1], [0, 0, 1, 1], [], []>} : vector<2x256xf32>, vector<256x128xf32>, vector<2x128xf32> -> vector<2x128xf32>
    %c0_213 = arith.constant 0 : index
    %c0_214 = arith.constant 0 : index
    %355 = vector.load %arg16[%c0_213, %c0_214] : memref<1x128xf32, #tpu.memory_space<vmem>>, vector<1x128xf32>
    %356 = vector.broadcast %355 : vector<1x128xf32> to vector<2x128xf32>
    %357 = arith.addf %354, %356 : vector<2x128xf32>
    %c0_215 = arith.constant 0 : index
    %c0_216 = arith.constant 0 : index
    %358 = vector.load %arg17[%c0_215, %c0_216] : memref<2x128xf32, #tpu.memory_space<vmem>>, vector<2x128xf32>
    tpu.vector_store %arg17[%c0_215, %c0_216], %357 {strides = array<i32>} : memref<2x128xf32, #tpu.memory_space<vmem>>, vector<2x128xf32>,
    return
  }
  func.func @transform_0(%arg0: i32) -> (i32, i32, i32) {
    %c0_i32 = arith.constant 0 : i32
    %c0_i32_0 = arith.constant 0 : i32
    %c0_i32_1 = arith.constant 0 : i32
    %c0_i32_2 = arith.constant 0 : i32
    return %c0_i32, %c0_i32_0, %c0_i32_1 : i32, i32, i32
  }
  func.func @transform_1(%arg0: i32) -> (i32, i32, i32) {
    %c0_i32 = arith.constant 0 : i32
    %c0_i32_0 = arith.constant 0 : i32
    %c0_i32_1 = arith.constant 0 : i32
    %c0_i32_2 = arith.constant 0 : i32
    return %c0_i32, %c0_i32_0, %c0_i32_1 : i32, i32, i32
  }
  func.func @transform_2(%arg0: i32) -> (i32, i32, i32) {
    %c0_i32 = arith.constant 0 : i32
    %c0_i32_0 = arith.constant 0 : i32
    %c0_i32_1 = arith.constant 0 : i32
    %c0_i32_2 = arith.constant 0 : i32
    return %c0_i32, %c0_i32_0, %c0_i32_1 : i32, i32, i32
  }
  func.func @transform_3(%arg0: i32) -> (i32, i32) {
    %c0_i32 = arith.constant 0 : i32
    %c0_i32_0 = arith.constant 0 : i32
    %c0_i32_1 = arith.constant 0 : i32
    return %c0_i32, %c0_i32_0 : i32, i32
  }
  func.func @transform_4(%arg0: i32) -> (i32, i32, i32) {
    %c0_i32 = arith.constant 0 : i32
    %c0_i32_0 = arith.constant 0 : i32
    %c0_i32_1 = arith.constant 0 : i32
    %c0_i32_2 = arith.constant 0 : i32
    return %c0_i32, %c0_i32_0, %c0_i32_1 : i32, i32, i32
  }
  func.func @transform_5(%arg0: i32) -> (i32, i32) {
    %c0_i32 = arith.constant 0 : i32
    %c0_i32_0 = arith.constant 0 : i32
    %c0_i32_1 = arith.constant 0 : i32
    return %c0_i32, %c0_i32_0 : i32, i32
  }
  func.func @transform_6(%arg0: i32) -> (i32, i32, i32) {
    %c0_i32 = arith.constant 0 : i32
    %c0_i32_0 = arith.constant 0 : i32
    %c0_i32_1 = arith.constant 0 : i32
    %c0_i32_2 = arith.constant 0 : i32
    return %c0_i32, %c0_i32_0, %c0_i32_1 : i32, i32, i32
  }
  func.func @transform_7(%arg0: i32) -> (i32, i32) {
    %c0_i32 = arith.constant 0 : i32
    %c0_i32_0 = arith.constant 0 : i32
    %c0_i32_1 = arith.constant 0 : i32
    return %c0_i32, %c0_i32_0 : i32, i32
  }
  func.func @transform_8(%arg0: i32) -> (i32, i32, i32) {
    %c0_i32 = arith.constant 0 : i32
    %c0_i32_0 = arith.constant 0 : i32
    %c0_i32_1 = arith.constant 0 : i32
    %c0_i32_2 = arith.constant 0 : i32
    return %c0_i32, %c0_i32_0, %c0_i32_1 : i32, i32, i32
  }
  func.func @transform_9(%arg0: i32) -> (i32, i32) {
    %c0_i32 = arith.constant 0 : i32
    %c0_i32_0 = arith.constant 0 : i32
    %c0_i32_1 = arith.constant 0 : i32
    return %c0_i32, %c0_i32_0 : i32, i32
  }
  func.func @transform_10(%arg0: i32) -> (i32, i32) {
    %c0_i32 = arith.constant 0 : i32
    %c0_i32_0 = arith.constant 0 : i32
    %c0_i32_1 = arith.constant 0 : i32
    return %c0_i32, %c0_i32_0 : i32, i32
  }
  func.func @transform_11(%arg0: i32) -> (i32, i32) {
    %c0_i32 = arith.constant 0 : i32
    %c0_i32_0 = arith.constant 0 : i32
    %c0_i32_1 = arith.constant 0 : i32
    return %c0_i32, %c0_i32_0 : i32, i32
  }
  func.func @transform_12(%arg0: i32) -> (i32, i32) {
    %c0_i32 = arith.constant 0 : i32
    %c0_i32_0 = arith.constant 0 : i32
    %c0_i32_1 = arith.constant 0 : i32
    return %c0_i32, %c0_i32_0 : i32, i32
  }
  func.func @transform_13(%arg0: i32) -> (i32, i32) {
    %c0_i32 = arith.constant 0 : i32
    %c0_i32_0 = arith.constant 0 : i32
    %c0_i32_1 = arith.constant 0 : i32
    return %c0_i32, %c0_i32_0 : i32, i32
  }
  func.func @transform_14(%arg0: i32) -> (i32, i32) {
    %c0_i32 = arith.constant 0 : i32
    %c0_i32_0 = arith.constant 0 : i32
    %c0_i32_1 = arith.constant 0 : i32
    return %c0_i32, %c0_i32_0 : i32, i32
  }
  func.func @transform_15(%arg0: i32) -> (i32, i32) {
    %c0_i32 = arith.constant 0 : i32
    %c0_i32_0 = arith.constant 0 : i32
    %c0_i32_1 = arith.constant 0 : i32
    return %c0_i32, %c0_i32_0 : i32, i32
  }
  func.func @transform_16(%arg0: i32) -> (i32, i32) {
    %c0_i32 = arith.constant 0 : i32
    %c0_i32_0 = arith.constant 0 : i32
    %c0_i32_1 = arith.constant 0 : i32
    return %c0_i32, %c0_i32_0 : i32, i32
  }
}

</mosaic_0001>

<llo_original>
// kernel: critic2_forward.1
$region0: #{critic2_forward.1}
  #allocation0 [shape = 'u32[]', space=smem, size = 0x4, offset = 0x4, fixed_abs, tag = 'smem constant byte address 0x4 - core index']
  #allocation1 [shape = 'u32[72,128]{1,0:T(1,128)}', space=vmem, size = 0x9000, scoped, tag = 'internal scratch']
  %s0 = inlined_call_operand.vmem [shape: f32[2,5,100], index: 0, kind: input, shape index: {}]
  %s1 = inlined_call_operand.vmem [shape: f32[2,5,100], index: 1, kind: input, shape index: {}]
  %s2 = inlined_call_operand.vmem [shape: f32[5,32,5], index: 2, kind: input, shape index: {}]
  %s3 = inlined_call_operand.vmem [shape: f32[32,1], index: 3, kind: input, shape index: {}]
  %s4 = inlined_call_operand.hbm [shape: f32[5,32,32], index: 4, kind: input, shape index: {}]
  %s5 = inlined_call_operand.vmem [shape: f32[32,1], index: 5, kind: input, shape index: {}]
  %s6 = inlined_call_operand.vmem [shape: f32[5,32,5], index: 6, kind: input, shape index: {}]
  %s7 = inlined_call_operand.vmem [shape: f32[32,1], index: 7, kind: input, shape index: {}]
  %s8 = inlined_call_operand.hbm [shape: f32[5,32,32], index: 8, kind: input, shape index: {}]
  %s9 = inlined_call_operand.vmem [shape: f32[32,1], index: 9, kind: input, shape index: {}]
  %s10 = inlined_call_operand.hbm [shape: f32[1280,512], index: 10, kind: input, shape index: {}]
  %s11 = inlined_call_operand.hbm [shape: f32[1,512], index: 11, kind: input, shape index: {}]
  %s12 = inlined_call_operand.hbm [shape: f32[512,256], index: 12, kind: input, shape index: {}]
  %s13 = inlined_call_operand.hbm [shape: f32[1,256], index: 13, kind: input, shape index: {}]
  %s14 = inlined_call_operand.hbm [shape: f32[256,128], index: 14, kind: input, shape index: {}]
  %s15 = inlined_call_operand.hbm [shape: f32[1,128], index: 15, kind: input, shape index: {}]
  %s16 = inlined_call_operand.vmem [shape: f32[2,128], index: 16, kind: output, shape index: {}]
  %s17 = sld [smem:[#allocation0]]
  $region106: #{critic2_forward.1} parent=0
    _
  %s19 = ssub.s32 1, %s17
  %s20 = scalar_select 0, %s19, %s17
  $region1: #{critic2_forward.1} parent=0
    #allocation2 [shape = 'u8[81920]{0}', space=vmem, size = 0x14000, scoped, tag = 'input window, operand 4, single buffered']
    #allocation3 [shape = 's32[1]{0}', space=sflag, size = 0x4, scoped, tag = 'scoped memory for critic2_forward.1']
    #allocation4 [shape = 'u8[81920]{0}', space=vmem, size = 0x14000, scoped, tag = 'input window, operand 8, single buffered']
    #allocation5 [shape = 's32[1]{0}', space=sflag, size = 0x4, scoped, tag = 'scoped memory for critic2_forward.1']
    #allocation6 [shape = 'u8[2621440]{0}', space=vmem, size = 0x280000, scoped, tag = 'input window, operand 10, single buffered']
    #allocation7 [shape = 'u8[2048]{0}', space=vmem, size = 0x800, scoped, tag = 'input window, operand 11, single buffered']
    #allocation8 [shape = 's32[1]{0}', space=sflag, size = 0x4, scoped, tag = 'scoped memory for critic2_forward.1']
    #allocation9 [shape = 'u8[524288]{0}', space=vmem, size = 0x80000, scoped, tag = 'input window, operand 12, single buffered']
    #allocation10 [shape = 'u8[1024]{0}', space=vmem, size = 0x400, scoped, tag = 'input window, operand 13, single buffered']
    #allocation11 [shape = 's32[1]{0}', space=sflag, size = 0x4, scoped, tag = 'scoped memory for critic2_forward.1']
    #allocation12 [shape = 'u8[131072]{0}', space=vmem, size = 0x20000, scoped, tag = 'input window, operand 14, single buffered']
    #allocation13 [shape = 'u8[512]{0}', space=vmem, size = 0x400, scoped, tag = 'input window, operand 15, single buffered']
    #allocation14 [shape = 's32[1]{0}', space=sflag, size = 0x4, scoped, tag = 'scoped memory for critic2_forward.1']
    %21 = vsyncpa [#allocation3], 0
    %22 = vsyncpa [#allocation5], 0
    %23 = vsyncpa [#allocation8], 0
    %24 = vsyncpa [#allocation11], 0
    %25 = vsyncpa [#allocation14], 0
    // Predicated region
    $region2: #{critic2_forward.1} parent=1 // pred_check
      _
    $region3: #{critic2_forward.1} parent=1 // pred_check_branch
      %27 = sbr.rel (0) target = $region5
    $region4: #{critic2_forward.1} parent=1 // pred_region
      _
    $region5: #{critic2_forward.1} parent=1 // pred_fallthru
      _
    // Predicated region
    $region6: #{critic2_forward.1} parent=1 // pred_check
      _
    $region7: #{critic2_forward.1} parent=1 // pred_check_branch
      %29 = sbr.rel (0) target = $region9
    $region8: #{critic2_forward.1} parent=1 // pred_region
      _
    $region9: #{critic2_forward.1} parent=1 // pred_fallthru
      _
    // Predicated region
    $region10: #{critic2_forward.1} parent=1 // pred_check
      _
    $region11: #{critic2_forward.1} parent=1 // pred_check_branch
      %31 = sbr.rel (0) target = $region13
    $region12: #{critic2_forward.1} parent=1 // pred_region
      _
    $region13: #{critic2_forward.1} parent=1 // pred_fallthru
      _
    // Predicated region
    $region14: #{critic2_forward.1} parent=1 // pred_check
      _
    $region15: #{critic2_forward.1} parent=1 // pred_check_branch
      %33 = sbr.rel (0) target = $region17
    $region16: #{critic2_forward.1} parent=1 // pred_region
      _
    $region17: #{critic2_forward.1} parent=1 // pred_fallthru
      _
    // Predicated region
    $region18: #{critic2_forward.1} parent=1 // pred_check
      _
    $region19: #{critic2_forward.1} parent=1 // pred_check_branch
      %35 = sbr.rel (0) target = $region21
    $region20: #{critic2_forward.1} parent=1 // pred_region
      %37 = vsyncadd [#allocation3], 0
      %s38 = sshll.u32 %s4, 4
      %s39 = int_to_ptr.hbm [resolvable:$true] %s38
      %s40 = sshll.u32 [#allocation2], 4
      %s41 = int_to_ptr.vmem [resolvable:$true] %s40
      %46 = dma.hbm_to_vmem [thread:$0]  %s39, 2560, %s41, [#allocation3], 128, 128, 8
    $region21: #{critic2_forward.1} parent=1 // pred_fallthru
      _
    // Predicated region
    $region22: #{critic2_forward.1} parent=1 // pred_check
      _
    $region23: #{critic2_forward.1} parent=1 // pred_check_branch
      %48 = sbr.rel (0) target = $region25
    $region24: #{critic2_forward.1} parent=1 // pred_region
      _
    $region25: #{critic2_forward.1} parent=1 // pred_fallthru
      _
    // Predicated region
    $region26: #{critic2_forward.1} parent=1 // pred_check
      _
    $region27: #{critic2_forward.1} parent=1 // pred_check_branch
      %50 = sbr.rel (0) target = $region29
    $region28: #{critic2_forward.1} parent=1 // pred_region
      _
    $region29: #{critic2_forward.1} parent=1 // pred_fallthru
      _
    // Predicated region
    $region30: #{critic2_forward.1} parent=1 // pred_check
      _
    $region31: #{critic2_forward.1} parent=1 // pred_check_branch
      %52 = sbr.rel (0) target = $region33
    $region32: #{critic2_forward.1} parent=1 // pred_region
      _
    $region33: #{critic2_forward.1} parent=1 // pred_fallthru
      _
    // Predicated region
    $region34: #{critic2_forward.1} parent=1 // pred_check
      _
    $region35: #{critic2_forward.1} parent=1 // pred_check_branch
      %54 = sbr.rel (0) target = $region37
    $region36: #{critic2_forward.1} parent=1 // pred_region
      %56 = vsyncadd [#allocation5], 0
      %s57 = sshll.u32 %s8, 4
      %s58 = int_to_ptr.hbm [resolvable:$true] %s57
      %s59 = sshll.u32 [#allocation4], 4
      %s60 = int_to_ptr.vmem [resolvable:$true] %s59
      %65 = dma.hbm_to_vmem [thread:$0]  %s58, 2560, %s60, [#allocation5], 128, 128, 8
    $region37: #{critic2_forward.1} parent=1 // pred_fallthru
      _
    // Predicated region
    $region38: #{critic2_forward.1} parent=1 // pred_check
      _
    $region39: #{critic2_forward.1} parent=1 // pred_check_branch
      %67 = sbr.rel (0) target = $region41
    $region40: #{critic2_forward.1} parent=1 // pred_region
      _
    $region41: #{critic2_forward.1} parent=1 // pred_fallthru
      _
    // Predicated region
    $region42: #{critic2_forward.1} parent=1 // pred_check
      _
    $region43: #{critic2_forward.1} parent=1 // pred_check_branch
      %69 = sbr.rel (0) target = $region45
    $region44: #{critic2_forward.1} parent=1 // pred_region
      %71 = vsyncadd [#allocation5], 0
      %s72 = sshll.u32 %s10, 4
      %s73 = int_to_ptr.hbm [resolvable:$true] %s72
      %s74 = sshll.u32 [#allocation6], 4
      %s75 = int_to_ptr.vmem [resolvable:$true] %s74
      %80 = dma.hbm_to_vmem [thread:$0]  %s73, 81920, %s75, [#allocation5], 512, 512, 32
    $region45: #{critic2_forward.1} parent=1 // pred_fallthru
      _
    // Predicated region
    $region46: #{critic2_forward.1} parent=1 // pred_check
      _
    $region47: #{critic2_forward.1} parent=1 // pred_check_branch
      %82 = sbr.rel (0) target = $region49
    $region48: #{critic2_forward.1} parent=1 // pred_region
      %84 = vsyncadd [#allocation8], 0
      %s86 = sshll.u32 %s11, 4
      %s87 = int_to_ptr.hbm [resolvable:$true] %s86
      %s88 = sshll.u32 [#allocation7], 4
      %s89 = int_to_ptr.vmem [resolvable:$true] %s88
      %91 = dma.hbm_to_vmem [thread:$0]  %s87, 64, %s89, [#allocation8]
    $region49: #{critic2_forward.1} parent=1 // pred_fallthru
      _
    // Predicated region
    $region50: #{critic2_forward.1} parent=1 // pred_check
      _
    $region51: #{critic2_forward.1} parent=1 // pred_check_branch
      %93 = sbr.rel (0) target = $region53
    $region52: #{critic2_forward.1} parent=1 // pred_region
      %95 = vsyncadd [#allocation8], 0
      %s96 = sshll.u32 %s12, 4
      %s97 = int_to_ptr.hbm [resolvable:$true] %s96
      %s98 = sshll.u32 [#allocation9], 4
      %s99 = int_to_ptr.vmem [resolvable:$true] %s98
      %104 = dma.hbm_to_vmem [thread:$0]  %s97, 16384, %s99, [#allocation8], 256, 256, 16
    $region53: #{critic2_forward.1} parent=1 // pred_fallthru
      _
    // Predicated region
    $region54: #{critic2_forward.1} parent=1 // pred_check
      _
    $region55: #{critic2_forward.1} parent=1 // pred_check_branch
      %106 = sbr.rel (0) target = $region57
    $region56: #{critic2_forward.1} parent=1 // pred_region
      %108 = vsyncadd [#allocation11], 0
      %s110 = sshll.u32 %s13, 4
      %s111 = int_to_ptr.hbm [resolvable:$true] %s110
      %s112 = sshll.u32 [#allocation10], 4
      %s113 = int_to_ptr.vmem [resolvable:$true] %s112
      %115 = dma.hbm_to_vmem [thread:$0]  %s111, 32, %s113, [#allocation11]
    $region57: #{critic2_forward.1} parent=1 // pred_fallthru
      _
    // Predicated region
    $region58: #{critic2_forward.1} parent=1 // pred_check
      _
    $region59: #{critic2_forward.1} parent=1 // pred_check_branch
      %117 = sbr.rel (0) target = $region61
    $region60: #{critic2_forward.1} parent=1 // pred_region
      %119 = vsyncadd [#allocation11], 0
      %s120 = sshll.u32 %s14, 4
      %s121 = int_to_ptr.hbm [resolvable:$true] %s120
      %s122 = sshll.u32 [#allocation12], 4
      %s123 = int_to_ptr.vmem [resolvable:$true] %s122
      %128 = dma.hbm_to_vmem [thread:$0]  %s121, 4096, %s123, [#allocation11], 128, 128, 8
    $region61: #{critic2_forward.1} parent=1 // pred_fallthru
      _
    // Predicated region
    $region62: #{critic2_forward.1} parent=1 // pred_check
      _
    $region63: #{critic2_forward.1} parent=1 // pred_check_branch
      %130 = sbr.rel (0) target = $region65
    $region64: #{critic2_forward.1} parent=1 // pred_region
      %132 = vsyncadd [#allocation14], 0
      %s134 = sshll.u32 %s15, 4
      %s135 = int_to_ptr.hbm [resolvable:$true] %s134
      %s136 = sshll.u32 [#allocation13], 4
      %s137 = int_to_ptr.vmem [resolvable:$true] %s136
      %139 = dma.hbm_to_vmem [thread:$0]  %s135, 16, %s137, [#allocation14]
    $region65: #{critic2_forward.1} parent=1 // pred_fallthru
      _
    // Predicated region
    $region66: #{critic2_forward.1} parent=1 // pred_check
      _
    $region67: #{critic2_forward.1} parent=1 // pred_check_branch
      %141 = sbr.rel (0) target = $region69
    $region68: #{critic2_forward.1} parent=1 // pred_region
      %143 = dma.done [#allocation3], 2560
    $region69: #{critic2_forward.1} parent=1 // pred_fallthru
      _
    // Predicated region
    $region70: #{critic2_forward.1} parent=1 // pred_check
      _
    $region71: #{critic2_forward.1} parent=1 // pred_check_branch
      %145 = sbr.rel (0) target = $region73
    $region72: #{critic2_forward.1} parent=1 // pred_region
      %147 = dma.done [#allocation5], 2560
    $region73: #{critic2_forward.1} parent=1 // pred_fallthru
      _
    // Predicated region
    $region74: #{critic2_forward.1} parent=1 // pred_check
      _
    $region75: #{critic2_forward.1} parent=1 // pred_check_branch
      %149 = sbr.rel (0) target = $region77
    $region76: #{critic2_forward.1} parent=1 // pred_region
      %151 = dma.done [#allocation5], 81920
    $region77: #{critic2_forward.1} parent=1 // pred_fallthru
      _
    // Predicated region
    $region78: #{critic2_forward.1} parent=1 // pred_check
      _
    $region79: #{critic2_forward.1} parent=1 // pred_check_branch
      %153 = sbr.rel (0) target = $region81
    $region80: #{critic2_forward.1} parent=1 // pred_region
      %155 = dma.done [#allocation8], 64
    $region81: #{critic2_forward.1} parent=1 // pred_fallthru
      _
    // Predicated region
    $region82: #{critic2_forward.1} parent=1 // pred_check
      _
    $region83: #{critic2_forward.1} parent=1 // pred_check_branch
      %157 = sbr.rel (0) target = $region85
    $region84: #{critic2_forward.1} parent=1 // pred_region
      %159 = dma.done [#allocation8], 16384
    $region85: #{critic2_forward.1} parent=1 // pred_fallthru
      _
    // Predicated region
    $region86: #{critic2_forward.1} parent=1 // pred_check
      _
    $region87: #{critic2_forward.1} parent=1 // pred_check_branch
      %161 = sbr.rel (0) target = $region89
    $region88: #{critic2_forward.1} parent=1 // pred_region
      %163 = dma.done [#allocation11], 32
    $region89: #{critic2_forward.1} parent=1 // pred_fallthru
      _
    // Predicated region
    $region90: #{critic2_forward.1} parent=1 // pred_check
      _
    $region91: #{critic2_forward.1} parent=1 // pred_check_branch
      %165 = sbr.rel (0) target = $region93
    $region92: #{critic2_forward.1} parent=1 // pred_region
      %167 = dma.done [#allocation11], 4096
    $region93: #{critic2_forward.1} parent=1 // pred_fallthru
      _
    // Predicated region
    $region94: #{critic2_forward.1} parent=1 // pred_check
      _
    $region95: #{critic2_forward.1} parent=1 // pred_check_branch
      %169 = sbr.rel (0) target = $region97
    $region96: #{critic2_forward.1} parent=1 // pred_region
      %171 = dma.done [#allocation14], 16
    $region97: #{critic2_forward.1} parent=1 // pred_fallthru
      _
    %v172 = vld [vmem:[%s0] sm:$0x1f]
    %v173 = vld [vmem:[%s2] sm:$0xff]
    %v174 = vld [vmem:[%s2 + $0x8] sm:$0xff]
    %v175 = vld [vmem:[%s2 + $0x10] sm:$0xff]
    %v176 = vld [vmem:[%s2 + $0x18] sm:$0xff]
    %s177 = scalar_lea.vmem %s2, 32
    %v178 = vld [vmem:[%s177] sm:$0xff]
    %v179 = vld [vmem:[%s177 + $0x8] sm:$0xff]
    %v180 = vld [vmem:[%s177 + $0x10] sm:$0xff]
    %v181 = vld [vmem:[%s177 + $0x18] sm:$0xff]
    %183 = vrot.lane.b32.xlu0 %v172, 118
    %v184 = vpop.permute.xlu0 %183
    %vm185 = vcmask 39936
    %v187 = vsel %vm185, %v178, 0
    %v190 = vsel %vm185, %v179, 0
    %v193 = vsel %vm185, %v180, 0
    %v196 = vsel %vm185, %v181, 0
    %vm198 = vcmask 1044480
    %v199 = vsel %vm198, %v184, 0
    %201 = vmatpush.msra.mxu0 0.0
    %202 = vmatpush.msra.mxu0 0.0
    %203 = vmatpush.msra.mxu0 0.0
    %204 = vmatpush.msra.mxu0 0.0
    %205 = vmatpush.msra.mxu0 0.0
    %206 = vmatpush.msra.mxu0 0.0
    %207 = vmatpush.msra.mxu0 0.0
    %208 = vmatpush.msra.mxu0 0.0
    %209 = vmatpush.msra.mxu0 0.0
    %210 = vmatpush.msra.mxu0 0.0
    %211 = vmatpush.msra.mxu0 0.0
    %212 = vmatpush.msra.mxu0 0.0
    %213 = vmatpush.msra.mxu0 0.0
    %214 = vmatpush.msra.mxu0 0.0
    %215 = vmatpush.msra.mxu0 0.0
    %216 = vmatpush.msra.mxu0 %v199
    %217 = vmatmul.f32.gmra.mxu0 %v187
    %v218 = vpop.f32.mrf.mxu0
    %v219 = vadd.f32 0.0, %v218
    %220 = vmatmul.f32.gmra.mxu0 %v190
    %v221 = vpop.f32.mrf.mxu0
    %v222 = vadd.f32 0.0, %v221
    %223 = vmatmul.f32.gmra.mxu0 %v193
    %v224 = vpop.f32.mrf.mxu0
    %v225 = vadd.f32 0.0, %v224
    %226 = vmatmul.f32.gmra.mxu0 %v196
    %v227 = vpop.f32.mrf.mxu0
    %v228 = vadd.f32 0.0, %v227
    %229 = vdwg.mxu0
    %v231 = vsel %vm185, %v173, 0
    %v234 = vsel %vm185, %v174, 0
    %v237 = vsel %vm185, %v175, 0
    %v240 = vsel %vm185, %v176, 0
    %v242 = vsel %vm198, %v172, 0
    %244 = vmatpush.msra.mxu0 0.0
    %245 = vmatpush.msra.mxu0 0.0
    %246 = vmatpush.msra.mxu0 0.0
    %247 = vmatpush.msra.mxu0 0.0
    %248 = vmatpush.msra.mxu0 0.0
    %249 = vmatpush.msra.mxu0 0.0
    %250 = vmatpush.msra.mxu0 0.0
    %251 = vmatpush.msra.mxu0 0.0
    %252 = vmatpush.msra.mxu0 0.0
    %253 = vmatpush.msra.mxu0 0.0
    %254 = vmatpush.msra.mxu0 0.0
    %255 = vmatpush.msra.mxu0 0.0
    %256 = vmatpush.msra.mxu0 0.0
    %257 = vmatpush.msra.mxu0 0.0
    %258 = vmatpush.msra.mxu0 0.0
    %259 = vmatpush.msra.mxu0 %v242
    %260 = vmatmul.f32.gmra.mxu0 %v231
    %v261 = vpop.f32.mrf.mxu0
    %v262 = vadd.f32 %v219, %v261
    %263 = vmatmul.f32.gmra.mxu0 %v234
    %v264 = vpop.f32.mrf.mxu0
    %v265 = vadd.f32 %v222, %v264
    %266 = vmatmul.f32.gmra.mxu0 %v237
    %v267 = vpop.f32.mrf.mxu0
    %v268 = vadd.f32 %v225, %v267
    %269 = vmatmul.f32.gmra.mxu0 %v240
    %v270 = vpop.f32.mrf.mxu0
    %v271 = vadd.f32 %v228, %v270
    %272 = vdwg.mxu0
    %s273 = scalar_lea.vmem %s2, 64
    %v274 = vld [vmem:[%s273] sm:$0xff]
    %v275 = vld [vmem:[%s273 + $0x8] sm:$0xff]
    %v276 = vld [vmem:[%s273 + $0x10] sm:$0xff]
    %v277 = vld [vmem:[%s273 + $0x18] sm:$0xff]
    %278 = vrot.lane.b32.xlu0 %v172, 108
    %v279 = vpop.permute.xlu0 %278
    %v281 = vsel %vm185, %v274, 0
    %v284 = vsel %vm185, %v275, 0
    %v287 = vsel %vm185, %v276, 0
    %v290 = vsel %vm185, %v277, 0
    %v292 = vsel %vm198, %v279, 0
    %294 = vmatpush.msra.mxu0 0.0
    %295 = vmatpush.msra.mxu0 0.0
    %296 = vmatpush.msra.mxu0 0.0
    %297 = vmatpush.msra.mxu0 0.0
    %298 = vmatpush.msra.mxu0 0.0
    %299 = vmatpush.msra.mxu0 0.0
    %300 = vmatpush.msra.mxu0 0.0
    %301 = vmatpush.msra.mxu0 0.0
    %302 = vmatpush.msra.mxu0 0.0
    %303 = vmatpush.msra.mxu0 0.0
    %304 = vmatpush.msra.mxu0 0.0
    %305 = vmatpush.msra.mxu0 0.0
    %306 = vmatpush.msra.mxu0 0.0
    %307 = vmatpush.msra.mxu0 0.0
    %308 = vmatpush.msra.mxu0 0.0
    %309 = vmatpush.msra.mxu0 %v292
    %310 = vmatmul.f32.gmra.mxu0 %v281
    %v311 = vpop.f32.mrf.mxu0
    %v312 = vadd.f32 0.0, %v311
    %313 = vmatmul.f32.gmra.mxu0 %v284
    %v314 = vpop.f32.mrf.mxu0
    %v315 = vadd.f32 0.0, %v314
    %316 = vmatmul.f32.gmra.mxu0 %v287
    %v317 = vpop.f32.mrf.mxu0
    %v318 = vadd.f32 0.0, %v317
    %319 = vmatmul.f32.gmra.mxu0 %v290
    %v320 = vpop.f32.mrf.mxu0
    %v321 = vadd.f32 0.0, %v320
    %322 = vdwg.mxu0
    %v323 = vadd.f32 %v262, %v312
    %v324 = vadd.f32 %v265, %v315
    %v325 = vadd.f32 %v268, %v318
    %v326 = vadd.f32 %v271, %v321
    %s327 = scalar_lea.vmem %s2, 96
    %v328 = vld [vmem:[%s327] sm:$0xff]
    %v329 = vld [vmem:[%s327 + $0x8] sm:$0xff]
    %v330 = vld [vmem:[%s327 + $0x10] sm:$0xff]
    %v331 = vld [vmem:[%s327 + $0x18] sm:$0xff]
    %332 = vrot.lane.b32.xlu0 %v172, 98
    %v333 = vpop.permute.xlu0 %332
    %v335 = vsel %vm185, %v328, 0
    %v338 = vsel %vm185, %v329, 0
    %v341 = vsel %vm185, %v330, 0
    %v344 = vsel %vm185, %v331, 0
    %v346 = vsel %vm198, %v333, 0
    %348 = vmatpush.msra.mxu0 0.0
    %349 = vmatpush.msra.mxu0 0.0
    %350 = vmatpush.msra.mxu0 0.0
    %351 = vmatpush.msra.mxu0 0.0
    %352 = vmatpush.msra.mxu0 0.0
    %353 = vmatpush.msra.mxu0 0.0
    %354 = vmatpush.msra.mxu0 0.0
    %355 = vmatpush.msra.mxu0 0.0
    %356 = vmatpush.msra.mxu0 0.0
    %357 = vmatpush.msra.mxu0 0.0
    %358 = vmatpush.msra.mxu0 0.0
    %359 = vmatpush.msra.mxu0 0.0
    %360 = vmatpush.msra.mxu0 0.0
    %361 = vmatpush.msra.mxu0 0.0
    %362 = vmatpush.msra.mxu0 0.0
    %363 = vmatpush.msra.mxu0 %v346
    %364 = vmatmul.f32.gmra.mxu0 %v335
    %v365 = vpop.f32.mrf.mxu0
    %v366 = vadd.f32 0.0, %v365
    %367 = vmatmul.f32.gmra.mxu0 %v338
    %v368 = vpop.f32.mrf.mxu0
    %v369 = vadd.f32 0.0, %v368
    %370 = vmatmul.f32.gmra.mxu0 %v341
    %v371 = vpop.f32.mrf.mxu0
    %v372 = vadd.f32 0.0, %v371
    %373 = vmatmul.f32.gmra.mxu0 %v344
    %v374 = vpop.f32.mrf.mxu0
    %v375 = vadd.f32 0.0, %v374
    %376 = vdwg.mxu0
    %v377 = vadd.f32 %v323, %v366
    %v378 = vadd.f32 %v324, %v369
    %v379 = vadd.f32 %v325, %v372
    %v380 = vadd.f32 %v326, %v375
    %s381 = scalar_lea.vmem %s2, 128
    %v382 = vld [vmem:[%s381] sm:$0xff]
    %v383 = vld [vmem:[%s381 + $0x8] sm:$0xff]
    %v384 = vld [vmem:[%s381 + $0x10] sm:$0xff]
    %v385 = vld [vmem:[%s381 + $0x18] sm:$0xff]
    %386 = vrot.lane.b32.xlu0 %v172, 88
    %v387 = vpop.permute.xlu0 %386
    %v389 = vsel %vm185, %v382, 0
    %v392 = vsel %vm185, %v383, 0
    %v395 = vsel %vm185, %v384, 0
    %v398 = vsel %vm185, %v385, 0
    %v400 = vsel %vm198, %v387, 0
    %402 = vmatpush.msra.mxu0 0.0
    %403 = vmatpush.msra.mxu0 0.0
    %404 = vmatpush.msra.mxu0 0.0
    %405 = vmatpush.msra.mxu0 0.0
    %406 = vmatpush.msra.mxu0 0.0
    %407 = vmatpush.msra.mxu0 0.0
    %408 = vmatpush.msra.mxu0 0.0
    %409 = vmatpush.msra.mxu0 0.0
    %410 = vmatpush.msra.mxu0 0.0
    %411 = vmatpush.msra.mxu0 0.0
    %412 = vmatpush.msra.mxu0 0.0
    %413 = vmatpush.msra.mxu0 0.0
    %414 = vmatpush.msra.mxu0 0.0
    %415 = vmatpush.msra.mxu0 0.0
    %416 = vmatpush.msra.mxu0 0.0
    %417 = vmatpush.msra.mxu0 %v400
    %418 = vmatmul.f32.gmra.mxu0 %v389
    %v419 = vpop.f32.mrf.mxu0
    %v420 = vadd.f32 0.0, %v419
    %421 = vmatmul.f32.gmra.mxu0 %v392
    %v422 = vpop.f32.mrf.mxu0
    %v423 = vadd.f32 0.0, %v422
    %424 = vmatmul.f32.gmra.mxu0 %v395
    %v425 = vpop.f32.mrf.mxu0
    %v426 = vadd.f32 0.0, %v425
    %427 = vmatmul.f32.gmra.mxu0 %v398
    %v428 = vpop.f32.mrf.mxu0
    %v429 = vadd.f32 0.0, %v428
    %430 = vdwg.mxu0
    %v431 = vadd.f32 %v377, %v420
    %v432 = vadd.f32 %v378, %v423
    %v433 = vadd.f32 %v379, %v426
    %v434 = vadd.f32 %v380, %v429
    %v435 = vld [vmem:[%s3] sm:$0xff]
    %v436 = vld [vmem:[%s3 + $0x8] sm:$0xff]
    %v437 = vld [vmem:[%s3 + $0x10] sm:$0xff]
    %v438 = vld [vmem:[%s3 + $0x18] sm:$0xff]
    %440 = vset.pattern.permute.xlu0 0
    %441 = vperm.xlu0 %440, %v435
    %v442 = vpop.permute.xlu0 %441
    %445 = vset.pattern.permute.xlu0 0
    %446 = vperm.xlu0 %445, %v436
    %v447 = vpop.permute.xlu0 %446
    %450 = vset.pattern.permute.xlu0 0
    %451 = vperm.xlu0 %450, %v437
    %v452 = vpop.permute.xlu0 %451
    %455 = vset.pattern.permute.xlu0 0
    %456 = vperm.xlu0 %455, %v438
    %v457 = vpop.permute.xlu0 %456
    %v459 = vadd.f32 %v431, %v442
    %v460 = vadd.f32 %v432, %v447
    %v461 = vadd.f32 %v433, %v452
    %v462 = vadd.f32 %v434, %v457
    %v463 = vmul.f32 %v459, 0.01
    %v464 = vmul.f32 %v460, 0.01
    %v465 = vmul.f32 %v461, 0.01
    %v466 = vmul.f32 %v462, 0.01
    %v467 = vmax.f32 %v459, %v463
    %v468 = vmax.f32 %v460, %v464
    %v469 = vmax.f32 %v461, %v465
    %v470 = vmax.f32 %v462, %v466
    %v471 = vld [vmem:[#allocation2] sm:$0xff]
    %v472 = vld [vmem:[#allocation2 + $0x8] sm:$0xff]
    %v473 = vld [vmem:[#allocation2 + $0x10] sm:$0xff]
    %v474 = vld [vmem:[#allocation2 + $0x18] sm:$0xff]
    %s475 = scalar_lea.vmem [#allocation2], 32
    %v476 = vld [vmem:[%s475] sm:$0xff]
    %v477 = vld [vmem:[%s475 + $0x8] sm:$0xff]
    %v478 = vld [vmem:[%s475 + $0x10] sm:$0xff]
    %v479 = vld [vmem:[%s475 + $0x18] sm:$0xff]
    %484 = vrot.lane.b32.xlu0 %v467, 118
    %v485 = vpop.permute.xlu0 %484
    %486 = vrot.lane.b32.xlu0 %v468, 118
    %v487 = vpop.permute.xlu0 %486
    %488 = vrot.lane.b32.xlu0 %v469, 118
    %v489 = vpop.permute.xlu0 %488
    %490 = vrot.lane.b32.xlu0 %v470, 118
    %v491 = vpop.permute.xlu0 %490
    %vm496 = vcmask 261120
    %v498 = vsel %vm496, %v476, 0
    %v501 = vsel %vm496, %v477, 0
    %v504 = vsel %vm496, %v478, 0
    %v507 = vsel %vm496, %v479, 0
    %509 = vmatpush.msra.mxu0 0.0
    %510 = vmatpush.msra.mxu0 0.0
    %511 = vmatpush.msra.mxu0 0.0
    %512 = vmatpush.msra.mxu0 0.0
    %513 = vmatpush.msra.mxu0 0.0
    %514 = vmatpush.msra.mxu0 0.0
    %515 = vmatpush.msra.mxu0 0.0
    %516 = vmatpush.msra.mxu0 0.0
    %517 = vmatpush.msra.mxu0 0.0
    %518 = vmatpush.msra.mxu0 0.0
    %519 = vmatpush.msra.mxu0 0.0
    %520 = vmatpush.msra.mxu0 0.0
    %521 = vmatpush.msra.mxu0 %v491
    %522 = vmatpush.msra.mxu0 %v489
    %523 = vmatpush.msra.mxu0 %v487
    %524 = vmatpush.msra.mxu0 %v485
    %525 = vmatmul.f32.gmra.mxu0 %v498
    %v526 = vpop.f32.mrf.mxu0
    %v527 = vadd.f32 0.0, %v526
    %528 = vmatmul.f32.gmra.mxu0 %v501
    %v529 = vpop.f32.mrf.mxu0
    %v530 = vadd.f32 0.0, %v529
    %531 = vmatmul.f32.gmra.mxu0 %v504
    %v532 = vpop.f32.mrf.mxu0
    %v533 = vadd.f32 0.0, %v532
    %534 = vmatmul.f32.gmra.mxu0 %v507
    %v535 = vpop.f32.mrf.mxu0
    %v536 = vadd.f32 0.0, %v535
    %537 = vdwg.mxu0
    %v539 = vsel %vm496, %v471, 0
    %v542 = vsel %vm496, %v472, 0
    %v545 = vsel %vm496, %v473, 0
    %v548 = vsel %vm496, %v474, 0
    %550 = vmatpush.msra.mxu0 0.0
    %551 = vmatpush.msra.mxu0 0.0
    %552 = vmatpush.msra.mxu0 0.0
    %553 = vmatpush.msra.mxu0 0.0
    %554 = vmatpush.msra.mxu0 0.0
    %555 = vmatpush.msra.mxu0 0.0
    %556 = vmatpush.msra.mxu0 0.0
    %557 = vmatpush.msra.mxu0 0.0
    %558 = vmatpush.msra.mxu0 0.0
    %559 = vmatpush.msra.mxu0 0.0
    %560 = vmatpush.msra.mxu0 0.0
    %561 = vmatpush.msra.mxu0 0.0
    %562 = vmatpush.msra.mxu0 %v470
    %563 = vmatpush.msra.mxu0 %v469
    %564 = vmatpush.msra.mxu0 %v468
    %565 = vmatpush.msra.mxu0 %v467
    %566 = vmatmul.f32.gmra.mxu0 %v539
    %v567 = vpop.f32.mrf.mxu0
    %v568 = vadd.f32 %v527, %v567
    %569 = vmatmul.f32.gmra.mxu0 %v542
    %v570 = vpop.f32.mrf.mxu0
    %v571 = vadd.f32 %v530, %v570
    %572 = vmatmul.f32.gmra.mxu0 %v545
    %v573 = vpop.f32.mrf.mxu0
    %v574 = vadd.f32 %v533, %v573
    %575 = vmatmul.f32.gmra.mxu0 %v548
    %v576 = vpop.f32.mrf.mxu0
    %v577 = vadd.f32 %v536, %v576
    %578 = vdwg.mxu0
    %s579 = scalar_lea.vmem [#allocation2], 64
    %v580 = vld [vmem:[%s579] sm:$0xff]
    %v581 = vld [vmem:[%s579 + $0x8] sm:$0xff]
    %v582 = vld [vmem:[%s579 + $0x10] sm:$0xff]
    %v583 = vld [vmem:[%s579 + $0x18] sm:$0xff]
    %584 = vrot.lane.b32.xlu0 %v467, 108
    %v585 = vpop.permute.xlu0 %584
    %586 = vrot.lane.b32.xlu0 %v468, 108
    %v587 = vpop.permute.xlu0 %586
    %588 = vrot.lane.b32.xlu0 %v469, 108
    %v589 = vpop.permute.xlu0 %588
    %590 = vrot.lane.b32.xlu0 %v470, 108
    %v591 = vpop.permute.xlu0 %590
    %v597 = vsel %vm496, %v580, 0
    %v600 = vsel %vm496, %v581, 0
    %v603 = vsel %vm496, %v582, 0
    %v606 = vsel %vm496, %v583, 0
    %608 = vmatpush.msra.mxu0 0.0
    %609 = vmatpush.msra.mxu0 0.0
    %610 = vmatpush.msra.mxu0 0.0
    %611 = vmatpush.msra.mxu0 0.0
    %612 = vmatpush.msra.mxu0 0.0
    %613 = vmatpush.msra.mxu0 0.0
    %614 = vmatpush.msra.mxu0 0.0
    %615 = vmatpush.msra.mxu0 0.0
    %616 = vmatpush.msra.mxu0 0.0
    %617 = vmatpush.msra.mxu0 0.0
    %618 = vmatpush.msra.mxu0 0.0
    %619 = vmatpush.msra.mxu0 0.0
    %620 = vmatpush.msra.mxu0 %v591
    %621 = vmatpush.msra.mxu0 %v589
    %622 = vmatpush.msra.mxu0 %v587
    %623 = vmatpush.msra.mxu0 %v585
    %624 = vmatmul.f32.gmra.mxu0 %v597
    %v625 = vpop.f32.mrf.mxu0
    %v626 = vadd.f32 0.0, %v625
    %627 = vmatmul.f32.gmra.mxu0 %v600
    %v628 = vpop.f32.mrf.mxu0
    %v629 = vadd.f32 0.0, %v628
    %630 = vmatmul.f32.gmra.mxu0 %v603
    %v631 = vpop.f32.mrf.mxu0
    %v632 = vadd.f32 0.0, %v631
    %633 = vmatmul.f32.gmra.mxu0 %v606
    %v634 = vpop.f32.mrf.mxu0
    %v635 = vadd.f32 0.0, %v634
    %636 = vdwg.mxu0
    %v637 = vadd.f32 %v568, %v626
    %v638 = vadd.f32 %v571, %v629
    %v639 = vadd.f32 %v574, %v632
    %v640 = vadd.f32 %v577, %v635
    %s641 = scalar_lea.vmem [#allocation2], 96
    %v642 = vld [vmem:[%s641] sm:$0xff]
    %v643 = vld [vmem:[%s641 + $0x8] sm:$0xff]
    %v644 = vld [vmem:[%s641 + $0x10] sm:$0xff]
    %v645 = vld [vmem:[%s641 + $0x18] sm:$0xff]
    %646 = vrot.lane.b32.xlu0 %v467, 98
    %v647 = vpop.permute.xlu0 %646
    %648 = vrot.lane.b32.xlu0 %v468, 98
    %v649 = vpop.permute.xlu0 %648
    %650 = vrot.lane.b32.xlu0 %v469, 98
    %v651 = vpop.permute.xlu0 %650
    %652 = vrot.lane.b32.xlu0 %v470, 98
    %v653 = vpop.permute.xlu0 %652
    %v659 = vsel %vm496, %v642, 0
    %v662 = vsel %vm496, %v643, 0
    %v665 = vsel %vm496, %v644, 0
    %v668 = vsel %vm496, %v645, 0
    %670 = vmatpush.msra.mxu0 0.0
    %671 = vmatpush.msra.mxu0 0.0
    %672 = vmatpush.msra.mxu0 0.0
    %673 = vmatpush.msra.mxu0 0.0
    %674 = vmatpush.msra.mxu0 0.0
    %675 = vmatpush.msra.mxu0 0.0
    %676 = vmatpush.msra.mxu0 0.0
    %677 = vmatpush.msra.mxu0 0.0
    %678 = vmatpush.msra.mxu0 0.0
    %679 = vmatpush.msra.mxu0 0.0
    %680 = vmatpush.msra.mxu0 0.0
    %681 = vmatpush.msra.mxu0 0.0
    %682 = vmatpush.msra.mxu0 %v653
    %683 = vmatpush.msra.mxu0 %v651
    %684 = vmatpush.msra.mxu0 %v649
    %685 = vmatpush.msra.mxu0 %v647
    %686 = vmatmul.f32.gmra.mxu0 %v659
    %v687 = vpop.f32.mrf.mxu0
    %v688 = vadd.f32 0.0, %v687
    %689 = vmatmul.f32.gmra.mxu0 %v662
    %v690 = vpop.f32.mrf.mxu0
    %v691 = vadd.f32 0.0, %v690
    %692 = vmatmul.f32.gmra.mxu0 %v665
    %v693 = vpop.f32.mrf.mxu0
    %v694 = vadd.f32 0.0, %v693
    %695 = vmatmul.f32.gmra.mxu0 %v668
    %v696 = vpop.f32.mrf.mxu0
    %v697 = vadd.f32 0.0, %v696
    %698 = vdwg.mxu0
    %v699 = vadd.f32 %v637, %v688
    %v700 = vadd.f32 %v638, %v691
    %v701 = vadd.f32 %v639, %v694
    %v702 = vadd.f32 %v640, %v697
    %s703 = scalar_lea.vmem [#allocation2], 128
    %v704 = vld [vmem:[%s703] sm:$0xff]
    %v705 = vld [vmem:[%s703 + $0x8] sm:$0xff]
    %v706 = vld [vmem:[%s703 + $0x10] sm:$0xff]
    %v707 = vld [vmem:[%s703 + $0x18] sm:$0xff]
    %708 = vrot.lane.b32.xlu0 %v467, 88
    %v709 = vpop.permute.xlu0 %708
    %710 = vrot.lane.b32.xlu0 %v468, 88
    %v711 = vpop.permute.xlu0 %710
    %712 = vrot.lane.b32.xlu0 %v469, 88
    %v713 = vpop.permute.xlu0 %712
    %714 = vrot.lane.b32.xlu0 %v470, 88
    %v715 = vpop.permute.xlu0 %714
    %v721 = vsel %vm496, %v704, 0
    %v724 = vsel %vm496, %v705, 0
    %v727 = vsel %vm496, %v706, 0
    %v730 = vsel %vm496, %v707, 0
    %732 = vmatpush.msra.mxu0 0.0
    %733 = vmatpush.msra.mxu0 0.0
    %734 = vmatpush.msra.mxu0 0.0
    %735 = vmatpush.msra.mxu0 0.0
    %736 = vmatpush.msra.mxu0 0.0
    %737 = vmatpush.msra.mxu0 0.0
    %738 = vmatpush.msra.mxu0 0.0
    %739 = vmatpush.msra.mxu0 0.0
    %740 = vmatpush.msra.mxu0 0.0
    %741 = vmatpush.msra.mxu0 0.0
    %742 = vmatpush.msra.mxu0 0.0
    %743 = vmatpush.msra.mxu0 0.0
    %744 = vmatpush.msra.mxu0 %v715
    %745 = vmatpush.msra.mxu0 %v713
    %746 = vmatpush.msra.mxu0 %v711
    %747 = vmatpush.msra.mxu0 %v709
    %748 = vmatmul.f32.gmra.mxu0 %v721
    %v749 = vpop.f32.mrf.mxu0
    %v750 = vadd.f32 0.0, %v749
    %751 = vmatmul.f32.gmra.mxu0 %v724
    %v752 = vpop.f32.mrf.mxu0
    %v753 = vadd.f32 0.0, %v752
    %754 = vmatmul.f32.gmra.mxu0 %v727
    %v755 = vpop.f32.mrf.mxu0
    %v756 = vadd.f32 0.0, %v755
    %757 = vmatmul.f32.gmra.mxu0 %v730
    %v758 = vpop.f32.mrf.mxu0
    %v759 = vadd.f32 0.0, %v758
    %760 = vdwg.mxu0
    %v761 = vadd.f32 %v699, %v750
    %v762 = vadd.f32 %v700, %v753
    %v763 = vadd.f32 %v701, %v756
    %v764 = vadd.f32 %v702, %v759
    %v765 = vld [vmem:[%s5] sm:$0xff]
    %v766 = vld [vmem:[%s5 + $0x8] sm:$0xff]
    %v767 = vld [vmem:[%s5 + $0x10] sm:$0xff]
    %v768 = vld [vmem:[%s5 + $0x18] sm:$0xff]
    %770 = vset.pattern.permute.xlu0 0
    %771 = vperm.xlu0 %770, %v765
    %v772 = vpop.permute.xlu0 %771
    %775 = vset.pattern.permute.xlu0 0
    %776 = vperm.xlu0 %775, %v766
    %v777 = vpop.permute.xlu0 %776
    %780 = vset.pattern.permute.xlu0 0
    %781 = vperm.xlu0 %780, %v767
    %v782 = vpop.permute.xlu0 %781
    %785 = vset.pattern.permute.xlu0 0
    %786 = vperm.xlu0 %785, %v768
    %v787 = vpop.permute.xlu0 %786
    %v789 = vadd.f32 %v761, %v772
    %v790 = vadd.f32 %v762, %v777
    %v791 = vadd.f32 %v763, %v782
    %v792 = vadd.f32 %v764, %v787
    %v793 = vmul.f32 %v789, 0.01
    %v794 = vmul.f32 %v790, 0.01
    %v795 = vmul.f32 %v791, 0.01
    %v796 = vmul.f32 %v792, 0.01
    %v797 = vmax.f32 %v789, %v793
    %v798 = vmax.f32 %v790, %v794
    %v799 = vmax.f32 %v791, %v795
    %v800 = vmax.f32 %v792, %v796
    %v801 = vld [vmem:[%s1] sm:$0x1f]
    %v802 = vld [vmem:[%s6] sm:$0xff]
    %v803 = vld [vmem:[%s6 + $0x8] sm:$0xff]
    %v804 = vld [vmem:[%s6 + $0x10] sm:$0xff]
    %v805 = vld [vmem:[%s6 + $0x18] sm:$0xff]
    %s806 = scalar_lea.vmem %s6, 32
    %v807 = vld [vmem:[%s806] sm:$0xff]
    %v808 = vld [vmem:[%s806 + $0x8] sm:$0xff]
    %v809 = vld [vmem:[%s806 + $0x10] sm:$0xff]
    %v810 = vld [vmem:[%s806 + $0x18] sm:$0xff]
    %812 = vrot.lane.b32.xlu0 %v801, 118
    %v813 = vpop.permute.xlu0 %812
    %v815 = vsel %vm185, %v807, 0
    %v818 = vsel %vm185, %v808, 0
    %v821 = vsel %vm185, %v809, 0
    %v824 = vsel %vm185, %v810, 0
    %v826 = vsel %vm198, %v813, 0
    %828 = vmatpush.msra.mxu0 0.0
    %829 = vmatpush.msra.mxu0 0.0
    %830 = vmatpush.msra.mxu0 0.0
    %831 = vmatpush.msra.mxu0 0.0
    %832 = vmatpush.msra.mxu0 0.0
    %833 = vmatpush.msra.mxu0 0.0
    %834 = vmatpush.msra.mxu0 0.0
    %835 = vmatpush.msra.mxu0 0.0
    %836 = vmatpush.msra.mxu0 0.0
    %837 = vmatpush.msra.mxu0 0.0
    %838 = vmatpush.msra.mxu0 0.0
    %839 = vmatpush.msra.mxu0 0.0
    %840 = vmatpush.msra.mxu0 0.0
    %841 = vmatpush.msra.mxu0 0.0
    %842 = vmatpush.msra.mxu0 0.0
    %843 = vmatpush.msra.mxu0 %v826
    %844 = vmatmul.f32.gmra.mxu0 %v815
    %v845 = vpop.f32.mrf.mxu0
    %v846 = vadd.f32 0.0, %v845
    %847 = vmatmul.f32.gmra.mxu0 %v818
    %v848 = vpop.f32.mrf.mxu0
    %v849 = vadd.f32 0.0, %v848
    %850 = vmatmul.f32.gmra.mxu0 %v821
    %v851 = vpop.f32.mrf.mxu0
    %v852 = vadd.f32 0.0, %v851
    %853 = vmatmul.f32.gmra.mxu0 %v824
    %v854 = vpop.f32.mrf.mxu0
    %v855 = vadd.f32 0.0, %v854
    %856 = vdwg.mxu0
    %v858 = vsel %vm185, %v802, 0
    %v861 = vsel %vm185, %v803, 0
    %v864 = vsel %vm185, %v804, 0
    %v867 = vsel %vm185, %v805, 0
    %v869 = vsel %vm198, %v801, 0
    %871 = vmatpush.msra.mxu0 0.0
    %872 = vmatpush.msra.mxu0 0.0
    %873 = vmatpush.msra.mxu0 0.0
    %874 = vmatpush.msra.mxu0 0.0
    %875 = vmatpush.msra.mxu0 0.0
    %876 = vmatpush.msra.mxu0 0.0
    %877 = vmatpush.msra.mxu0 0.0
    %878 = vmatpush.msra.mxu0 0.0
    %879 = vmatpush.msra.mxu0 0.0
    %880 = vmatpush.msra.mxu0 0.0
    %881 = vmatpush.msra.mxu0 0.0
    %882 = vmatpush.msra.mxu0 0.0
    %883 = vmatpush.msra.mxu0 0.0
    %884 = vmatpush.msra.mxu0 0.0
    %885 = vmatpush.msra.mxu0 0.0
    %886 = vmatpush.msra.mxu0 %v869
    %887 = vmatmul.f32.gmra.mxu0 %v858
    %v888 = vpop.f32.mrf.mxu0
    %v889 = vadd.f32 %v846, %v888
    %890 = vmatmul.f32.gmra.mxu0 %v861
    %v891 = vpop.f32.mrf.mxu0
    %v892 = vadd.f32 %v849, %v891
    %893 = vmatmul.f32.gmra.mxu0 %v864
    %v894 = vpop.f32.mrf.mxu0
    %v895 = vadd.f32 %v852, %v894
    %896 = vmatmul.f32.gmra.mxu0 %v867
    %v897 = vpop.f32.mrf.mxu0
    %v898 = vadd.f32 %v855, %v897
    %899 = vdwg.mxu0
    %s900 = scalar_lea.vmem %s6, 64
    %v901 = vld [vmem:[%s900] sm:$0xff]
    %v902 = vld [vmem:[%s900 + $0x8] sm:$0xff]
    %v903 = vld [vmem:[%s900 + $0x10] sm:$0xff]
    %v904 = vld [vmem:[%s900 + $0x18] sm:$0xff]
    %905 = vrot.lane.b32.xlu0 %v801, 108
    %v906 = vpop.permute.xlu0 %905
    %v908 = vsel %vm185, %v901, 0
    %v911 = vsel %vm185, %v902, 0
    %v914 = vsel %vm185, %v903, 0
    %v917 = vsel %vm185, %v904, 0
    %v919 = vsel %vm198, %v906, 0
    %921 = vmatpush.msra.mxu0 0.0
    %922 = vmatpush.msra.mxu0 0.0
    %923 = vmatpush.msra.mxu0 0.0
    %924 = vmatpush.msra.mxu0 0.0
    %925 = vmatpush.msra.mxu0 0.0
    %926 = vmatpush.msra.mxu0 0.0
    %927 = vmatpush.msra.mxu0 0.0
    %928 = vmatpush.msra.mxu0 0.0
    %929 = vmatpush.msra.mxu0 0.0
    %930 = vmatpush.msra.mxu0 0.0
    %931 = vmatpush.msra.mxu0 0.0
    %932 = vmatpush.msra.mxu0 0.0
    %933 = vmatpush.msra.mxu0 0.0
    %934 = vmatpush.msra.mxu0 0.0
    %935 = vmatpush.msra.mxu0 0.0
    %936 = vmatpush.msra.mxu0 %v919
    %937 = vmatmul.f32.gmra.mxu0 %v908
    %v938 = vpop.f32.mrf.mxu0
    %v939 = vadd.f32 0.0, %v938
    %940 = vmatmul.f32.gmra.mxu0 %v911
    %v941 = vpop.f32.mrf.mxu0
    %v942 = vadd.f32 0.0, %v941
    %943 = vmatmul.f32.gmra.mxu0 %v914
    %v944 = vpop.f32.mrf.mxu0
    %v945 = vadd.f32 0.0, %v944
    %946 = vmatmul.f32.gmra.mxu0 %v917
    %v947 = vpop.f32.mrf.mxu0
    %v948 = vadd.f32 0.0, %v947
    %949 = vdwg.mxu0
    %v950 = vadd.f32 %v889, %v939
    %v951 = vadd.f32 %v892, %v942
    %v952 = vadd.f32 %v895, %v945
    %v953 = vadd.f32 %v898, %v948
    %s954 = scalar_lea.vmem %s6, 96
    %v955 = vld [vmem:[%s954] sm:$0xff]
    %v956 = vld [vmem:[%s954 + $0x8] sm:$0xff]
    %v957 = vld [vmem:[%s954 + $0x10] sm:$0xff]
    %v958 = vld [vmem:[%s954 + $0x18] sm:$0xff]
    %959 = vrot.lane.b32.xlu0 %v801, 98
    %v960 = vpop.permute.xlu0 %959
    %v962 = vsel %vm185, %v955, 0
    %v965 = vsel %vm185, %v956, 0
    %v968 = vsel %vm185, %v957, 0
    %v971 = vsel %vm185, %v958, 0
    %v973 = vsel %vm198, %v960, 0
    %975 = vmatpush.msra.mxu0 0.0
    %976 = vmatpush.msra.mxu0 0.0
    %977 = vmatpush.msra.mxu0 0.0
    %978 = vmatpush.msra.mxu0 0.0
    %979 = vmatpush.msra.mxu0 0.0
    %980 = vmatpush.msra.mxu0 0.0
    %981 = vmatpush.msra.mxu0 0.0
    %982 = vmatpush.msra.mxu0 0.0
    %983 = vmatpush.msra.mxu0 0.0
    %984 = vmatpush.msra.mxu0 0.0
    %985 = vmatpush.msra.mxu0 0.0
    %986 = vmatpush.msra.mxu0 0.0
    %987 = vmatpush.msra.mxu0 0.0
    %988 = vmatpush.msra.mxu0 0.0
    %989 = vmatpush.msra.mxu0 0.0
    %990 = vmatpush.msra.mxu0 %v973
    %991 = vmatmul.f32.gmra.mxu0 %v962
    %v992 = vpop.f32.mrf.mxu0
    %v993 = vadd.f32 0.0, %v992
    %994 = vmatmul.f32.gmra.mxu0 %v965
    %v995 = vpop.f32.mrf.mxu0
    %v996 = vadd.f32 0.0, %v995
    %997 = vmatmul.f32.gmra.mxu0 %v968
    %v998 = vpop.f32.mrf.mxu0
    %v999 = vadd.f32 0.0, %v998
    %1000 = vmatmul.f32.gmra.mxu0 %v971
    %v1001 = vpop.f32.mrf.mxu0
    %v1002 = vadd.f32 0.0, %v1001
    %1003 = vdwg.mxu0
    %v1004 = vadd.f32 %v950, %v993
    %v1005 = vadd.f32 %v951, %v996
    %v1006 = vadd.f32 %v952, %v999
    %v1007 = vadd.f32 %v953, %v1002
    %s1008 = scalar_lea.vmem %s6, 128
    %v1009 = vld [vmem:[%s1008] sm:$0xff]
    %v1010 = vld [vmem:[%s1008 + $0x8] sm:$0xff]
    %v1011 = vld [vmem:[%s1008 + $0x10] sm:$0xff]
    %v1012 = vld [vmem:[%s1008 + $0x18] sm:$0xff]
    %1013 = vrot.lane.b32.xlu0 %v801, 88
    %v1014 = vpop.permute.xlu0 %1013
    %v1016 = vsel %vm185, %v1009, 0
    %v1019 = vsel %vm185, %v1010, 0
    %v1022 = vsel %vm185, %v1011, 0
    %v1025 = vsel %vm185, %v1012, 0
    %v1027 = vsel %vm198, %v1014, 0
    %1029 = vmatpush.msra.mxu0 0.0
    %1030 = vmatpush.msra.mxu0 0.0
    %1031 = vmatpush.msra.mxu0 0.0
    %1032 = vmatpush.msra.mxu0 0.0
    %1033 = vmatpush.msra.mxu0 0.0
    %1034 = vmatpush.msra.mxu0 0.0
    %1035 = vmatpush.msra.mxu0 0.0
    %1036 = vmatpush.msra.mxu0 0.0
    %1037 = vmatpush.msra.mxu0 0.0
    %1038 = vmatpush.msra.mxu0 0.0
    %1039 = vmatpush.msra.mxu0 0.0
    %1040 = vmatpush.msra.mxu0 0.0
    %1041 = vmatpush.msra.mxu0 0.0
    %1042 = vmatpush.msra.mxu0 0.0
    %1043 = vmatpush.msra.mxu0 0.0
    %1044 = vmatpush.msra.mxu0 %v1027
    %1045 = vmatmul.f32.gmra.mxu0 %v1016
    %v1046 = vpop.f32.mrf.mxu0
    %v1047 = vadd.f32 0.0, %v1046
    %1048 = vmatmul.f32.gmra.mxu0 %v1019
    %v1049 = vpop.f32.mrf.mxu0
    %v1050 = vadd.f32 0.0, %v1049
    %1051 = vmatmul.f32.gmra.mxu0 %v1022
    %v1052 = vpop.f32.mrf.mxu0
    %v1053 = vadd.f32 0.0, %v1052
    %1054 = vmatmul.f32.gmra.mxu0 %v1025
    %v1055 = vpop.f32.mrf.mxu0
    %v1056 = vadd.f32 0.0, %v1055
    %1057 = vdwg.mxu0
    %v1058 = vadd.f32 %v1004, %v1047
    %v1059 = vadd.f32 %v1005, %v1050
    %v1060 = vadd.f32 %v1006, %v1053
    %v1061 = vadd.f32 %v1007, %v1056
    %v1062 = vld [vmem:[%s7] sm:$0xff]
    %v1063 = vld [vmem:[%s7 + $0x8] sm:$0xff]
    %v1064 = vld [vmem:[%s7 + $0x10] sm:$0xff]
    %v1065 = vld [vmem:[%s7 + $0x18] sm:$0xff]
    %1067 = vset.pattern.permute.xlu0 0
    %1068 = vperm.xlu0 %1067, %v1062
    %v1069 = vpop.permute.xlu0 %1068
    %1072 = vset.pattern.permute.xlu0 0
    %1073 = vperm.xlu0 %1072, %v1063
    %v1074 = vpop.permute.xlu0 %1073
    %1077 = vset.pattern.permute.xlu0 0
    %1078 = vperm.xlu0 %1077, %v1064
    %v1079 = vpop.permute.xlu0 %1078
    %1082 = vset.pattern.permute.xlu0 0
    %1083 = vperm.xlu0 %1082, %v1065
    %v1084 = vpop.permute.xlu0 %1083
    %v1086 = vadd.f32 %v1058, %v1069
    %v1087 = vadd.f32 %v1059, %v1074
    %v1088 = vadd.f32 %v1060, %v1079
    %v1089 = vadd.f32 %v1061, %v1084
    %v1090 = vmul.f32 %v1086, 0.01
    %v1091 = vmul.f32 %v1087, 0.01
    %v1092 = vmul.f32 %v1088, 0.01
    %v1093 = vmul.f32 %v1089, 0.01
    %v1094 = vmax.f32 %v1086, %v1090
    %v1095 = vmax.f32 %v1087, %v1091
    %v1096 = vmax.f32 %v1088, %v1092
    %v1097 = vmax.f32 %v1089, %v1093
    %v1098 = vld [vmem:[#allocation4] sm:$0xff]
    %v1099 = vld [vmem:[#allocation4 + $0x8] sm:$0xff]
    %v1100 = vld [vmem:[#allocation4 + $0x10] sm:$0xff]
    %v1101 = vld [vmem:[#allocation4 + $0x18] sm:$0xff]
    %s1102 = scalar_lea.vmem [#allocation4], 32
    %v1103 = vld [vmem:[%s1102] sm:$0xff]
    %v1104 = vld [vmem:[%s1102 + $0x8] sm:$0xff]
    %v1105 = vld [vmem:[%s1102 + $0x10] sm:$0xff]
    %v1106 = vld [vmem:[%s1102 + $0x18] sm:$0xff]
    %1111 = vrot.lane.b32.xlu0 %v1094, 118
    %v1112 = vpop.permute.xlu0 %1111
    %1113 = vrot.lane.b32.xlu0 %v1095, 118
    %v1114 = vpop.permute.xlu0 %1113
    %1115 = vrot.lane.b32.xlu0 %v1096, 118
    %v1116 = vpop.permute.xlu0 %1115
    %1117 = vrot.lane.b32.xlu0 %v1097, 118
    %v1118 = vpop.permute.xlu0 %1117
    %v1124 = vsel %vm496, %v1103, 0
    %v1127 = vsel %vm496, %v1104, 0
    %v1130 = vsel %vm496, %v1105, 0
    %v1133 = vsel %vm496, %v1106, 0
    %1135 = vmatpush.msra.mxu0 0.0
    %1136 = vmatpush.msra.mxu0 0.0
    %1137 = vmatpush.msra.mxu0 0.0
    %1138 = vmatpush.msra.mxu0 0.0
    %1139 = vmatpush.msra.mxu0 0.0
    %1140 = vmatpush.msra.mxu0 0.0
    %1141 = vmatpush.msra.mxu0 0.0
    %1142 = vmatpush.msra.mxu0 0.0
    %1143 = vmatpush.msra.mxu0 0.0
    %1144 = vmatpush.msra.mxu0 0.0
    %1145 = vmatpush.msra.mxu0 0.0
    %1146 = vmatpush.msra.mxu0 0.0
    %1147 = vmatpush.msra.mxu0 %v1118
    %1148 = vmatpush.msra.mxu0 %v1116
    %1149 = vmatpush.msra.mxu0 %v1114
    %1150 = vmatpush.msra.mxu0 %v1112
    %1151 = vmatmul.f32.gmra.mxu0 %v1124
    %v1152 = vpop.f32.mrf.mxu0
    %v1153 = vadd.f32 0.0, %v1152
    %1154 = vmatmul.f32.gmra.mxu0 %v1127
    %v1155 = vpop.f32.mrf.mxu0
    %v1156 = vadd.f32 0.0, %v1155
    %1157 = vmatmul.f32.gmra.mxu0 %v1130
    %v1158 = vpop.f32.mrf.mxu0
    %v1159 = vadd.f32 0.0, %v1158
    %1160 = vmatmul.f32.gmra.mxu0 %v1133
    %v1161 = vpop.f32.mrf.mxu0
    %v1162 = vadd.f32 0.0, %v1161
    %1163 = vdwg.mxu0
    %v1165 = vsel %vm496, %v1098, 0
    %v1168 = vsel %vm496, %v1099, 0
    %v1171 = vsel %vm496, %v1100, 0
    %v1174 = vsel %vm496, %v1101, 0
    %1176 = vmatpush.msra.mxu0 0.0
    %1177 = vmatpush.msra.mxu0 0.0
    %1178 = vmatpush.msra.mxu0 0.0
    %1179 = vmatpush.msra.mxu0 0.0
    %1180 = vmatpush.msra.mxu0 0.0
    %1181 = vmatpush.msra.mxu0 0.0
    %1182 = vmatpush.msra.mxu0 0.0
    %1183 = vmatpush.msra.mxu0 0.0
    %1184 = vmatpush.msra.mxu0 0.0
    %1185 = vmatpush.msra.mxu0 0.0
    %1186 = vmatpush.msra.mxu0 0.0
    %1187 = vmatpush.msra.mxu0 0.0
    %1188 = vmatpush.msra.mxu0 %v1097
    %1189 = vmatpush.msra.mxu0 %v1096
    %1190 = vmatpush.msra.mxu0 %v1095
    %1191 = vmatpush.msra.mxu0 %v1094
    %1192 = vmatmul.f32.gmra.mxu0 %v1165
    %v1193 = vpop.f32.mrf.mxu0
    %v1194 = vadd.f32 %v1153, %v1193
    %1195 = vmatmul.f32.gmra.mxu0 %v1168
    %v1196 = vpop.f32.mrf.mxu0
    %v1197 = vadd.f32 %v1156, %v1196
    %1198 = vmatmul.f32.gmra.mxu0 %v1171
    %v1199 = vpop.f32.mrf.mxu0
    %v1200 = vadd.f32 %v1159, %v1199
    %1201 = vmatmul.f32.gmra.mxu0 %v1174
    %v1202 = vpop.f32.mrf.mxu0
    %v1203 = vadd.f32 %v1162, %v1202
    %1204 = vdwg.mxu0
    %s1205 = scalar_lea.vmem [#allocation4], 64
    %v1206 = vld [vmem:[%s1205] sm:$0xff]
    %v1207 = vld [vmem:[%s1205 + $0x8] sm:$0xff]
    %v1208 = vld [vmem:[%s1205 + $0x10] sm:$0xff]
    %v1209 = vld [vmem:[%s1205 + $0x18] sm:$0xff]
    %1210 = vrot.lane.b32.xlu0 %v1094, 108
    %v1211 = vpop.permute.xlu0 %1210
    %1212 = vrot.lane.b32.xlu0 %v1095, 108
    %v1213 = vpop.permute.xlu0 %1212
    %1214 = vrot.lane.b32.xlu0 %v1096, 108
    %v1215 = vpop.permute.xlu0 %1214
    %1216 = vrot.lane.b32.xlu0 %v1097, 108
    %v1217 = vpop.permute.xlu0 %1216
    %v1223 = vsel %vm496, %v1206, 0
    %v1226 = vsel %vm496, %v1207, 0
    %v1229 = vsel %vm496, %v1208, 0
    %v1232 = vsel %vm496, %v1209, 0
    %1234 = vmatpush.msra.mxu0 0.0
    %1235 = vmatpush.msra.mxu0 0.0
    %1236 = vmatpush.msra.mxu0 0.0
    %1237 = vmatpush.msra.mxu0 0.0
    %1238 = vmatpush.msra.mxu0 0.0
    %1239 = vmatpush.msra.mxu0 0.0
    %1240 = vmatpush.msra.mxu0 0.0
    %1241 = vmatpush.msra.mxu0 0.0
    %1242 = vmatpush.msra.mxu0 0.0
    %1243 = vmatpush.msra.mxu0 0.0
    %1244 = vmatpush.msra.mxu0 0.0
    %1245 = vmatpush.msra.mxu0 0.0
    %1246 = vmatpush.msra.mxu0 %v1217
    %1247 = vmatpush.msra.mxu0 %v1215
    %1248 = vmatpush.msra.mxu0 %v1213
    %1249 = vmatpush.msra.mxu0 %v1211
    %1250 = vmatmul.f32.gmra.mxu0 %v1223
    %v1251 = vpop.f32.mrf.mxu0
    %v1252 = vadd.f32 0.0, %v1251
    %1253 = vmatmul.f32.gmra.mxu0 %v1226
    %v1254 = vpop.f32.mrf.mxu0
    %v1255 = vadd.f32 0.0, %v1254
    %1256 = vmatmul.f32.gmra.mxu0 %v1229
    %v1257 = vpop.f32.mrf.mxu0
    %v1258 = vadd.f32 0.0, %v1257
    %1259 = vmatmul.f32.gmra.mxu0 %v1232
    %v1260 = vpop.f32.mrf.mxu0
    %v1261 = vadd.f32 0.0, %v1260
    %1262 = vdwg.mxu0
    %v1263 = vadd.f32 %v1194, %v1252
    %v1264 = vadd.f32 %v1197, %v1255
    %v1265 = vadd.f32 %v1200, %v1258
    %v1266 = vadd.f32 %v1203, %v1261
    %s1267 = scalar_lea.vmem [#allocation4], 96
    %v1268 = vld [vmem:[%s1267] sm:$0xff]
    %v1269 = vld [vmem:[%s1267 + $0x8] sm:$0xff]
    %v1270 = vld [vmem:[%s1267 + $0x10] sm:$0xff]
    %v1271 = vld [vmem:[%s1267 + $0x18] sm:$0xff]
    %1272 = vrot.lane.b32.xlu0 %v1094, 98
    %v1273 = vpop.permute.xlu0 %1272
    %1274 = vrot.lane.b32.xlu0 %v1095, 98
    %v1275 = vpop.permute.xlu0 %1274
    %1276 = vrot.lane.b32.xlu0 %v1096, 98
    %v1277 = vpop.permute.xlu0 %1276
    %1278 = vrot.lane.b32.xlu0 %v1097, 98
    %v1279 = vpop.permute.xlu0 %1278
    %v1285 = vsel %vm496, %v1268, 0
    %v1288 = vsel %vm496, %v1269, 0
    %v1291 = vsel %vm496, %v1270, 0
    %v1294 = vsel %vm496, %v1271, 0
    %1296 = vmatpush.msra.mxu0 0.0
    %1297 = vmatpush.msra.mxu0 0.0
    %1298 = vmatpush.msra.mxu0 0.0
    %1299 = vmatpush.msra.mxu0 0.0
    %1300 = vmatpush.msra.mxu0 0.0
    %1301 = vmatpush.msra.mxu0 0.0
    %1302 = vmatpush.msra.mxu0 0.0
    %1303 = vmatpush.msra.mxu0 0.0
    %1304 = vmatpush.msra.mxu0 0.0
    %1305 = vmatpush.msra.mxu0 0.0
    %1306 = vmatpush.msra.mxu0 0.0
    %1307 = vmatpush.msra.mxu0 0.0
    %1308 = vmatpush.msra.mxu0 %v1279
    %1309 = vmatpush.msra.mxu0 %v1277
    %1310 = vmatpush.msra.mxu0 %v1275
    %1311 = vmatpush.msra.mxu0 %v1273
    %1312 = vmatmul.f32.gmra.mxu0 %v1285
    %v1313 = vpop.f32.mrf.mxu0
    %v1314 = vadd.f32 0.0, %v1313
    %1315 = vmatmul.f32.gmra.mxu0 %v1288
    %v1316 = vpop.f32.mrf.mxu0
    %v1317 = vadd.f32 0.0, %v1316
    %1318 = vmatmul.f32.gmra.mxu0 %v1291
    %v1319 = vpop.f32.mrf.mxu0
    %v1320 = vadd.f32 0.0, %v1319
    %1321 = vmatmul.f32.gmra.mxu0 %v1294
    %v1322 = vpop.f32.mrf.mxu0
    %v1323 = vadd.f32 0.0, %v1322
    %1324 = vdwg.mxu0
    %v1325 = vadd.f32 %v1263, %v1314
    %v1326 = vadd.f32 %v1264, %v1317
    %v1327 = vadd.f32 %v1265, %v1320
    %v1328 = vadd.f32 %v1266, %v1323
    %s1329 = scalar_lea.vmem [#allocation4], 128
    %v1330 = vld [vmem:[%s1329] sm:$0xff]
    %v1331 = vld [vmem:[%s1329 + $0x8] sm:$0xff]
    %v1332 = vld [vmem:[%s1329 + $0x10] sm:$0xff]
    %v1333 = vld [vmem:[%s1329 + $0x18] sm:$0xff]
    %1334 = vrot.lane.b32.xlu0 %v1094, 88
    %v1335 = vpop.permute.xlu0 %1334
    %1336 = vrot.lane.b32.xlu0 %v1095, 88
    %v1337 = vpop.permute.xlu0 %1336
    %1338 = vrot.lane.b32.xlu0 %v1096, 88
    %v1339 = vpop.permute.xlu0 %1338
    %1340 = vrot.lane.b32.xlu0 %v1097, 88
    %v1341 = vpop.permute.xlu0 %1340
    %v1347 = vsel %vm496, %v1330, 0
    %v1350 = vsel %vm496, %v1331, 0
    %v1353 = vsel %vm496, %v1332, 0
    %v1356 = vsel %vm496, %v1333, 0
    %1358 = vmatpush.msra.mxu0 0.0
    %1359 = vmatpush.msra.mxu0 0.0
    %1360 = vmatpush.msra.mxu0 0.0
    %1361 = vmatpush.msra.mxu0 0.0
    %1362 = vmatpush.msra.mxu0 0.0
    %1363 = vmatpush.msra.mxu0 0.0
    %1364 = vmatpush.msra.mxu0 0.0
    %1365 = vmatpush.msra.mxu0 0.0
    %1366 = vmatpush.msra.mxu0 0.0
    %1367 = vmatpush.msra.mxu0 0.0
    %1368 = vmatpush.msra.mxu0 0.0
    %1369 = vmatpush.msra.mxu0 0.0
    %1370 = vmatpush.msra.mxu0 %v1341
    %1371 = vmatpush.msra.mxu0 %v1339
    %1372 = vmatpush.msra.mxu0 %v1337
    %1373 = vmatpush.msra.mxu0 %v1335
    %1374 = vmatmul.f32.gmra.mxu0 %v1347
    %v1375 = vpop.f32.mrf.mxu0
    %v1376 = vadd.f32 0.0, %v1375
    %1377 = vmatmul.f32.gmra.mxu0 %v1350
    %v1378 = vpop.f32.mrf.mxu0
    %v1379 = vadd.f32 0.0, %v1378
    %1380 = vmatmul.f32.gmra.mxu0 %v1353
    %v1381 = vpop.f32.mrf.mxu0
    %v1382 = vadd.f32 0.0, %v1381
    %1383 = vmatmul.f32.gmra.mxu0 %v1356
    %v1384 = vpop.f32.mrf.mxu0
    %v1385 = vadd.f32 0.0, %v1384
    %1386 = vdwg.mxu0
    %v1387 = vadd.f32 %v1325, %v1376
    %v1388 = vadd.f32 %v1326, %v1379
    %v1389 = vadd.f32 %v1327, %v1382
    %v1390 = vadd.f32 %v1328, %v1385
    %v1391 = vld [vmem:[%s9] sm:$0xff]
    %v1392 = vld [vmem:[%s9 + $0x8] sm:$0xff]
    %v1393 = vld [vmem:[%s9 + $0x10] sm:$0xff]
    %v1394 = vld [vmem:[%s9 + $0x18] sm:$0xff]
    %1396 = vset.pattern.permute.xlu0 0
    %1397 = vperm.xlu0 %1396, %v1391
    %v1398 = vpop.permute.xlu0 %1397
    %1401 = vset.pattern.permute.xlu0 0
    %1402 = vperm.xlu0 %1401, %v1392
    %v1403 = vpop.permute.xlu0 %1402
    %1406 = vset.pattern.permute.xlu0 0
    %1407 = vperm.xlu0 %1406, %v1393
    %v1408 = vpop.permute.xlu0 %1407
    %1411 = vset.pattern.permute.xlu0 0
    %1412 = vperm.xlu0 %1411, %v1394
    %v1413 = vpop.permute.xlu0 %1412
    %v1415 = vadd.f32 %v1387, %v1398
    %v1416 = vadd.f32 %v1388, %v1403
    %v1417 = vadd.f32 %v1389, %v1408
    %v1418 = vadd.f32 %v1390, %v1413
    %v1419 = vmul.f32 %v1415, 0.01
    %v1420 = vmul.f32 %v1416, 0.01
    %v1421 = vmul.f32 %v1417, 0.01
    %v1422 = vmul.f32 %v1418, 0.01
    %v1423 = vmax.f32 %v1415, %v1419
    %v1424 = vmax.f32 %v1416, %v1420
    %v1425 = vmax.f32 %v1417, %v1421
    %v1426 = vmax.f32 %v1418, %v1422
    %1431 = vrot.lane.b32.xlu0 %v1423, 20
    %v1432 = vpop.permute.xlu0 %1431
    %1433 = vrot.lane.b32.xlu0 %v1424, 20
    %v1434 = vpop.permute.xlu0 %1433
    %1435 = vrot.lane.b32.xlu0 %v1425, 20
    %v1436 = vpop.permute.xlu0 %1435
    %1437 = vrot.lane.b32.xlu0 %v1426, 20
    %v1438 = vpop.permute.xlu0 %1437
    %vm1443 = vcmask 162816
    %v1444 = vsel %vm1443, %v797, %v1432
    %v1445 = vsel %vm1443, %v798, %v1434
    %v1446 = vsel %vm1443, %v799, %v1436
    %v1447 = vsel %vm1443, %v800, %v1438
    %v1449 = vrot.slane %v1444, 1
    %1450 = vrot.lane.b32.xlu0 %v1449, 40
    %v1451 = vpop.permute.xlu0 %1450
    %v1453 = vrot.slane %v1444, 2
    %1454 = vrot.lane.b32.xlu0 %v1453, 80
    %v1455 = vpop.permute.xlu0 %1454
    %v1457 = vrot.slane %v1444, 3
    %1458 = vrot.lane.b32.xlu0 %v1457, 120
    %v1459 = vpop.permute.xlu0 %1458
    %v1461 = vrot.slane %v1444, 4
    %1462 = vrot.lane.b32.xlu0 %v1461, 32
    %v1463 = vpop.permute.xlu0 %1462
    %v1465 = vrot.slane %v1444, 5
    %1466 = vrot.lane.b32.xlu0 %v1465, 72
    %v1467 = vpop.permute.xlu0 %1466
    %v1469 = vrot.slane %v1444, 6
    %1470 = vrot.lane.b32.xlu0 %v1469, 112
    %v1471 = vpop.permute.xlu0 %1470
    %v1473 = vrot.slane %v1444, 7
    %1474 = vrot.lane.b32.xlu0 %v1473, 24
    %v1475 = vpop.permute.xlu0 %1474
    %1478 = vrot.lane.b32.xlu0 %v1445, 64
    %v1479 = vpop.permute.xlu0 %1478
    %v1481 = vrot.slane %v1445, 1
    %1482 = vrot.lane.b32.xlu0 %v1481, 104
    %v1483 = vpop.permute.xlu0 %1482
    %v1485 = vrot.slane %v1445, 2
    %1486 = vrot.lane.b32.xlu0 %v1485, 16
    %v1487 = vpop.permute.xlu0 %1486
    %v1489 = vrot.slane %v1445, 3
    %1490 = vrot.lane.b32.xlu0 %v1489, 56
    %v1491 = vpop.permute.xlu0 %1490
    %v1493 = vrot.slane %v1445, 4
    %1494 = vrot.lane.b32.xlu0 %v1493, 96
    %v1495 = vpop.permute.xlu0 %1494
    %v1497 = vrot.slane %v1445, 5
    %1498 = vrot.lane.b32.xlu0 %v1497, 8
    %v1499 = vpop.permute.xlu0 %1498
    %v1501 = vrot.slane %v1445, 6
    %1502 = vrot.lane.b32.xlu0 %v1501, 48
    %v1503 = vpop.permute.xlu0 %1502
    %v1505 = vrot.slane %v1445, 7
    %1506 = vrot.lane.b32.xlu0 %v1505, 88
    %v1507 = vpop.permute.xlu0 %1506
    %vm1509 = vcmask 326656
    %v1510 = vsel %vm1509, %v1444, %v1451
    %vm1511 = vcmask 654336
    %v1512 = vsel %vm1511, %v1510, %v1455
    %vm1513 = vcmask 982016
    %v1514 = vsel %vm1513, %v1512, %v1459
    %v1515 = vsel %vm496, %v1459, %v1463
    %vm1516 = vcmask 588800
    %v1517 = vsel %vm1516, %v1515, %v1467
    %vm1518 = vcmask 916480
    %v1519 = vsel %vm1518, %v1517, %v1471
    %vm1520 = vcmask 195584
    %v1521 = vsel %vm1520, %v1471, %v1475
    %vm1522 = vcmask 523264
    %v1523 = vsel %vm1522, %v1521, %v1479
    %vm1524 = vcmask 850944
    %v1525 = vsel %vm1524, %v1523, %v1483
    %vm1526 = vcmask 130048
    %v1527 = vsel %vm1526, %v1483, %v1487
    %vm1528 = vcmask 457728
    %v1529 = vsel %vm1528, %v1527, %v1491
    %vm1530 = vcmask 785408
    %v1531 = vsel %vm1530, %v1529, %v1495
    %vm1532 = vcmask 64512
    %v1533 = vsel %vm1532, %v1495, %v1499
    %vm1534 = vcmask 392192
    %v1535 = vsel %vm1534, %v1533, %v1503
    %vm1536 = vcmask 719872
    %v1537 = vsel %vm1536, %v1535, %v1507
    %v1539 = vrot.slane %v1446, 1
    %1540 = vrot.lane.b32.xlu0 %v1539, 40
    %v1541 = vpop.permute.xlu0 %1540
    %v1543 = vrot.slane %v1446, 2
    %1544 = vrot.lane.b32.xlu0 %v1543, 80
    %v1545 = vpop.permute.xlu0 %1544
    %v1547 = vrot.slane %v1446, 3
    %1548 = vrot.lane.b32.xlu0 %v1547, 120
    %v1549 = vpop.permute.xlu0 %1548
    %v1551 = vrot.slane %v1446, 4
    %1552 = vrot.lane.b32.xlu0 %v1551, 32
    %v1553 = vpop.permute.xlu0 %1552
    %v1555 = vrot.slane %v1446, 5
    %1556 = vrot.lane.b32.xlu0 %v1555, 72
    %v1557 = vpop.permute.xlu0 %1556
    %v1559 = vrot.slane %v1446, 6
    %1560 = vrot.lane.b32.xlu0 %v1559, 112
    %v1561 = vpop.permute.xlu0 %1560
    %v1563 = vrot.slane %v1446, 7
    %1564 = vrot.lane.b32.xlu0 %v1563, 24
    %v1565 = vpop.permute.xlu0 %1564
    %1568 = vrot.lane.b32.xlu0 %v1447, 64
    %v1569 = vpop.permute.xlu0 %1568
    %v1571 = vrot.slane %v1447, 1
    %1572 = vrot.lane.b32.xlu0 %v1571, 104
    %v1573 = vpop.permute.xlu0 %1572
    %v1575 = vrot.slane %v1447, 2
    %1576 = vrot.lane.b32.xlu0 %v1575, 16
    %v1577 = vpop.permute.xlu0 %1576
    %v1579 = vrot.slane %v1447, 3
    %1580 = vrot.lane.b32.xlu0 %v1579, 56
    %v1581 = vpop.permute.xlu0 %1580
    %v1583 = vrot.slane %v1447, 4
    %1584 = vrot.lane.b32.xlu0 %v1583, 96
    %v1585 = vpop.permute.xlu0 %1584
    %v1587 = vrot.slane %v1447, 5
    %1588 = vrot.lane.b32.xlu0 %v1587, 8
    %v1589 = vpop.permute.xlu0 %1588
    %v1591 = vrot.slane %v1447, 6
    %1592 = vrot.lane.b32.xlu0 %v1591, 48
    %v1593 = vpop.permute.xlu0 %1592
    %v1595 = vrot.slane %v1447, 7
    %1596 = vrot.lane.b32.xlu0 %v1595, 88
    %v1597 = vpop.permute.xlu0 %1596
    %v1599 = vsel %vm1509, %v1446, %v1541
    %v1600 = vsel %vm1511, %v1599, %v1545
    %v1601 = vsel %vm1513, %v1600, %v1549
    %v1602 = vsel %vm496, %v1549, %v1553
    %v1603 = vsel %vm1516, %v1602, %v1557
    %v1604 = vsel %vm1518, %v1603, %v1561
    %v1605 = vsel %vm1520, %v1561, %v1565
    %v1606 = vsel %vm1522, %v1605, %v1569
    %v1607 = vsel %vm1524, %v1606, %v1573
    %v1608 = vsel %vm1526, %v1573, %v1577
    %v1609 = vsel %vm1528, %v1608, %v1581
    %v1610 = vsel %vm1530, %v1609, %v1585
    %v1611 = vsel %vm1532, %v1585, %v1589
    %v1612 = vsel %vm1534, %v1611, %v1593
    %v1613 = vsel %vm1536, %v1612, %v1597
    %s1614 = scalar_lea.vmem %s0, 8
    %v1615 = vld [vmem:[%s1614] sm:$0x1f]
    %1617 = vrot.lane.b32.xlu0 %v1615, 118
    %v1618 = vpop.permute.xlu0 %1617
    %v1619 = vsel %vm198, %v1618, 0
    %1621 = vmatpush.msra.mxu0 0.0
    %1622 = vmatpush.msra.mxu0 0.0
    %1623 = vmatpush.msra.mxu0 0.0
    %1624 = vmatpush.msra.mxu0 0.0
    %1625 = vmatpush.msra.mxu0 0.0
    %1626 = vmatpush.msra.mxu0 0.0
    %1627 = vmatpush.msra.mxu0 0.0
    %1628 = vmatpush.msra.mxu0 0.0
    %1629 = vmatpush.msra.mxu0 0.0
    %1630 = vmatpush.msra.mxu0 0.0
    %1631 = vmatpush.msra.mxu0 0.0
    %1632 = vmatpush.msra.mxu0 0.0
    %1633 = vmatpush.msra.mxu0 0.0
    %1634 = vmatpush.msra.mxu0 0.0
    %1635 = vmatpush.msra.mxu0 0.0
    %1636 = vmatpush.msra.mxu0 %v1619
    %1637 = vmatmul.f32.gmra.mxu0 %v187
    %v1638 = vpop.f32.mrf.mxu0
    %v1639 = vadd.f32 0.0, %v1638
    %1640 = vmatmul.f32.gmra.mxu0 %v190
    %v1641 = vpop.f32.mrf.mxu0
    %v1642 = vadd.f32 0.0, %v1641
    %1643 = vmatmul.f32.gmra.mxu0 %v193
    %v1644 = vpop.f32.mrf.mxu0
    %v1645 = vadd.f32 0.0, %v1644
    %1646 = vmatmul.f32.gmra.mxu0 %v196
    %v1647 = vpop.f32.mrf.mxu0
    %v1648 = vadd.f32 0.0, %v1647
    %1649 = vdwg.mxu0
    %v1650 = vsel %vm198, %v1615, 0
    %1652 = vmatpush.msra.mxu0 0.0
    %1653 = vmatpush.msra.mxu0 0.0
    %1654 = vmatpush.msra.mxu0 0.0
    %1655 = vmatpush.msra.mxu0 0.0
    %1656 = vmatpush.msra.mxu0 0.0
    %1657 = vmatpush.msra.mxu0 0.0
    %1658 = vmatpush.msra.mxu0 0.0
    %1659 = vmatpush.msra.mxu0 0.0
    %1660 = vmatpush.msra.mxu0 0.0
    %1661 = vmatpush.msra.mxu0 0.0
    %1662 = vmatpush.msra.mxu0 0.0
    %1663 = vmatpush.msra.mxu0 0.0
    %1664 = vmatpush.msra.mxu0 0.0
    %1665 = vmatpush.msra.mxu0 0.0
    %1666 = vmatpush.msra.mxu0 0.0
    %1667 = vmatpush.msra.mxu0 %v1650
    %1668 = vmatmul.f32.gmra.mxu0 %v231
    %v1669 = vpop.f32.mrf.mxu0
    %v1670 = vadd.f32 %v1639, %v1669
    %1671 = vmatmul.f32.gmra.mxu0 %v234
    %v1672 = vpop.f32.mrf.mxu0
    %v1673 = vadd.f32 %v1642, %v1672
    %1674 = vmatmul.f32.gmra.mxu0 %v237
    %v1675 = vpop.f32.mrf.mxu0
    %v1676 = vadd.f32 %v1645, %v1675
    %1677 = vmatmul.f32.gmra.mxu0 %v240
    %v1678 = vpop.f32.mrf.mxu0
    %v1679 = vadd.f32 %v1648, %v1678
    %1680 = vdwg.mxu0
    %1681 = vrot.lane.b32.xlu0 %v1615, 108
    %v1682 = vpop.permute.xlu0 %1681
    %v1683 = vsel %vm198, %v1682, 0
    %1685 = vmatpush.msra.mxu0 0.0
    %1686 = vmatpush.msra.mxu0 0.0
    %1687 = vmatpush.msra.mxu0 0.0
    %1688 = vmatpush.msra.mxu0 0.0
    %1689 = vmatpush.msra.mxu0 0.0
    %1690 = vmatpush.msra.mxu0 0.0
    %1691 = vmatpush.msra.mxu0 0.0
    %1692 = vmatpush.msra.mxu0 0.0
    %1693 = vmatpush.msra.mxu0 0.0
    %1694 = vmatpush.msra.mxu0 0.0
    %1695 = vmatpush.msra.mxu0 0.0
    %1696 = vmatpush.msra.mxu0 0.0
    %1697 = vmatpush.msra.mxu0 0.0
    %1698 = vmatpush.msra.mxu0 0.0
    %1699 = vmatpush.msra.mxu0 0.0
    %1700 = vmatpush.msra.mxu0 %v1683
    %1701 = vmatmul.f32.gmra.mxu0 %v281
    %v1702 = vpop.f32.mrf.mxu0
    %v1703 = vadd.f32 0.0, %v1702
    %1704 = vmatmul.f32.gmra.mxu0 %v284
    %v1705 = vpop.f32.mrf.mxu0
    %v1706 = vadd.f32 0.0, %v1705
    %1707 = vmatmul.f32.gmra.mxu0 %v287
    %v1708 = vpop.f32.mrf.mxu0
    %v1709 = vadd.f32 0.0, %v1708
    %1710 = vmatmul.f32.gmra.mxu0 %v290
    %v1711 = vpop.f32.mrf.mxu0
    %v1712 = vadd.f32 0.0, %v1711
    %1713 = vdwg.mxu0
    %v1714 = vadd.f32 %v1670, %v1703
    %v1715 = vadd.f32 %v1673, %v1706
    %v1716 = vadd.f32 %v1676, %v1709
    %v1717 = vadd.f32 %v1679, %v1712
    %1718 = vrot.lane.b32.xlu0 %v1615, 98
    %v1719 = vpop.permute.xlu0 %1718
    %v1720 = vsel %vm198, %v1719, 0
    %1722 = vmatpush.msra.mxu0 0.0
    %1723 = vmatpush.msra.mxu0 0.0
    %1724 = vmatpush.msra.mxu0 0.0
    %1725 = vmatpush.msra.mxu0 0.0
    %1726 = vmatpush.msra.mxu0 0.0
    %1727 = vmatpush.msra.mxu0 0.0
    %1728 = vmatpush.msra.mxu0 0.0
    %1729 = vmatpush.msra.mxu0 0.0
    %1730 = vmatpush.msra.mxu0 0.0
    %1731 = vmatpush.msra.mxu0 0.0
    %1732 = vmatpush.msra.mxu0 0.0
    %1733 = vmatpush.msra.mxu0 0.0
    %1734 = vmatpush.msra.mxu0 0.0
    %1735 = vmatpush.msra.mxu0 0.0
    %1736 = vmatpush.msra.mxu0 0.0
    %1737 = vmatpush.msra.mxu0 %v1720
    %1738 = vmatmul.f32.gmra.mxu0 %v335
    %v1739 = vpop.f32.mrf.mxu0
    %v1740 = vadd.f32 0.0, %v1739
    %1741 = vmatmul.f32.gmra.mxu0 %v338
    %v1742 = vpop.f32.mrf.mxu0
    %v1743 = vadd.f32 0.0, %v1742
    %1744 = vmatmul.f32.gmra.mxu0 %v341
    %v1745 = vpop.f32.mrf.mxu0
    %v1746 = vadd.f32 0.0, %v1745
    %1747 = vmatmul.f32.gmra.mxu0 %v344
    %v1748 = vpop.f32.mrf.mxu0
    %v1749 = vadd.f32 0.0, %v1748
    %1750 = vdwg.mxu0
    %v1751 = vadd.f32 %v1714, %v1740
    %v1752 = vadd.f32 %v1715, %v1743
    %v1753 = vadd.f32 %v1716, %v1746
    %v1754 = vadd.f32 %v1717, %v1749
    %1755 = vrot.lane.b32.xlu0 %v1615, 88
    %v1756 = vpop.permute.xlu0 %1755
    %v1757 = vsel %vm198, %v1756, 0
    %1759 = vmatpush.msra.mxu0 0.0
    %1760 = vmatpush.msra.mxu0 0.0
    %1761 = vmatpush.msra.mxu0 0.0
    %1762 = vmatpush.msra.mxu0 0.0
    %1763 = vmatpush.msra.mxu0 0.0
    %1764 = vmatpush.msra.mxu0 0.0
    %1765 = vmatpush.msra.mxu0 0.0
    %1766 = vmatpush.msra.mxu0 0.0
    %1767 = vmatpush.msra.mxu0 0.0
    %1768 = vmatpush.msra.mxu0 0.0
    %1769 = vmatpush.msra.mxu0 0.0
    %1770 = vmatpush.msra.mxu0 0.0
    %1771 = vmatpush.msra.mxu0 0.0
    %1772 = vmatpush.msra.mxu0 0.0
    %1773 = vmatpush.msra.mxu0 0.0
    %1774 = vmatpush.msra.mxu0 %v1757
    %1775 = vmatmul.f32.gmra.mxu0 %v389
    %v1776 = vpop.f32.mrf.mxu0
    %v1777 = vadd.f32 0.0, %v1776
    %1778 = vmatmul.f32.gmra.mxu0 %v392
    %v1779 = vpop.f32.mrf.mxu0
    %v1780 = vadd.f32 0.0, %v1779
    %1781 = vmatmul.f32.gmra.mxu0 %v395
    %v1782 = vpop.f32.mrf.mxu0
    %v1783 = vadd.f32 0.0, %v1782
    %1784 = vmatmul.f32.gmra.mxu0 %v398
    %v1785 = vpop.f32.mrf.mxu0
    %v1786 = vadd.f32 0.0, %v1785
    %1787 = vdwg.mxu0
    %v1788 = vadd.f32 %v1751, %v1777
    %v1789 = vadd.f32 %v1752, %v1780
    %v1790 = vadd.f32 %v1753, %v1783
    %v1791 = vadd.f32 %v1754, %v1786
    %v1792 = vadd.f32 %v1788, %v442
    %v1793 = vadd.f32 %v1789, %v447
    %v1794 = vadd.f32 %v1790, %v452
    %v1795 = vadd.f32 %v1791, %v457
    %v1796 = vmul.f32 %v1792, 0.01
    %v1797 = vmul.f32 %v1793, 0.01
    %v1798 = vmul.f32 %v1794, 0.01
    %v1799 = vmul.f32 %v1795, 0.01
    %v1800 = vmax.f32 %v1792, %v1796
    %v1801 = vmax.f32 %v1793, %v1797
    %v1802 = vmax.f32 %v1794, %v1798
    %v1803 = vmax.f32 %v1795, %v1799
    %1808 = vrot.lane.b32.xlu0 %v1800, 118
    %v1809 = vpop.permute.xlu0 %1808
    %1810 = vrot.lane.b32.xlu0 %v1801, 118
    %v1811 = vpop.permute.xlu0 %1810
    %1812 = vrot.lane.b32.xlu0 %v1802, 118
    %v1813 = vpop.permute.xlu0 %1812
    %1814 = vrot.lane.b32.xlu0 %v1803, 118
    %v1815 = vpop.permute.xlu0 %1814
    %1820 = vmatpush.msra.mxu0 0.0
    %1821 = vmatpush.msra.mxu0 0.0
    %1822 = vmatpush.msra.mxu0 0.0
    %1823 = vmatpush.msra.mxu0 0.0
    %1824 = vmatpush.msra.mxu0 0.0
    %1825 = vmatpush.msra.mxu0 0.0
    %1826 = vmatpush.msra.mxu0 0.0
    %1827 = vmatpush.msra.mxu0 0.0
    %1828 = vmatpush.msra.mxu0 0.0
    %1829 = vmatpush.msra.mxu0 0.0
    %1830 = vmatpush.msra.mxu0 0.0
    %1831 = vmatpush.msra.mxu0 0.0
    %1832 = vmatpush.msra.mxu0 %v1815
    %1833 = vmatpush.msra.mxu0 %v1813
    %1834 = vmatpush.msra.mxu0 %v1811
    %1835 = vmatpush.msra.mxu0 %v1809
    %1836 = vmatmul.f32.gmra.mxu0 %v498
    %v1837 = vpop.f32.mrf.mxu0
    %v1838 = vadd.f32 0.0, %v1837
    %1839 = vmatmul.f32.gmra.mxu0 %v501
    %v1840 = vpop.f32.mrf.mxu0
    %v1841 = vadd.f32 0.0, %v1840
    %1842 = vmatmul.f32.gmra.mxu0 %v504
    %v1843 = vpop.f32.mrf.mxu0
    %v1844 = vadd.f32 0.0, %v1843
    %1845 = vmatmul.f32.gmra.mxu0 %v507
    %v1846 = vpop.f32.mrf.mxu0
    %v1847 = vadd.f32 0.0, %v1846
    %1848 = vdwg.mxu0
    %1849 = vmatpush.msra.mxu0 0.0
    %1850 = vmatpush.msra.mxu0 0.0
    %1851 = vmatpush.msra.mxu0 0.0
    %1852 = vmatpush.msra.mxu0 0.0
    %1853 = vmatpush.msra.mxu0 0.0
    %1854 = vmatpush.msra.mxu0 0.0
    %1855 = vmatpush.msra.mxu0 0.0
    %1856 = vmatpush.msra.mxu0 0.0
    %1857 = vmatpush.msra.mxu0 0.0
    %1858 = vmatpush.msra.mxu0 0.0
    %1859 = vmatpush.msra.mxu0 0.0
    %1860 = vmatpush.msra.mxu0 0.0
    %1861 = vmatpush.msra.mxu0 %v1803
    %1862 = vmatpush.msra.mxu0 %v1802
    %1863 = vmatpush.msra.mxu0 %v1801
    %1864 = vmatpush.msra.mxu0 %v1800
    %1865 = vmatmul.f32.gmra.mxu0 %v539
    %v1866 = vpop.f32.mrf.mxu0
    %v1867 = vadd.f32 %v1838, %v1866
    %1868 = vmatmul.f32.gmra.mxu0 %v542
    %v1869 = vpop.f32.mrf.mxu0
    %v1870 = vadd.f32 %v1841, %v1869
    %1871 = vmatmul.f32.gmra.mxu0 %v545
    %v1872 = vpop.f32.mrf.mxu0
    %v1873 = vadd.f32 %v1844, %v1872
    %1874 = vmatmul.f32.gmra.mxu0 %v548
    %v1875 = vpop.f32.mrf.mxu0
    %v1876 = vadd.f32 %v1847, %v1875
    %1877 = vdwg.mxu0
    %1878 = vrot.lane.b32.xlu0 %v1800, 108
    %v1879 = vpop.permute.xlu0 %1878
    %1880 = vrot.lane.b32.xlu0 %v1801, 108
    %v1881 = vpop.permute.xlu0 %1880
    %1882 = vrot.lane.b32.xlu0 %v1802, 108
    %v1883 = vpop.permute.xlu0 %1882
    %1884 = vrot.lane.b32.xlu0 %v1803, 108
    %v1885 = vpop.permute.xlu0 %1884
    %1890 = vmatpush.msra.mxu0 0.0
    %1891 = vmatpush.msra.mxu0 0.0
    %1892 = vmatpush.msra.mxu0 0.0
    %1893 = vmatpush.msra.mxu0 0.0
    %1894 = vmatpush.msra.mxu0 0.0
    %1895 = vmatpush.msra.mxu0 0.0
    %1896 = vmatpush.msra.mxu0 0.0
    %1897 = vmatpush.msra.mxu0 0.0
    %1898 = vmatpush.msra.mxu0 0.0
    %1899 = vmatpush.msra.mxu0 0.0
    %1900 = vmatpush.msra.mxu0 0.0
    %1901 = vmatpush.msra.mxu0 0.0
    %1902 = vmatpush.msra.mxu0 %v1885
    %1903 = vmatpush.msra.mxu0 %v1883
    %1904 = vmatpush.msra.mxu0 %v1881
    %1905 = vmatpush.msra.mxu0 %v1879
    %1906 = vmatmul.f32.gmra.mxu0 %v597
    %v1907 = vpop.f32.mrf.mxu0
    %v1908 = vadd.f32 0.0, %v1907
    %1909 = vmatmul.f32.gmra.mxu0 %v600
    %v1910 = vpop.f32.mrf.mxu0
    %v1911 = vadd.f32 0.0, %v1910
    %1912 = vmatmul.f32.gmra.mxu0 %v603
    %v1913 = vpop.f32.mrf.mxu0
    %v1914 = vadd.f32 0.0, %v1913
    %1915 = vmatmul.f32.gmra.mxu0 %v606
    %v1916 = vpop.f32.mrf.mxu0
    %v1917 = vadd.f32 0.0, %v1916
    %1918 = vdwg.mxu0
    %v1919 = vadd.f32 %v1867, %v1908
    %v1920 = vadd.f32 %v1870, %v1911
    %v1921 = vadd.f32 %v1873, %v1914
    %v1922 = vadd.f32 %v1876, %v1917
    %1923 = vrot.lane.b32.xlu0 %v1800, 98
    %v1924 = vpop.permute.xlu0 %1923
    %1925 = vrot.lane.b32.xlu0 %v1801, 98
    %v1926 = vpop.permute.xlu0 %1925
    %1927 = vrot.lane.b32.xlu0 %v1802, 98
    %v1928 = vpop.permute.xlu0 %1927
    %1929 = vrot.lane.b32.xlu0 %v1803, 98
    %v1930 = vpop.permute.xlu0 %1929
    %1935 = vmatpush.msra.mxu0 0.0
    %1936 = vmatpush.msra.mxu0 0.0
    %1937 = vmatpush.msra.mxu0 0.0
    %1938 = vmatpush.msra.mxu0 0.0
    %1939 = vmatpush.msra.mxu0 0.0
    %1940 = vmatpush.msra.mxu0 0.0
    %1941 = vmatpush.msra.mxu0 0.0
    %1942 = vmatpush.msra.mxu0 0.0
    %1943 = vmatpush.msra.mxu0 0.0
    %1944 = vmatpush.msra.mxu0 0.0
    %1945 = vmatpush.msra.mxu0 0.0
    %1946 = vmatpush.msra.mxu0 0.0
    %1947 = vmatpush.msra.mxu0 %v1930
    %1948 = vmatpush.msra.mxu0 %v1928
    %1949 = vmatpush.msra.mxu0 %v1926
    %1950 = vmatpush.msra.mxu0 %v1924
    %1951 = vmatmul.f32.gmra.mxu0 %v659
    %v1952 = vpop.f32.mrf.mxu0
    %v1953 = vadd.f32 0.0, %v1952
    %1954 = vmatmul.f32.gmra.mxu0 %v662
    %v1955 = vpop.f32.mrf.mxu0
    %v1956 = vadd.f32 0.0, %v1955
    %1957 = vmatmul.f32.gmra.mxu0 %v665
    %v1958 = vpop.f32.mrf.mxu0
    %v1959 = vadd.f32 0.0, %v1958
    %1960 = vmatmul.f32.gmra.mxu0 %v668
    %v1961 = vpop.f32.mrf.mxu0
    %v1962 = vadd.f32 0.0, %v1961
    %1963 = vdwg.mxu0
    %v1964 = vadd.f32 %v1919, %v1953
    %v1965 = vadd.f32 %v1920, %v1956
    %v1966 = vadd.f32 %v1921, %v1959
    %v1967 = vadd.f32 %v1922, %v1962
    %1968 = vrot.lane.b32.xlu0 %v1800, 88
    %v1969 = vpop.permute.xlu0 %1968
    %1970 = vrot.lane.b32.xlu0 %v1801, 88
    %v1971 = vpop.permute.xlu0 %1970
    %1972 = vrot.lane.b32.xlu0 %v1802, 88
    %v1973 = vpop.permute.xlu0 %1972
    %1974 = vrot.lane.b32.xlu0 %v1803, 88
    %v1975 = vpop.permute.xlu0 %1974
    %1980 = vmatpush.msra.mxu0 0.0
    %1981 = vmatpush.msra.mxu0 0.0
    %1982 = vmatpush.msra.mxu0 0.0
    %1983 = vmatpush.msra.mxu0 0.0
    %1984 = vmatpush.msra.mxu0 0.0
    %1985 = vmatpush.msra.mxu0 0.0
    %1986 = vmatpush.msra.mxu0 0.0
    %1987 = vmatpush.msra.mxu0 0.0
    %1988 = vmatpush.msra.mxu0 0.0
    %1989 = vmatpush.msra.mxu0 0.0
    %1990 = vmatpush.msra.mxu0 0.0
    %1991 = vmatpush.msra.mxu0 0.0
    %1992 = vmatpush.msra.mxu0 %v1975
    %1993 = vmatpush.msra.mxu0 %v1973
    %1994 = vmatpush.msra.mxu0 %v1971
    %1995 = vmatpush.msra.mxu0 %v1969
    %1996 = vmatmul.f32.gmra.mxu0 %v721
    %v1997 = vpop.f32.mrf.mxu0
    %v1998 = vadd.f32 0.0, %v1997
    %1999 = vmatmul.f32.gmra.mxu0 %v724
    %v2000 = vpop.f32.mrf.mxu0
    %v2001 = vadd.f32 0.0, %v2000
    %2002 = vmatmul.f32.gmra.mxu0 %v727
    %v2003 = vpop.f32.mrf.mxu0
    %v2004 = vadd.f32 0.0, %v2003
    %2005 = vmatmul.f32.gmra.mxu0 %v730
    %v2006 = vpop.f32.mrf.mxu0
    %v2007 = vadd.f32 0.0, %v2006
    %2008 = vdwg.mxu0
    %v2009 = vadd.f32 %v1964, %v1998
    %v2010 = vadd.f32 %v1965, %v2001
    %v2011 = vadd.f32 %v1966, %v2004
    %v2012 = vadd.f32 %v1967, %v2007
    %v2013 = vadd.f32 %v2009, %v772
    %v2014 = vadd.f32 %v2010, %v777
    %v2015 = vadd.f32 %v2011, %v782
    %v2016 = vadd.f32 %v2012, %v787
    %v2017 = vmul.f32 %v2013, 0.01
    %v2018 = vmul.f32 %v2014, 0.01
    %v2019 = vmul.f32 %v2015, 0.01
    %v2020 = vmul.f32 %v2016, 0.01
    %v2021 = vmax.f32 %v2013, %v2017
    %v2022 = vmax.f32 %v2014, %v2018
    %v2023 = vmax.f32 %v2015, %v2019
    %v2024 = vmax.f32 %v2016, %v2020
    %s2025 = scalar_lea.vmem %s1, 8
    %v2026 = vld [vmem:[%s2025] sm:$0x1f]
    %2028 = vrot.lane.b32.xlu0 %v2026, 118
    %v2029 = vpop.permute.xlu0 %2028
    %v2030 = vsel %vm198, %v2029, 0
    %2032 = vmatpush.msra.mxu0 0.0
    %2033 = vmatpush.msra.mxu0 0.0
    %2034 = vmatpush.msra.mxu0 0.0
    %2035 = vmatpush.msra.mxu0 0.0
    %2036 = vmatpush.msra.mxu0 0.0
    %2037 = vmatpush.msra.mxu0 0.0
    %2038 = vmatpush.msra.mxu0 0.0
    %2039 = vmatpush.msra.mxu0 0.0
    %2040 = vmatpush.msra.mxu0 0.0
    %2041 = vmatpush.msra.mxu0 0.0
    %2042 = vmatpush.msra.mxu0 0.0
    %2043 = vmatpush.msra.mxu0 0.0
    %2044 = vmatpush.msra.mxu0 0.0
    %2045 = vmatpush.msra.mxu0 0.0
    %2046 = vmatpush.msra.mxu0 0.0
    %2047 = vmatpush.msra.mxu0 %v2030
    %2048 = vmatmul.f32.gmra.mxu0 %v815
    %v2049 = vpop.f32.mrf.mxu0
    %v2050 = vadd.f32 0.0, %v2049
    %2051 = vmatmul.f32.gmra.mxu0 %v818
    %v2052 = vpop.f32.mrf.mxu0
    %v2053 = vadd.f32 0.0, %v2052
    %2054 = vmatmul.f32.gmra.mxu0 %v821
    %v2055 = vpop.f32.mrf.mxu0
    %v2056 = vadd.f32 0.0, %v2055
    %2057 = vmatmul.f32.gmra.mxu0 %v824
    %v2058 = vpop.f32.mrf.mxu0
    %v2059 = vadd.f32 0.0, %v2058
    %2060 = vdwg.mxu0
    %v2061 = vsel %vm198, %v2026, 0
    %2063 = vmatpush.msra.mxu0 0.0
    %2064 = vmatpush.msra.mxu0 0.0
    %2065 = vmatpush.msra.mxu0 0.0
    %2066 = vmatpush.msra.mxu0 0.0
    %2067 = vmatpush.msra.mxu0 0.0
    %2068 = vmatpush.msra.mxu0 0.0
    %2069 = vmatpush.msra.mxu0 0.0
    %2070 = vmatpush.msra.mxu0 0.0
    %2071 = vmatpush.msra.mxu0 0.0
    %2072 = vmatpush.msra.mxu0 0.0
    %2073 = vmatpush.msra.mxu0 0.0
    %2074 = vmatpush.msra.mxu0 0.0
    %2075 = vmatpush.msra.mxu0 0.0
    %2076 = vmatpush.msra.mxu0 0.0
    %2077 = vmatpush.msra.mxu0 0.0
    %2078 = vmatpush.msra.mxu0 %v2061
    %2079 = vmatmul.f32.gmra.mxu0 %v858
    %v2080 = vpop.f32.mrf.mxu0
    %v2081 = vadd.f32 %v2050, %v2080
    %2082 = vmatmul.f32.gmra.mxu0 %v861
    %v2083 = vpop.f32.mrf.mxu0
    %v2084 = vadd.f32 %v2053, %v2083
    %2085 = vmatmul.f32.gmra.mxu0 %v864
    %v2086 = vpop.f32.mrf.mxu0
    %v2087 = vadd.f32 %v2056, %v2086
    %2088 = vmatmul.f32.gmra.mxu0 %v867
    %v2089 = vpop.f32.mrf.mxu0
    %v2090 = vadd.f32 %v2059, %v2089
    %2091 = vdwg.mxu0
    %2092 = vrot.lane.b32.xlu0 %v2026, 108
    %v2093 = vpop.permute.xlu0 %2092
    %v2094 = vsel %vm198, %v2093, 0
    %2096 = vmatpush.msra.mxu0 0.0
    %2097 = vmatpush.msra.mxu0 0.0
    %2098 = vmatpush.msra.mxu0 0.0
    %2099 = vmatpush.msra.mxu0 0.0
    %2100 = vmatpush.msra.mxu0 0.0
    %2101 = vmatpush.msra.mxu0 0.0
    %2102 = vmatpush.msra.mxu0 0.0
    %2103 = vmatpush.msra.mxu0 0.0
    %2104 = vmatpush.msra.mxu0 0.0
    %2105 = vmatpush.msra.mxu0 0.0
    %2106 = vmatpush.msra.mxu0 0.0
    %2107 = vmatpush.msra.mxu0 0.0
    %2108 = vmatpush.msra.mxu0 0.0
    %2109 = vmatpush.msra.mxu0 0.0
    %2110 = vmatpush.msra.mxu0 0.0
    %2111 = vmatpush.msra.mxu0 %v2094
    %2112 = vmatmul.f32.gmra.mxu0 %v908
    %v2113 = vpop.f32.mrf.mxu0
    %v2114 = vadd.f32 0.0, %v2113
    %2115 = vmatmul.f32.gmra.mxu0 %v911
    %v2116 = vpop.f32.mrf.mxu0
    %v2117 = vadd.f32 0.0, %v2116
    %2118 = vmatmul.f32.gmra.mxu0 %v914
    %v2119 = vpop.f32.mrf.mxu0
    %v2120 = vadd.f32 0.0, %v2119
    %2121 = vmatmul.f32.gmra.mxu0 %v917
    %v2122 = vpop.f32.mrf.mxu0
    %v2123 = vadd.f32 0.0, %v2122
    %2124 = vdwg.mxu0
    %v2125 = vadd.f32 %v2081, %v2114
    %v2126 = vadd.f32 %v2084, %v2117
    %v2127 = vadd.f32 %v2087, %v2120
    %v2128 = vadd.f32 %v2090, %v2123
    %2129 = vrot.lane.b32.xlu0 %v2026, 98
    %v2130 = vpop.permute.xlu0 %2129
    %v2131 = vsel %vm198, %v2130, 0
    %2133 = vmatpush.msra.mxu0 0.0
    %2134 = vmatpush.msra.mxu0 0.0
    %2135 = vmatpush.msra.mxu0 0.0
    %2136 = vmatpush.msra.mxu0 0.0
    %2137 = vmatpush.msra.mxu0 0.0
    %2138 = vmatpush.msra.mxu0 0.0
    %2139 = vmatpush.msra.mxu0 0.0
    %2140 = vmatpush.msra.mxu0 0.0
    %2141 = vmatpush.msra.mxu0 0.0
    %2142 = vmatpush.msra.mxu0 0.0
    %2143 = vmatpush.msra.mxu0 0.0
    %2144 = vmatpush.msra.mxu0 0.0
    %2145 = vmatpush.msra.mxu0 0.0
    %2146 = vmatpush.msra.mxu0 0.0
    %2147 = vmatpush.msra.mxu0 0.0
    %2148 = vmatpush.msra.mxu0 %v2131
    %2149 = vmatmul.f32.gmra.mxu0 %v962
    %v2150 = vpop.f32.mrf.mxu0
    %v2151 = vadd.f32 0.0, %v2150
    %2152 = vmatmul.f32.gmra.mxu0 %v965
    %v2153 = vpop.f32.mrf.mxu0
    %v2154 = vadd.f32 0.0, %v2153
    %2155 = vmatmul.f32.gmra.mxu0 %v968
    %v2156 = vpop.f32.mrf.mxu0
    %v2157 = vadd.f32 0.0, %v2156
    %2158 = vmatmul.f32.gmra.mxu0 %v971
    %v2159 = vpop.f32.mrf.mxu0
    %v2160 = vadd.f32 0.0, %v2159
    %2161 = vdwg.mxu0
    %v2162 = vadd.f32 %v2125, %v2151
    %v2163 = vadd.f32 %v2126, %v2154
    %v2164 = vadd.f32 %v2127, %v2157
    %v2165 = vadd.f32 %v2128, %v2160
    %2166 = vrot.lane.b32.xlu0 %v2026, 88
    %v2167 = vpop.permute.xlu0 %2166
    %v2168 = vsel %vm198, %v2167, 0
    %2170 = vmatpush.msra.mxu0 0.0
    %2171 = vmatpush.msra.mxu0 0.0
    %2172 = vmatpush.msra.mxu0 0.0
    %2173 = vmatpush.msra.mxu0 0.0
    %2174 = vmatpush.msra.mxu0 0.0
    %2175 = vmatpush.msra.mxu0 0.0
    %2176 = vmatpush.msra.mxu0 0.0
    %2177 = vmatpush.msra.mxu0 0.0
    %2178 = vmatpush.msra.mxu0 0.0
    %2179 = vmatpush.msra.mxu0 0.0
    %2180 = vmatpush.msra.mxu0 0.0
    %2181 = vmatpush.msra.mxu0 0.0
    %2182 = vmatpush.msra.mxu0 0.0
    %2183 = vmatpush.msra.mxu0 0.0
    %2184 = vmatpush.msra.mxu0 0.0
    %2185 = vmatpush.msra.mxu0 %v2168
    %2186 = vmatmul.f32.gmra.mxu0 %v1016
    %v2187 = vpop.f32.mrf.mxu0
    %v2188 = vadd.f32 0.0, %v2187
    %2189 = vmatmul.f32.gmra.mxu0 %v1019
    %v2190 = vpop.f32.mrf.mxu0
    %v2191 = vadd.f32 0.0, %v2190
    %2192 = vmatmul.f32.gmra.mxu0 %v1022
    %v2193 = vpop.f32.mrf.mxu0
    %v2194 = vadd.f32 0.0, %v2193
    %2195 = vmatmul.f32.gmra.mxu0 %v1025
    %v2196 = vpop.f32.mrf.mxu0
    %v2197 = vadd.f32 0.0, %v2196
    %2198 = vdwg.mxu0
    %v2199 = vadd.f32 %v2162, %v2188
    %v2200 = vadd.f32 %v2163, %v2191
    %v2201 = vadd.f32 %v2164, %v2194
    %v2202 = vadd.f32 %v2165, %v2197
    %v2203 = vadd.f32 %v2199, %v1069
    %v2204 = vadd.f32 %v2200, %v1074
    %v2205 = vadd.f32 %v2201, %v1079
    %v2206 = vadd.f32 %v2202, %v1084
    %v2207 = vmul.f32 %v2203, 0.01
    %v2208 = vmul.f32 %v2204, 0.01
    %v2209 = vmul.f32 %v2205, 0.01
    %v2210 = vmul.f32 %v2206, 0.01
    %v2211 = vmax.f32 %v2203, %v2207
    %v2212 = vmax.f32 %v2204, %v2208
    %v2213 = vmax.f32 %v2205, %v2209
    %v2214 = vmax.f32 %v2206, %v2210
    %2219 = vrot.lane.b32.xlu0 %v2211, 118
    %v2220 = vpop.permute.xlu0 %2219
    %2221 = vrot.lane.b32.xlu0 %v2212, 118
    %v2222 = vpop.permute.xlu0 %2221
    %2223 = vrot.lane.b32.xlu0 %v2213, 118
    %v2224 = vpop.permute.xlu0 %2223
    %2225 = vrot.lane.b32.xlu0 %v2214, 118
    %v2226 = vpop.permute.xlu0 %2225
    %2231 = vmatpush.msra.mxu0 0.0
    %2232 = vmatpush.msra.mxu0 0.0
    %2233 = vmatpush.msra.mxu0 0.0
    %2234 = vmatpush.msra.mxu0 0.0
    %2235 = vmatpush.msra.mxu0 0.0
    %2236 = vmatpush.msra.mxu0 0.0
    %2237 = vmatpush.msra.mxu0 0.0
    %2238 = vmatpush.msra.mxu0 0.0
    %2239 = vmatpush.msra.mxu0 0.0
    %2240 = vmatpush.msra.mxu0 0.0
    %2241 = vmatpush.msra.mxu0 0.0
    %2242 = vmatpush.msra.mxu0 0.0
    %2243 = vmatpush.msra.mxu0 %v2226
    %2244 = vmatpush.msra.mxu0 %v2224
    %2245 = vmatpush.msra.mxu0 %v2222
    %2246 = vmatpush.msra.mxu0 %v2220
    %2247 = vmatmul.f32.gmra.mxu0 %v1124
    %v2248 = vpop.f32.mrf.mxu0
    %v2249 = vadd.f32 0.0, %v2248
    %2250 = vmatmul.f32.gmra.mxu0 %v1127
    %v2251 = vpop.f32.mrf.mxu0
    %v2252 = vadd.f32 0.0, %v2251
    %2253 = vmatmul.f32.gmra.mxu0 %v1130
    %v2254 = vpop.f32.mrf.mxu0
    %v2255 = vadd.f32 0.0, %v2254
    %2256 = vmatmul.f32.gmra.mxu0 %v1133
    %v2257 = vpop.f32.mrf.mxu0
    %v2258 = vadd.f32 0.0, %v2257
    %2259 = vdwg.mxu0
    %2260 = vmatpush.msra.mxu0 0.0
    %2261 = vmatpush.msra.mxu0 0.0
    %2262 = vmatpush.msra.mxu0 0.0
    %2263 = vmatpush.msra.mxu0 0.0
    %2264 = vmatpush.msra.mxu0 0.0
    %2265 = vmatpush.msra.mxu0 0.0
    %2266 = vmatpush.msra.mxu0 0.0
    %2267 = vmatpush.msra.mxu0 0.0
    %2268 = vmatpush.msra.mxu0 0.0
    %2269 = vmatpush.msra.mxu0 0.0
    %2270 = vmatpush.msra.mxu0 0.0
    %2271 = vmatpush.msra.mxu0 0.0
    %2272 = vmatpush.msra.mxu0 %v2214
    %2273 = vmatpush.msra.mxu0 %v2213
    %2274 = vmatpush.msra.mxu0 %v2212
    %2275 = vmatpush.msra.mxu0 %v2211
    %2276 = vmatmul.f32.gmra.mxu0 %v1165
    %v2277 = vpop.f32.mrf.mxu0
    %v2278 = vadd.f32 %v2249, %v2277
    %2279 = vmatmul.f32.gmra.mxu0 %v1168
    %v2280 = vpop.f32.mrf.mxu0
    %v2281 = vadd.f32 %v2252, %v2280
    %2282 = vmatmul.f32.gmra.mxu0 %v1171
    %v2283 = vpop.f32.mrf.mxu0
    %v2284 = vadd.f32 %v2255, %v2283
    %2285 = vmatmul.f32.gmra.mxu0 %v1174
    %v2286 = vpop.f32.mrf.mxu0
    %v2287 = vadd.f32 %v2258, %v2286
    %2288 = vdwg.mxu0
    %2289 = vrot.lane.b32.xlu0 %v2211, 108
    %v2290 = vpop.permute.xlu0 %2289
    %2291 = vrot.lane.b32.xlu0 %v2212, 108
    %v2292 = vpop.permute.xlu0 %2291
    %2293 = vrot.lane.b32.xlu0 %v2213, 108
    %v2294 = vpop.permute.xlu0 %2293
    %2295 = vrot.lane.b32.xlu0 %v2214, 108
    %v2296 = vpop.permute.xlu0 %2295
    %2301 = vmatpush.msra.mxu0 0.0
    %2302 = vmatpush.msra.mxu0 0.0
    %2303 = vmatpush.msra.mxu0 0.0
    %2304 = vmatpush.msra.mxu0 0.0
    %2305 = vmatpush.msra.mxu0 0.0
    %2306 = vmatpush.msra.mxu0 0.0
    %2307 = vmatpush.msra.mxu0 0.0
    %2308 = vmatpush.msra.mxu0 0.0
    %2309 = vmatpush.msra.mxu0 0.0
    %2310 = vmatpush.msra.mxu0 0.0
    %2311 = vmatpush.msra.mxu0 0.0
    %2312 = vmatpush.msra.mxu0 0.0
    %2313 = vmatpush.msra.mxu0 %v2296
    %2314 = vmatpush.msra.mxu0 %v2294
    %2315 = vmatpush.msra.mxu0 %v2292
    %2316 = vmatpush.msra.mxu0 %v2290
    %2317 = vmatmul.f32.gmra.mxu0 %v1223
    %v2318 = vpop.f32.mrf.mxu0
    %v2319 = vadd.f32 0.0, %v2318
    %2320 = vmatmul.f32.gmra.mxu0 %v1226
    %v2321 = vpop.f32.mrf.mxu0
    %v2322 = vadd.f32 0.0, %v2321
    %2323 = vmatmul.f32.gmra.mxu0 %v1229
    %v2324 = vpop.f32.mrf.mxu0
    %v2325 = vadd.f32 0.0, %v2324
    %2326 = vmatmul.f32.gmra.mxu0 %v1232
    %v2327 = vpop.f32.mrf.mxu0
    %v2328 = vadd.f32 0.0, %v2327
    %2329 = vdwg.mxu0
    %v2330 = vadd.f32 %v2278, %v2319
    %v2331 = vadd.f32 %v2281, %v2322
    %v2332 = vadd.f32 %v2284, %v2325
    %v2333 = vadd.f32 %v2287, %v2328
    %2334 = vrot.lane.b32.xlu0 %v2211, 98
    %v2335 = vpop.permute.xlu0 %2334
    %2336 = vrot.lane.b32.xlu0 %v2212, 98
    %v2337 = vpop.permute.xlu0 %2336
    %2338 = vrot.lane.b32.xlu0 %v2213, 98
    %v2339 = vpop.permute.xlu0 %2338
    %2340 = vrot.lane.b32.xlu0 %v2214, 98
    %v2341 = vpop.permute.xlu0 %2340
    %2346 = vmatpush.msra.mxu0 0.0
    %2347 = vmatpush.msra.mxu0 0.0
    %2348 = vmatpush.msra.mxu0 0.0
    %2349 = vmatpush.msra.mxu0 0.0
    %2350 = vmatpush.msra.mxu0 0.0
    %2351 = vmatpush.msra.mxu0 0.0
    %2352 = vmatpush.msra.mxu0 0.0
    %2353 = vmatpush.msra.mxu0 0.0
    %2354 = vmatpush.msra.mxu0 0.0
    %2355 = vmatpush.msra.mxu0 0.0
    %2356 = vmatpush.msra.mxu0 0.0
    %2357 = vmatpush.msra.mxu0 0.0
    %2358 = vmatpush.msra.mxu0 %v2341
    %2359 = vmatpush.msra.mxu0 %v2339
    %2360 = vmatpush.msra.mxu0 %v2337
    %2361 = vmatpush.msra.mxu0 %v2335
    %2362 = vmatmul.f32.gmra.mxu0 %v1285
    %v2363 = vpop.f32.mrf.mxu0
    %v2364 = vadd.f32 0.0, %v2363
    %2365 = vmatmul.f32.gmra.mxu0 %v1288
    %v2366 = vpop.f32.mrf.mxu0
    %v2367 = vadd.f32 0.0, %v2366
    %2368 = vmatmul.f32.gmra.mxu0 %v1291
    %v2369 = vpop.f32.mrf.mxu0
    %v2370 = vadd.f32 0.0, %v2369
    %2371 = vmatmul.f32.gmra.mxu0 %v1294
    %v2372 = vpop.f32.mrf.mxu0
    %v2373 = vadd.f32 0.0, %v2372
    %2374 = vdwg.mxu0
    %v2375 = vadd.f32 %v2330, %v2364
    %v2376 = vadd.f32 %v2331, %v2367
    %v2377 = vadd.f32 %v2332, %v2370
    %v2378 = vadd.f32 %v2333, %v2373
    %2379 = vrot.lane.b32.xlu0 %v2211, 88
    %v2380 = vpop.permute.xlu0 %2379
    %2381 = vrot.lane.b32.xlu0 %v2212, 88
    %v2382 = vpop.permute.xlu0 %2381
    %2383 = vrot.lane.b32.xlu0 %v2213, 88
    %v2384 = vpop.permute.xlu0 %2383
    %2385 = vrot.lane.b32.xlu0 %v2214, 88
    %v2386 = vpop.permute.xlu0 %2385
    %2391 = vmatpush.msra.mxu0 0.0
    %2392 = vmatpush.msra.mxu0 0.0
    %2393 = vmatpush.msra.mxu0 0.0
    %2394 = vmatpush.msra.mxu0 0.0
    %2395 = vmatpush.msra.mxu0 0.0
    %2396 = vmatpush.msra.mxu0 0.0
    %2397 = vmatpush.msra.mxu0 0.0
    %2398 = vmatpush.msra.mxu0 0.0
    %2399 = vmatpush.msra.mxu0 0.0
    %2400 = vmatpush.msra.mxu0 0.0
    %2401 = vmatpush.msra.mxu0 0.0
    %2402 = vmatpush.msra.mxu0 0.0
    %2403 = vmatpush.msra.mxu0 %v2386
    %2404 = vmatpush.msra.mxu0 %v2384
    %2405 = vmatpush.msra.mxu0 %v2382
    %2406 = vmatpush.msra.mxu0 %v2380
    %2407 = vmatmul.f32.gmra.mxu0 %v1347
    %v2408 = vpop.f32.mrf.mxu0
    %v2409 = vadd.f32 0.0, %v2408
    %2410 = vmatmul.f32.gmra.mxu0 %v1350
    %v2411 = vpop.f32.mrf.mxu0
    %v2412 = vadd.f32 0.0, %v2411
    %2413 = vmatmul.f32.gmra.mxu0 %v1353
    %v2414 = vpop.f32.mrf.mxu0
    %v2415 = vadd.f32 0.0, %v2414
    %2416 = vmatmul.f32.gmra.mxu0 %v1356
    %v2417 = vpop.f32.mrf.mxu0
    %v2418 = vadd.f32 0.0, %v2417
    %2419 = vdwg.mxu0
    %v2420 = vadd.f32 %v2375, %v2409
    %v2421 = vadd.f32 %v2376, %v2412
    %v2422 = vadd.f32 %v2377, %v2415
    %v2423 = vadd.f32 %v2378, %v2418
    %v2424 = vadd.f32 %v2420, %v1398
    %v2425 = vadd.f32 %v2421, %v1403
    %v2426 = vadd.f32 %v2422, %v1408
    %v2427 = vadd.f32 %v2423, %v1413
    %v2428 = vmul.f32 %v2424, 0.01
    %v2429 = vmul.f32 %v2425, 0.01
    %v2430 = vmul.f32 %v2426, 0.01
    %v2431 = vmul.f32 %v2427, 0.01
    %v2432 = vmax.f32 %v2424, %v2428
    %v2433 = vmax.f32 %v2425, %v2429
    %v2434 = vmax.f32 %v2426, %v2430
    %v2435 = vmax.f32 %v2427, %v2431
    %2440 = vrot.lane.b32.xlu0 %v2432, 20
    %v2441 = vpop.permute.xlu0 %2440
    %2442 = vrot.lane.b32.xlu0 %v2433, 20
    %v2443 = vpop.permute.xlu0 %2442
    %2444 = vrot.lane.b32.xlu0 %v2434, 20
    %v2445 = vpop.permute.xlu0 %2444
    %2446 = vrot.lane.b32.xlu0 %v2435, 20
    %v2447 = vpop.permute.xlu0 %2446
    %v2452 = vsel %vm1443, %v2021, %v2441
    %v2453 = vsel %vm1443, %v2022, %v2443
    %v2454 = vsel %vm1443, %v2023, %v2445
    %v2455 = vsel %vm1443, %v2024, %v2447
    %v2457 = vrot.slane %v2452, 1
    %2458 = vrot.lane.b32.xlu0 %v2457, 40
    %v2459 = vpop.permute.xlu0 %2458
    %v2461 = vrot.slane %v2452, 2
    %2462 = vrot.lane.b32.xlu0 %v2461, 80
    %v2463 = vpop.permute.xlu0 %2462
    %v2465 = vrot.slane %v2452, 3
    %2466 = vrot.lane.b32.xlu0 %v2465, 120
    %v2467 = vpop.permute.xlu0 %2466
    %v2469 = vrot.slane %v2452, 4
    %2470 = vrot.lane.b32.xlu0 %v2469, 32
    %v2471 = vpop.permute.xlu0 %2470
    %v2473 = vrot.slane %v2452, 5
    %2474 = vrot.lane.b32.xlu0 %v2473, 72
    %v2475 = vpop.permute.xlu0 %2474
    %v2477 = vrot.slane %v2452, 6
    %2478 = vrot.lane.b32.xlu0 %v2477, 112
    %v2479 = vpop.permute.xlu0 %2478
    %v2481 = vrot.slane %v2452, 7
    %2482 = vrot.lane.b32.xlu0 %v2481, 24
    %v2483 = vpop.permute.xlu0 %2482
    %2486 = vrot.lane.b32.xlu0 %v2453, 64
    %v2487 = vpop.permute.xlu0 %2486
    %v2489 = vrot.slane %v2453, 1
    %2490 = vrot.lane.b32.xlu0 %v2489, 104
    %v2491 = vpop.permute.xlu0 %2490
    %v2493 = vrot.slane %v2453, 2
    %2494 = vrot.lane.b32.xlu0 %v2493, 16
    %v2495 = vpop.permute.xlu0 %2494
    %v2497 = vrot.slane %v2453, 3
    %2498 = vrot.lane.b32.xlu0 %v2497, 56
    %v2499 = vpop.permute.xlu0 %2498
    %v2501 = vrot.slane %v2453, 4
    %2502 = vrot.lane.b32.xlu0 %v2501, 96
    %v2503 = vpop.permute.xlu0 %2502
    %v2505 = vrot.slane %v2453, 5
    %2506 = vrot.lane.b32.xlu0 %v2505, 8
    %v2507 = vpop.permute.xlu0 %2506
    %v2509 = vrot.slane %v2453, 6
    %2510 = vrot.lane.b32.xlu0 %v2509, 48
    %v2511 = vpop.permute.xlu0 %2510
    %v2513 = vrot.slane %v2453, 7
    %2514 = vrot.lane.b32.xlu0 %v2513, 88
    %v2515 = vpop.permute.xlu0 %2514
    %v2517 = vsel %vm1509, %v2452, %v2459
    %v2518 = vsel %vm1511, %v2517, %v2463
    %v2519 = vsel %vm1513, %v2518, %v2467
    %v2520 = vsel %vm496, %v2467, %v2471
    %v2521 = vsel %vm1516, %v2520, %v2475
    %v2522 = vsel %vm1518, %v2521, %v2479
    %v2523 = vsel %vm1520, %v2479, %v2483
    %v2524 = vsel %vm1522, %v2523, %v2487
    %v2525 = vsel %vm1524, %v2524, %v2491
    %v2526 = vsel %vm1526, %v2491, %v2495
    %v2527 = vsel %vm1528, %v2526, %v2499
    %v2528 = vsel %vm1530, %v2527, %v2503
    %v2529 = vsel %vm1532, %v2503, %v2507
    %v2530 = vsel %vm1534, %v2529, %v2511
    %v2531 = vsel %vm1536, %v2530, %v2515
    %v2533 = vrot.slane %v2454, 1
    %2534 = vrot.lane.b32.xlu0 %v2533, 40
    %v2535 = vpop.permute.xlu0 %2534
    %v2537 = vrot.slane %v2454, 2
    %2538 = vrot.lane.b32.xlu0 %v2537, 80
    %v2539 = vpop.permute.xlu0 %2538
    %v2541 = vrot.slane %v2454, 3
    %2542 = vrot.lane.b32.xlu0 %v2541, 120
    %v2543 = vpop.permute.xlu0 %2542
    %v2545 = vrot.slane %v2454, 4
    %2546 = vrot.lane.b32.xlu0 %v2545, 32
    %v2547 = vpop.permute.xlu0 %2546
    %v2549 = vrot.slane %v2454, 5
    %2550 = vrot.lane.b32.xlu0 %v2549, 72
    %v2551 = vpop.permute.xlu0 %2550
    %v2553 = vrot.slane %v2454, 6
    %2554 = vrot.lane.b32.xlu0 %v2553, 112
    %v2555 = vpop.permute.xlu0 %2554
    %v2557 = vrot.slane %v2454, 7
    %2558 = vrot.lane.b32.xlu0 %v2557, 24
    %v2559 = vpop.permute.xlu0 %2558
    %2562 = vrot.lane.b32.xlu0 %v2455, 64
    %v2563 = vpop.permute.xlu0 %2562
    %v2565 = vrot.slane %v2455, 1
    %2566 = vrot.lane.b32.xlu0 %v2565, 104
    %v2567 = vpop.permute.xlu0 %2566
    %v2569 = vrot.slane %v2455, 2
    %2570 = vrot.lane.b32.xlu0 %v2569, 16
    %v2571 = vpop.permute.xlu0 %2570
    %v2573 = vrot.slane %v2455, 3
    %2574 = vrot.lane.b32.xlu0 %v2573, 56
    %v2575 = vpop.permute.xlu0 %2574
    %v2577 = vrot.slane %v2455, 4
    %2578 = vrot.lane.b32.xlu0 %v2577, 96
    %v2579 = vpop.permute.xlu0 %2578
    %v2581 = vrot.slane %v2455, 5
    %2582 = vrot.lane.b32.xlu0 %v2581, 8
    %v2583 = vpop.permute.xlu0 %2582
    %v2585 = vrot.slane %v2455, 6
    %2586 = vrot.lane.b32.xlu0 %v2585, 48
    %v2587 = vpop.permute.xlu0 %2586
    %v2589 = vrot.slane %v2455, 7
    %2590 = vrot.lane.b32.xlu0 %v2589, 88
    %v2591 = vpop.permute.xlu0 %2590
    %v2593 = vsel %vm1509, %v2454, %v2535
    %v2594 = vsel %vm1511, %v2593, %v2539
    %v2595 = vsel %vm1513, %v2594, %v2543
    %v2596 = vsel %vm496, %v2543, %v2547
    %v2597 = vsel %vm1516, %v2596, %v2551
    %v2598 = vsel %vm1518, %v2597, %v2555
    %v2599 = vsel %vm1520, %v2555, %v2559
    %v2600 = vsel %vm1522, %v2599, %v2563
    %v2601 = vsel %vm1524, %v2600, %v2567
    %v2602 = vsel %vm1526, %v2567, %v2571
    %v2603 = vsel %vm1528, %v2602, %v2575
    %v2604 = vsel %vm1530, %v2603, %v2579
    %v2605 = vsel %vm1532, %v2579, %v2583
    %v2606 = vsel %vm1534, %v2605, %v2587
    %v2607 = vsel %vm1536, %v2606, %v2591
    %v2618 = vrot.slane %v2519, 7
    %v2619 = vrot.slane %v2522, 7
    %v2620 = vrot.slane %v2525, 7
    %v2621 = vrot.slane %v2528, 7
    %v2622 = vrot.slane %v2531, 7
    %v2623 = vrot.slane %v2595, 7
    %v2624 = vrot.slane %v2598, 7
    %v2625 = vrot.slane %v2601, 7
    %v2626 = vrot.slane %v2604, 7
    %v2627 = vrot.slane %v2607, 7
    %vm2638 = vcmask 1040384
    %v2639 = vsel %vm2638, %v1514, %v2618
    %v2640 = vsel %vm2638, %v1519, %v2619
    %v2641 = vsel %vm2638, %v1525, %v2620
    %v2642 = vsel %vm2638, %v1531, %v2621
    %v2643 = vsel %vm2638, %v1537, %v2622
    %v2644 = vsel %vm2638, %v1601, %v2623
    %v2645 = vsel %vm2638, %v1604, %v2624
    %v2646 = vsel %vm2638, %v1607, %v2625
    %v2647 = vsel %vm2638, %v1610, %v2626
    %v2648 = vsel %vm2638, %v1613, %v2627
    %v2649 = vld [vmem:[#allocation6] sm:$0xff]
    %v2650 = vld [vmem:[#allocation6 + $0x8] sm:$0xff]
    %v2651 = vld [vmem:[#allocation6 + $0x10] sm:$0xff]
    %v2652 = vld [vmem:[#allocation6 + $0x18] sm:$0xff]
    %v2653 = vld [vmem:[#allocation6 + $0x20] sm:$0xff]
    %v2654 = vld [vmem:[#allocation6 + $0x28] sm:$0xff]
    %v2655 = vld [vmem:[#allocation6 + $0x30] sm:$0xff]
    %v2656 = vld [vmem:[#allocation6 + $0x38] sm:$0xff]
    %v2657 = vld [vmem:[#allocation6 + $0x40] sm:$0xff]
    %v2658 = vld [vmem:[#allocation6 + $0x48] sm:$0xff]
    %v2659 = vld [vmem:[#allocation6 + $0x50] sm:$0xff]
    %v2660 = vld [vmem:[#allocation6 + $0x58] sm:$0xff]
    %v2661 = vld [vmem:[#allocation6 + $0x60] sm:$0xff]
    %v2662 = vld [vmem:[#allocation6 + $0x68] sm:$0xff]
    %v2663 = vld [vmem:[#allocation6 + $0x70] sm:$0xff]
    %v2664 = vld [vmem:[#allocation6 + $0x78] sm:$0xff]
    %v2665 = vld [vmem:[#allocation6 + $0x80] sm:$0xff]
    %v2666 = vld [vmem:[#allocation6 + $0x88] sm:$0xff]
    %v2667 = vld [vmem:[#allocation6 + $0x90] sm:$0xff]
    %v2668 = vld [vmem:[#allocation6 + $0x98] sm:$0xff]
    %v2669 = vld [vmem:[#allocation6 + $0xa0] sm:$0xff]
    %v2670 = vld [vmem:[#allocation6 + $0xa8] sm:$0xff]
    %v2671 = vld [vmem:[#allocation6 + $0xb0] sm:$0xff]
    %v2672 = vld [vmem:[#allocation6 + $0xb8] sm:$0xff]
    %v2673 = vld [vmem:[#allocation6 + $0xc0] sm:$0xff]
    %v2674 = vld [vmem:[#allocation6 + $0xc8] sm:$0xff]
    %v2675 = vld [vmem:[#allocation6 + $0xd0] sm:$0xff]
    %v2676 = vld [vmem:[#allocation6 + $0xd8] sm:$0xff]
    %v2677 = vld [vmem:[#allocation6 + $0xe0] sm:$0xff]
    %v2678 = vld [vmem:[#allocation6 + $0xe8] sm:$0xff]
    %v2679 = vld [vmem:[#allocation6 + $0xf0] sm:$0xff]
    %v2680 = vld [vmem:[#allocation6 + $0xf8] sm:$0xff]
    %v2681 = vld [vmem:[#allocation6 + $0x100] sm:$0xff]
    %v2682 = vld [vmem:[#allocation6 + $0x108] sm:$0xff]
    %v2683 = vld [vmem:[#allocation6 + $0x110] sm:$0xff]
    %v2684 = vld [vmem:[#allocation6 + $0x118] sm:$0xff]
    %v2685 = vld [vmem:[#allocation6 + $0x120] sm:$0xff]
    %v2686 = vld [vmem:[#allocation6 + $0x128] sm:$0xff]
    %v2687 = vld [vmem:[#allocation6 + $0x130] sm:$0xff]
    %v2688 = vld [vmem:[#allocation6 + $0x138] sm:$0xff]
    %v2689 = vld [vmem:[#allocation6 + $0x140] sm:$0xff]
    %v2690 = vld [vmem:[#allocation6 + $0x148] sm:$0xff]
    %v2691 = vld [vmem:[#allocation6 + $0x150] sm:$0xff]
    %v2692 = vld [vmem:[#allocation6 + $0x158] sm:$0xff]
    %v2693 = vld [vmem:[#allocation6 + $0x160] sm:$0xff]
    %v2694 = vld [vmem:[#allocation6 + $0x168] sm:$0xff]
    %v2695 = vld [vmem:[#allocation6 + $0x170] sm:$0xff]
    %v2696 = vld [vmem:[#allocation6 + $0x178] sm:$0xff]
    %v2697 = vld [vmem:[#allocation6 + $0x180] sm:$0xff]
    %v2698 = vld [vmem:[#allocation6 + $0x188] sm:$0xff]
    %v2699 = vld [vmem:[#allocation6 + $0x190] sm:$0xff]
    %v2700 = vld [vmem:[#allocation6 + $0x198] sm:$0xff]
    %v2701 = vld [vmem:[#allocation6 + $0x1a0] sm:$0xff]
    %v2702 = vld [vmem:[#allocation6 + $0x1a8] sm:$0xff]
    %v2703 = vld [vmem:[#allocation6 + $0x1b0] sm:$0xff]
    %v2704 = vld [vmem:[#allocation6 + $0x1b8] sm:$0xff]
    %v2705 = vld [vmem:[#allocation6 + $0x1c0] sm:$0xff]
    %v2706 = vld [vmem:[#allocation6 + $0x1c8] sm:$0xff]
    %v2707 = vld [vmem:[#allocation6 + $0x1d0] sm:$0xff]
    %v2708 = vld [vmem:[#allocation6 + $0x1d8] sm:$0xff]
    %v2709 = vld [vmem:[#allocation6 + $0x1e0] sm:$0xff]
    %v2710 = vld [vmem:[#allocation6 + $0x1e8] sm:$0xff]
    %v2711 = vld [vmem:[#allocation6 + $0x1f0] sm:$0xff]
    %v2712 = vld [vmem:[#allocation6 + $0x1f8] sm:$0xff]
    %v2713 = vld [vmem:[#allocation6 + $0x200] sm:$0xff]
    %v2714 = vld [vmem:[#allocation6 + $0x208] sm:$0xff]
    %v2715 = vld [vmem:[#allocation6 + $0x210] sm:$0xff]
    %v2716 = vld [vmem:[#allocation6 + $0x218] sm:$0xff]
    %v2717 = vld [vmem:[#allocation6 + $0x220] sm:$0xff]
    %v2718 = vld [vmem:[#allocation6 + $0x228] sm:$0xff]
    %v2719 = vld [vmem:[#allocation6 + $0x230] sm:$0xff]
    %v2720 = vld [vmem:[#allocation6 + $0x238] sm:$0xff]
    %v2721 = vld [vmem:[#allocation6 + $0x240] sm:$0xff]
    %v2722 = vld [vmem:[#allocation6 + $0x248] sm:$0xff]
    %v2723 = vld [vmem:[#allocation6 + $0x250] sm:$0xff]
    %v2724 = vld [vmem:[#allocation6 + $0x258] sm:$0xff]
    %v2725 = vld [vmem:[#allocation6 + $0x260] sm:$0xff]
    %v2726 = vld [vmem:[#allocation6 + $0x268] sm:$0xff]
    %v2727 = vld [vmem:[#allocation6 + $0x270] sm:$0xff]
    %v2728 = vld [vmem:[#allocation6 + $0x278] sm:$0xff]
    %v2729 = vld [vmem:[#allocation6 + $0x280] sm:$0xff]
    %v2730 = vld [vmem:[#allocation6 + $0x288] sm:$0xff]
    %v2731 = vld [vmem:[#allocation6 + $0x290] sm:$0xff]
    %v2732 = vld [vmem:[#allocation6 + $0x298] sm:$0xff]
    %v2733 = vld [vmem:[#allocation6 + $0x2a0] sm:$0xff]
    %v2734 = vld [vmem:[#allocation6 + $0x2a8] sm:$0xff]
    %v2735 = vld [vmem:[#allocation6 + $0x2b0] sm:$0xff]
    %v2736 = vld [vmem:[#allocation6 + $0x2b8] sm:$0xff]
    %v2737 = vld [vmem:[#allocation6 + $0x2c0] sm:$0xff]
    %v2738 = vld [vmem:[#allocation6 + $0x2c8] sm:$0xff]
    %v2739 = vld [vmem:[#allocation6 + $0x2d0] sm:$0xff]
    %v2740 = vld [vmem:[#allocation6 + $0x2d8] sm:$0xff]
    %v2741 = vld [vmem:[#allocation6 + $0x2e0] sm:$0xff]
    %v2742 = vld [vmem:[#allocation6 + $0x2e8] sm:$0xff]
    %v2743 = vld [vmem:[#allocation6 + $0x2f0] sm:$0xff]
    %v2744 = vld [vmem:[#allocation6 + $0x2f8] sm:$0xff]
    %v2745 = vld [vmem:[#allocation6 + $0x300] sm:$0xff]
    %v2746 = vld [vmem:[#allocation6 + $0x308] sm:$0xff]
    %v2747 = vld [vmem:[#allocation6 + $0x310] sm:$0xff]
    %v2748 = vld [vmem:[#allocation6 + $0x318] sm:$0xff]
    %v2749 = vld [vmem:[#allocation6 + $0x320] sm:$0xff]
    %v2750 = vld [vmem:[#allocation6 + $0x328] sm:$0xff]
    %v2751 = vld [vmem:[#allocation6 + $0x330] sm:$0xff]
    %v2752 = vld [vmem:[#allocation6 + $0x338] sm:$0xff]
    %v2753 = vld [vmem:[#allocation6 + $0x340] sm:$0xff]
    %v2754 = vld [vmem:[#allocation6 + $0x348] sm:$0xff]
    %v2755 = vld [vmem:[#allocation6 + $0x350] sm:$0xff]
    %v2756 = vld [vmem:[#allocation6 + $0x358] sm:$0xff]
    %v2757 = vld [vmem:[#allocation6 + $0x360] sm:$0xff]
    %v2758 = vld [vmem:[#allocation6 + $0x368] sm:$0xff]
    %v2759 = vld [vmem:[#allocation6 + $0x370] sm:$0xff]
    %v2760 = vld [vmem:[#allocation6 + $0x378] sm:$0xff]
    %v2761 = vld [vmem:[#allocation6 + $0x380] sm:$0xff]
    %v2762 = vld [vmem:[#allocation6 + $0x388] sm:$0xff]
    %v2763 = vld [vmem:[#allocation6 + $0x390] sm:$0xff]
    %v2764 = vld [vmem:[#allocation6 + $0x398] sm:$0xff]
    %v2765 = vld [vmem:[#allocation6 + $0x3a0] sm:$0xff]
    %v2766 = vld [vmem:[#allocation6 + $0x3a8] sm:$0xff]
    %v2767 = vld [vmem:[#allocation6 + $0x3b0] sm:$0xff]
    %v2768 = vld [vmem:[#allocation6 + $0x3b8] sm:$0xff]
    %v2769 = vld [vmem:[#allocation6 + $0x3c0] sm:$0xff]
    %v2770 = vld [vmem:[#allocation6 + $0x3c8] sm:$0xff]
    %v2771 = vld [vmem:[#allocation6 + $0x3d0] sm:$0xff]
    %v2772 = vld [vmem:[#allocation6 + $0x3d8] sm:$0xff]
    %v2773 = vld [vmem:[#allocation6 + $0x3e0] sm:$0xff]
    %v2774 = vld [vmem:[#allocation6 + $0x3e8] sm:$0xff]
    %v2775 = vld [vmem:[#allocation6 + $0x3f0] sm:$0xff]
    %v2776 = vld [vmem:[#allocation6 + $0x3f8] sm:$0xff]
    %v2777 = vld [vmem:[#allocation6 + $0x400] sm:$0xff]
    %v2778 = vld [vmem:[#allocation6 + $0x408] sm:$0xff]
    %v2779 = vld [vmem:[#allocation6 + $0x410] sm:$0xff]
    %v2780 = vld [vmem:[#allocation6 + $0x418] sm:$0xff]
    %v2781 = vld [vmem:[#allocation6 + $0x420] sm:$0xff]
    %v2782 = vld [vmem:[#allocation6 + $0x428] sm:$0xff]
    %v2783 = vld [vmem:[#allocation6 + $0x430] sm:$0xff]
    %v2784 = vld [vmem:[#allocation6 + $0x438] sm:$0xff]
    %v2785 = vld [vmem:[#allocation6 + $0x440] sm:$0xff]
    %v2786 = vld [vmem:[#allocation6 + $0x448] sm:$0xff]
    %v2787 = vld [vmem:[#allocation6 + $0x450] sm:$0xff]
    %v2788 = vld [vmem:[#allocation6 + $0x458] sm:$0xff]
    %v2789 = vld [vmem:[#allocation6 + $0x460] sm:$0xff]
    %v2790 = vld [vmem:[#allocation6 + $0x468] sm:$0xff]
    %v2791 = vld [vmem:[#allocation6 + $0x470] sm:$0xff]
    %v2792 = vld [vmem:[#allocation6 + $0x478] sm:$0xff]
    %v2793 = vld [vmem:[#allocation6 + $0x480] sm:$0xff]
    %v2794 = vld [vmem:[#allocation6 + $0x488] sm:$0xff]
    %v2795 = vld [vmem:[#allocation6 + $0x490] sm:$0xff]
    %v2796 = vld [vmem:[#allocation6 + $0x498] sm:$0xff]
    %v2797 = vld [vmem:[#allocation6 + $0x4a0] sm:$0xff]
    %v2798 = vld [vmem:[#allocation6 + $0x4a8] sm:$0xff]
    %v2799 = vld [vmem:[#allocation6 + $0x4b0] sm:$0xff]
    %v2800 = vld [vmem:[#allocation6 + $0x4b8] sm:$0xff]
    %v2801 = vld [vmem:[#allocation6 + $0x4c0] sm:$0xff]
    %v2802 = vld [vmem:[#allocation6 + $0x4c8] sm:$0xff]
    %v2803 = vld [vmem:[#allocation6 + $0x4d0] sm:$0xff]
    %v2804 = vld [vmem:[#allocation6 + $0x4d8] sm:$0xff]
    %v2805 = vld [vmem:[#allocation6 + $0x4e0] sm:$0xff]
    %v2806 = vld [vmem:[#allocation6 + $0x4e8] sm:$0xff]
    %v2807 = vld [vmem:[#allocation6 + $0x4f0] sm:$0xff]
    %v2808 = vld [vmem:[#allocation6 + $0x4f8] sm:$0xff]
    %v2809 = vld [vmem:[#allocation6 + $0x500] sm:$0xff]
    %v2810 = vld [vmem:[#allocation6 + $0x508] sm:$0xff]
    %v2811 = vld [vmem:[#allocation6 + $0x510] sm:$0xff]
    %v2812 = vld [vmem:[#allocation6 + $0x518] sm:$0xff]
    %v2813 = vld [vmem:[#allocation6 + $0x520] sm:$0xff]
    %v2814 = vld [vmem:[#allocation6 + $0x528] sm:$0xff]
    %v2815 = vld [vmem:[#allocation6 + $0x530] sm:$0xff]
    %v2816 = vld [vmem:[#allocation6 + $0x538] sm:$0xff]
    %v2817 = vld [vmem:[#allocation6 + $0x540] sm:$0xff]
    %v2818 = vld [vmem:[#allocation6 + $0x548] sm:$0xff]
    %v2819 = vld [vmem:[#allocation6 + $0x550] sm:$0xff]
    %v2820 = vld [vmem:[#allocation6 + $0x558] sm:$0xff]
    %v2821 = vld [vmem:[#allocation6 + $0x560] sm:$0xff]
    %v2822 = vld [vmem:[#allocation6 + $0x568] sm:$0xff]
    %v2823 = vld [vmem:[#allocation6 + $0x570] sm:$0xff]
    %v2824 = vld [vmem:[#allocation6 + $0x578] sm:$0xff]
    %v2825 = vld [vmem:[#allocation6 + $0x580] sm:$0xff]
    %v2826 = vld [vmem:[#allocation6 + $0x588] sm:$0xff]
    %v2827 = vld [vmem:[#allocation6 + $0x590] sm:$0xff]
    %v2828 = vld [vmem:[#allocation6 + $0x598] sm:$0xff]
    %v2829 = vld [vmem:[#allocation6 + $0x5a0] sm:$0xff]
    %v2830 = vld [vmem:[#allocation6 + $0x5a8] sm:$0xff]
    %v2831 = vld [vmem:[#allocation6 + $0x5b0] sm:$0xff]
    %v2832 = vld [vmem:[#allocation6 + $0x5b8] sm:$0xff]
    %v2833 = vld [vmem:[#allocation6 + $0x5c0] sm:$0xff]
    %v2834 = vld [vmem:[#allocation6 + $0x5c8] sm:$0xff]
    %v2835 = vld [vmem:[#allocation6 + $0x5d0] sm:$0xff]
    %v2836 = vld [vmem:[#allocation6 + $0x5d8] sm:$0xff]
    %v2837 = vld [vmem:[#allocation6 + $0x5e0] sm:$0xff]
    %v2838 = vld [vmem:[#allocation6 + $0x5e8] sm:$0xff]
    %v2839 = vld [vmem:[#allocation6 + $0x5f0] sm:$0xff]
    %v2840 = vld [vmem:[#allocation6 + $0x5f8] sm:$0xff]
    %v2841 = vld [vmem:[#allocation6 + $0x600] sm:$0xff]
    %v2842 = vld [vmem:[#allocation6 + $0x608] sm:$0xff]
    %v2843 = vld [vmem:[#allocation6 + $0x610] sm:$0xff]
    %v2844 = vld [vmem:[#allocation6 + $0x618] sm:$0xff]
    %v2845 = vld [vmem:[#allocation6 + $0x620] sm:$0xff]
    %v2846 = vld [vmem:[#allocation6 + $0x628] sm:$0xff]
    %v2847 = vld [vmem:[#allocation6 + $0x630] sm:$0xff]
    %v2848 = vld [vmem:[#allocation6 + $0x638] sm:$0xff]
    %v2849 = vld [vmem:[#allocation6 + $0x640] sm:$0xff]
    %v2850 = vld [vmem:[#allocation6 + $0x648] sm:$0xff]
    %v2851 = vld [vmem:[#allocation6 + $0x650] sm:$0xff]
    %v2852 = vld [vmem:[#allocation6 + $0x658] sm:$0xff]
    %v2853 = vld [vmem:[#allocation6 + $0x660] sm:$0xff]
    %v2854 = vld [vmem:[#allocation6 + $0x668] sm:$0xff]
    %v2855 = vld [vmem:[#allocation6 + $0x670] sm:$0xff]
    %v2856 = vld [vmem:[#allocation6 + $0x678] sm:$0xff]
    %v2857 = vld [vmem:[#allocation6 + $0x680] sm:$0xff]
    %v2858 = vld [vmem:[#allocation6 + $0x688] sm:$0xff]
    %v2859 = vld [vmem:[#allocation6 + $0x690] sm:$0xff]
    %v2860 = vld [vmem:[#allocation6 + $0x698] sm:$0xff]
    %v2861 = vld [vmem:[#allocation6 + $0x6a0] sm:$0xff]
    %v2862 = vld [vmem:[#allocation6 + $0x6a8] sm:$0xff]
    %v2863 = vld [vmem:[#allocation6 + $0x6b0] sm:$0xff]
    %v2864 = vld [vmem:[#allocation6 + $0x6b8] sm:$0xff]
    %v2865 = vld [vmem:[#allocation6 + $0x6c0] sm:$0xff]
    %v2866 = vld [vmem:[#allocation6 + $0x6c8] sm:$0xff]
    %v2867 = vld [vmem:[#allocation6 + $0x6d0] sm:$0xff]
    %v2868 = vld [vmem:[#allocation6 + $0x6d8] sm:$0xff]
    %v2869 = vld [vmem:[#allocation6 + $0x6e0] sm:$0xff]
    %v2870 = vld [vmem:[#allocation6 + $0x6e8] sm:$0xff]
    %v2871 = vld [vmem:[#allocation6 + $0x6f0] sm:$0xff]
    %v2872 = vld [vmem:[#allocation6 + $0x6f8] sm:$0xff]
    %v2873 = vld [vmem:[#allocation6 + $0x700] sm:$0xff]
    %v2874 = vld [vmem:[#allocation6 + $0x708] sm:$0xff]
    %v2875 = vld [vmem:[#allocation6 + $0x710] sm:$0xff]
    %v2876 = vld [vmem:[#allocation6 + $0x718] sm:$0xff]
    %v2877 = vld [vmem:[#allocation6 + $0x720] sm:$0xff]
    %v2878 = vld [vmem:[#allocation6 + $0x728] sm:$0xff]
    %v2879 = vld [vmem:[#allocation6 + $0x730] sm:$0xff]
    %v2880 = vld [vmem:[#allocation6 + $0x738] sm:$0xff]
    %v2881 = vld [vmem:[#allocation6 + $0x740] sm:$0xff]
    %v2882 = vld [vmem:[#allocation6 + $0x748] sm:$0xff]
    %v2883 = vld [vmem:[#allocation6 + $0x750] sm:$0xff]
    %v2884 = vld [vmem:[#allocation6 + $0x758] sm:$0xff]
    %v2885 = vld [vmem:[#allocation6 + $0x760] sm:$0xff]
    %v2886 = vld [vmem:[#allocation6 + $0x768] sm:$0xff]
    %v2887 = vld [vmem:[#allocation6 + $0x770] sm:$0xff]
    %v2888 = vld [vmem:[#allocation6 + $0x778] sm:$0xff]
    %v2889 = vld [vmem:[#allocation6 + $0x780] sm:$0xff]
    %v2890 = vld [vmem:[#allocation6 + $0x788] sm:$0xff]
    %v2891 = vld [vmem:[#allocation6 + $0x790] sm:$0xff]
    %v2892 = vld [vmem:[#allocation6 + $0x798] sm:$0xff]
    %v2893 = vld [vmem:[#allocation6 + $0x7a0] sm:$0xff]
    %v2894 = vld [vmem:[#allocation6 + $0x7a8] sm:$0xff]
    %v2895 = vld [vmem:[#allocation6 + $0x7b0] sm:$0xff]
    %v2896 = vld [vmem:[#allocation6 + $0x7b8] sm:$0xff]
    %v2897 = vld [vmem:[#allocation6 + $0x7c0] sm:$0xff]
    %v2898 = vld [vmem:[#allocation6 + $0x7c8] sm:$0xff]
    %v2899 = vld [vmem:[#allocation6 + $0x7d0] sm:$0xff]
    %v2900 = vld [vmem:[#allocation6 + $0x7d8] sm:$0xff]
    %v2901 = vld [vmem:[#allocation6 + $0x7e0] sm:$0xff]
    %v2902 = vld [vmem:[#allocation6 + $0x7e8] sm:$0xff]
    %v2903 = vld [vmem:[#allocation6 + $0x7f0] sm:$0xff]
    %v2904 = vld [vmem:[#allocation6 + $0x7f8] sm:$0xff]
    %v2905 = vld [vmem:[#allocation6 + $0x800] sm:$0xff]
    %v2906 = vld [vmem:[#allocation6 + $0x808] sm:$0xff]
    %v2907 = vld [vmem:[#allocation6 + $0x810] sm:$0xff]
    %v2908 = vld [vmem:[#allocation6 + $0x818] sm:$0xff]
    %v2909 = vld [vmem:[#allocation6 + $0x820] sm:$0xff]
    %v2910 = vld [vmem:[#allocation6 + $0x828] sm:$0xff]
    %v2911 = vld [vmem:[#allocation6 + $0x830] sm:$0xff]
    %v2912 = vld [vmem:[#allocation6 + $0x838] sm:$0xff]
    %v2913 = vld [vmem:[#allocation6 + $0x840] sm:$0xff]
    %v2914 = vld [vmem:[#allocation6 + $0x848] sm:$0xff]
    %v2915 = vld [vmem:[#allocation6 + $0x850] sm:$0xff]
    %v2916 = vld [vmem:[#allocation6 + $0x858] sm:$0xff]
    %v2917 = vld [vmem:[#allocation6 + $0x860] sm:$0xff]
    %v2918 = vld [vmem:[#allocation6 + $0x868] sm:$0xff]
    %v2919 = vld [vmem:[#allocation6 + $0x870] sm:$0xff]
    %v2920 = vld [vmem:[#allocation6 + $0x878] sm:$0xff]
    %v2921 = vld [vmem:[#allocation6 + $0x880] sm:$0xff]
    %v2922 = vld [vmem:[#allocation6 + $0x888] sm:$0xff]
    %v2923 = vld [vmem:[#allocation6 + $0x890] sm:$0xff]
    %v2924 = vld [vmem:[#allocation6 + $0x898] sm:$0xff]
    %v2925 = vld [vmem:[#allocation6 + $0x8a0] sm:$0xff]
    %v2926 = vld [vmem:[#allocation6 + $0x8a8] sm:$0xff]
    %v2927 = vld [vmem:[#allocation6 + $0x8b0] sm:$0xff]
    %v2928 = vld [vmem:[#allocation6 + $0x8b8] sm:$0xff]
    %v2929 = vld [vmem:[#allocation6 + $0x8c0] sm:$0xff]
    %v2930 = vld [vmem:[#allocation6 + $0x8c8] sm:$0xff]
    %v2931 = vld [vmem:[#allocation6 + $0x8d0] sm:$0xff]
    %v2932 = vld [vmem:[#allocation6 + $0x8d8] sm:$0xff]
    %v2933 = vld [vmem:[#allocation6 + $0x8e0] sm:$0xff]
    %v2934 = vld [vmem:[#allocation6 + $0x8e8] sm:$0xff]
    %v2935 = vld [vmem:[#allocation6 + $0x8f0] sm:$0xff]
    %v2936 = vld [vmem:[#allocation6 + $0x8f8] sm:$0xff]
    %v2937 = vld [vmem:[#allocation6 + $0x900] sm:$0xff]
    %v2938 = vld [vmem:[#allocation6 + $0x908] sm:$0xff]
    %v2939 = vld [vmem:[#allocation6 + $0x910] sm:$0xff]
    %v2940 = vld [vmem:[#allocation6 + $0x918] sm:$0xff]
    %v2941 = vld [vmem:[#allocation6 + $0x920] sm:$0xff]
    %v2942 = vld [vmem:[#allocation6 + $0x928] sm:$0xff]
    %v2943 = vld [vmem:[#allocation6 + $0x930] sm:$0xff]
    %v2944 = vld [vmem:[#allocation6 + $0x938] sm:$0xff]
    %v2945 = vld [vmem:[#allocation6 + $0x940] sm:$0xff]
    %v2946 = vld [vmem:[#allocation6 + $0x948] sm:$0xff]
    %v2947 = vld [vmem:[#allocation6 + $0x950] sm:$0xff]
    %v2948 = vld [vmem:[#allocation6 + $0x958] sm:$0xff]
    %v2949 = vld [vmem:[#allocation6 + $0x960] sm:$0xff]
    %v2950 = vld [vmem:[#allocation6 + $0x968] sm:$0xff]
    %v2951 = vld [vmem:[#allocation6 + $0x970] sm:$0xff]
    %v2952 = vld [vmem:[#allocation6 + $0x978] sm:$0xff]
    %v2953 = vld [vmem:[#allocation6 + $0x980] sm:$0xff]
    %v2954 = vld [vmem:[#allocation6 + $0x988] sm:$0xff]
    %v2955 = vld [vmem:[#allocation6 + $0x990] sm:$0xff]
    %v2956 = vld [vmem:[#allocation6 + $0x998] sm:$0xff]
    %v2957 = vld [vmem:[#allocation6 + $0x9a0] sm:$0xff]
    %v2958 = vld [vmem:[#allocation6 + $0x9a8] sm:$0xff]
    %v2959 = vld [vmem:[#allocation6 + $0x9b0] sm:$0xff]
    %v2960 = vld [vmem:[#allocation6 + $0x9b8] sm:$0xff]
    %v2961 = vld [vmem:[#allocation6 + $0x9c0] sm:$0xff]
    %v2962 = vld [vmem:[#allocation6 + $0x9c8] sm:$0xff]
    %v2963 = vld [vmem:[#allocation6 + $0x9d0] sm:$0xff]
    %v2964 = vld [vmem:[#allocation6 + $0x9d8] sm:$0xff]
    %v2965 = vld [vmem:[#allocation6 + $0x9e0] sm:$0xff]
    %v2966 = vld [vmem:[#allocation6 + $0x9e8] sm:$0xff]
    %v2967 = vld [vmem:[#allocation6 + $0x9f0] sm:$0xff]
    %v2968 = vld [vmem:[#allocation6 + $0x9f8] sm:$0xff]
    %v2969 = vld [vmem:[#allocation6 + $0xa00] sm:$0xff]
    %v2970 = vld [vmem:[#allocation6 + $0xa08] sm:$0xff]
    %v2971 = vld [vmem:[#allocation6 + $0xa10] sm:$0xff]
    %v2972 = vld [vmem:[#allocation6 + $0xa18] sm:$0xff]
    %v2973 = vld [vmem:[#allocation6 + $0xa20] sm:$0xff]
    %v2974 = vld [vmem:[#allocation6 + $0xa28] sm:$0xff]
    %v2975 = vld [vmem:[#allocation6 + $0xa30] sm:$0xff]
    %v2976 = vld [vmem:[#allocation6 + $0xa38] sm:$0xff]
    %v2977 = vld [vmem:[#allocation6 + $0xa40] sm:$0xff]
    %v2978 = vld [vmem:[#allocation6 + $0xa48] sm:$0xff]
    %v2979 = vld [vmem:[#allocation6 + $0xa50] sm:$0xff]
    %v2980 = vld [vmem:[#allocation6 + $0xa58] sm:$0xff]
    %v2981 = vld [vmem:[#allocation6 + $0xa60] sm:$0xff]
    %v2982 = vld [vmem:[#allocation6 + $0xa68] sm:$0xff]
    %v2983 = vld [vmem:[#allocation6 + $0xa70] sm:$0xff]
    %v2984 = vld [vmem:[#allocation6 + $0xa78] sm:$0xff]
    %v2985 = vld [vmem:[#allocation6 + $0xa80] sm:$0xff]
    %v2986 = vld [vmem:[#allocation6 + $0xa88] sm:$0xff]
    %v2987 = vld [vmem:[#allocation6 + $0xa90] sm:$0xff]
    %v2988 = vld [vmem:[#allocation6 + $0xa98] sm:$0xff]
    %v2989 = vld [vmem:[#allocation6 + $0xaa0] sm:$0xff]
    %v2990 = vld [vmem:[#allocation6 + $0xaa8] sm:$0xff]
    %v2991 = vld [vmem:[#allocation6 + $0xab0] sm:$0xff]
    %v2992 = vld [vmem:[#allocation6 + $0xab8] sm:$0xff]
    %v2993 = vld [vmem:[#allocation6 + $0xac0] sm:$0xff]
    %v2994 = vld [vmem:[#allocation6 + $0xac8] sm:$0xff]
    %v2995 = vld [vmem:[#allocation6 + $0xad0] sm:$0xff]
    %v2996 = vld [vmem:[#allocation6 + $0xad8] sm:$0xff]
    %v2997 = vld [vmem:[#allocation6 + $0xae0] sm:$0xff]
    %v2998 = vld [vmem:[#allocation6 + $0xae8] sm:$0xff]
    %v2999 = vld [vmem:[#allocation6 + $0xaf0] sm:$0xff]
    %v3000 = vld [vmem:[#allocation6 + $0xaf8] sm:$0xff]
    %v3001 = vld [vmem:[#allocation6 + $0xb00] sm:$0xff]
    %v3002 = vld [vmem:[#allocation6 + $0xb08] sm:$0xff]
    %v3003 = vld [vmem:[#allocation6 + $0xb10] sm:$0xff]
    %v3004 = vld [vmem:[#allocation6 + $0xb18] sm:$0xff]
    %v3005 = vld [vmem:[#allocation6 + $0xb20] sm:$0xff]
    %v3006 = vld [vmem:[#allocation6 + $0xb28] sm:$0xff]
    %v3007 = vld [vmem:[#allocation6 + $0xb30] sm:$0xff]
    %v3008 = vld [vmem:[#allocation6 + $0xb38] sm:$0xff]
    %v3009 = vld [vmem:[#allocation6 + $0xb40] sm:$0xff]
    %v3010 = vld [vmem:[#allocation6 + $0xb48] sm:$0xff]
    %v3011 = vld [vmem:[#allocation6 + $0xb50] sm:$0xff]
    %v3012 = vld [vmem:[#allocation6 + $0xb58] sm:$0xff]
    %v3013 = vld [vmem:[#allocation6 + $0xb60] sm:$0xff]
    %v3014 = vld [vmem:[#allocation6 + $0xb68] sm:$0xff]
    %v3015 = vld [vmem:[#allocation6 + $0xb70] sm:$0xff]
    %v3016 = vld [vmem:[#allocation6 + $0xb78] sm:$0xff]
    %v3017 = vld [vmem:[#allocation6 + $0xb80] sm:$0xff]
    %v3018 = vld [vmem:[#allocation6 + $0xb88] sm:$0xff]
    %v3019 = vld [vmem:[#allocation6 + $0xb90] sm:$0xff]
    %v3020 = vld [vmem:[#allocation6 + $0xb98] sm:$0xff]
    %v3021 = vld [vmem:[#allocation6 + $0xba0] sm:$0xff]
    %v3022 = vld [vmem:[#allocation6 + $0xba8] sm:$0xff]
    %v3023 = vld [vmem:[#allocation6 + $0xbb0] sm:$0xff]
    %v3024 = vld [vmem:[#allocation6 + $0xbb8] sm:$0xff]
    %v3025 = vld [vmem:[#allocation6 + $0xbc0] sm:$0xff]
    %v3026 = vld [vmem:[#allocation6 + $0xbc8] sm:$0xff]
    %v3027 = vld [vmem:[#allocation6 + $0xbd0] sm:$0xff]
    %v3028 = vld [vmem:[#allocation6 + $0xbd8] sm:$0xff]
    %v3029 = vld [vmem:[#allocation6 + $0xbe0] sm:$0xff]
    %v3030 = vld [vmem:[#allocation6 + $0xbe8] sm:$0xff]
    %v3031 = vld [vmem:[#allocation6 + $0xbf0] sm:$0xff]
    %v3032 = vld [vmem:[#allocation6 + $0xbf8] sm:$0xff]
    %v3033 = vld [vmem:[#allocation6 + $0xc00] sm:$0xff]
    %v3034 = vld [vmem:[#allocation6 + $0xc08] sm:$0xff]
    %v3035 = vld [vmem:[#allocation6 + $0xc10] sm:$0xff]
    %v3036 = vld [vmem:[#allocation6 + $0xc18] sm:$0xff]
    %v3037 = vld [vmem:[#allocation6 + $0xc20] sm:$0xff]
    %v3038 = vld [vmem:[#allocation6 + $0xc28] sm:$0xff]
    %v3039 = vld [vmem:[#allocation6 + $0xc30] sm:$0xff]
    %v3040 = vld [vmem:[#allocation6 + $0xc38] sm:$0xff]
    %v3041 = vld [vmem:[#allocation6 + $0xc40] sm:$0xff]
    %v3042 = vld [vmem:[#allocation6 + $0xc48] sm:$0xff]
    %v3043 = vld [vmem:[#allocation6 + $0xc50] sm:$0xff]
    %v3044 = vld [vmem:[#allocation6 + $0xc58] sm:$0xff]
    %v3045 = vld [vmem:[#allocation6 + $0xc60] sm:$0xff]
    %v3046 = vld [vmem:[#allocation6 + $0xc68] sm:$0xff]
    %v3047 = vld [vmem:[#allocation6 + $0xc70] sm:$0xff]
    %v3048 = vld [vmem:[#allocation6 + $0xc78] sm:$0xff]
    %v3049 = vld [vmem:[#allocation6 + $0xc80] sm:$0xff]
    %v3050 = vld [vmem:[#allocation6 + $0xc88] sm:$0xff]
    %v3051 = vld [vmem:[#allocation6 + $0xc90] sm:$0xff]
    %v3052 = vld [vmem:[#allocation6 + $0xc98] sm:$0xff]
    %v3053 = vld [vmem:[#allocation6 + $0xca0] sm:$0xff]
    %v3054 = vld [vmem:[#allocation6 + $0xca8] sm:$0xff]
    %v3055 = vld [vmem:[#allocation6 + $0xcb0] sm:$0xff]
    %v3056 = vld [vmem:[#allocation6 + $0xcb8] sm:$0xff]
    %v3057 = vld [vmem:[#allocation6 + $0xcc0] sm:$0xff]
    %v3058 = vld [vmem:[#allocation6 + $0xcc8] sm:$0xff]
    %v3059 = vld [vmem:[#allocation6 + $0xcd0] sm:$0xff]
    %v3060 = vld [vmem:[#allocation6 + $0xcd8] sm:$0xff]
    %v3061 = vld [vmem:[#allocation6 + $0xce0] sm:$0xff]
    %v3062 = vld [vmem:[#allocation6 + $0xce8] sm:$0xff]
    %v3063 = vld [vmem:[#allocation6 + $0xcf0] sm:$0xff]
    %v3064 = vld [vmem:[#allocation6 + $0xcf8] sm:$0xff]
    %v3065 = vld [vmem:[#allocation6 + $0xd00] sm:$0xff]
    %v3066 = vld [vmem:[#allocation6 + $0xd08] sm:$0xff]
    %v3067 = vld [vmem:[#allocation6 + $0xd10] sm:$0xff]
    %v3068 = vld [vmem:[#allocation6 + $0xd18] sm:$0xff]
    %v3069 = vld [vmem:[#allocation6 + $0xd20] sm:$0xff]
    %v3070 = vld [vmem:[#allocation6 + $0xd28] sm:$0xff]
    %v3071 = vld [vmem:[#allocation6 + $0xd30] sm:$0xff]
    %v3072 = vld [vmem:[#allocation6 + $0xd38] sm:$0xff]
    %v3073 = vld [vmem:[#allocation6 + $0xd40] sm:$0xff]
    %v3074 = vld [vmem:[#allocation6 + $0xd48] sm:$0xff]
    %v3075 = vld [vmem:[#allocation6 + $0xd50] sm:$0xff]
    %v3076 = vld [vmem:[#allocation6 + $0xd58] sm:$0xff]
    %v3077 = vld [vmem:[#allocation6 + $0xd60] sm:$0xff]
    %v3078 = vld [vmem:[#allocation6 + $0xd68] sm:$0xff]
    %v3079 = vld [vmem:[#allocation6 + $0xd70] sm:$0xff]
    %v3080 = vld [vmem:[#allocation6 + $0xd78] sm:$0xff]
    %v3081 = vld [vmem:[#allocation6 + $0xd80] sm:$0xff]
    %v3082 = vld [vmem:[#allocation6 + $0xd88] sm:$0xff]
    %v3083 = vld [vmem:[#allocation6 + $0xd90] sm:$0xff]
    %v3084 = vld [vmem:[#allocation6 + $0xd98] sm:$0xff]
    %v3085 = vld [vmem:[#allocation6 + $0xda0] sm:$0xff]
    %v3086 = vld [vmem:[#allocation6 + $0xda8] sm:$0xff]
    %v3087 = vld [vmem:[#allocation6 + $0xdb0] sm:$0xff]
    %v3088 = vld [vmem:[#allocation6 + $0xdb8] sm:$0xff]
    %v3089 = vld [vmem:[#allocation6 + $0xdc0] sm:$0xff]
    %v3090 = vld [vmem:[#allocation6 + $0xdc8] sm:$0xff]
    %v3091 = vld [vmem:[#allocation6 + $0xdd0] sm:$0xff]
    %v3092 = vld [vmem:[#allocation6 + $0xdd8] sm:$0xff]
    %v3093 = vld [vmem:[#allocation6 + $0xde0] sm:$0xff]
    %v3094 = vld [vmem:[#allocation6 + $0xde8] sm:$0xff]
    %v3095 = vld [vmem:[#allocation6 + $0xdf0] sm:$0xff]
    %v3096 = vld [vmem:[#allocation6 + $0xdf8] sm:$0xff]
    %v3097 = vld [vmem:[#allocation6 + $0xe00] sm:$0xff]
    %v3098 = vld [vmem:[#allocation6 + $0xe08] sm:$0xff]
    %v3099 = vld [vmem:[#allocation6 + $0xe10] sm:$0xff]
    %v3100 = vld [vmem:[#allocation6 + $0xe18] sm:$0xff]
    %v3101 = vld [vmem:[#allocation6 + $0xe20] sm:$0xff]
    %v3102 = vld [vmem:[#allocation6 + $0xe28] sm:$0xff]
    %v3103 = vld [vmem:[#allocation6 + $0xe30] sm:$0xff]
    %v3104 = vld [vmem:[#allocation6 + $0xe38] sm:$0xff]
    %v3105 = vld [vmem:[#allocation6 + $0xe40] sm:$0xff]
    %v3106 = vld [vmem:[#allocation6 + $0xe48] sm:$0xff]
    %v3107 = vld [vmem:[#allocation6 + $0xe50] sm:$0xff]
    %v3108 = vld [vmem:[#allocation6 + $0xe58] sm:$0xff]
    %v3109 = vld [vmem:[#allocation6 + $0xe60] sm:$0xff]
    %v3110 = vld [vmem:[#allocation6 + $0xe68] sm:$0xff]
    %v3111 = vld [vmem:[#allocation6 + $0xe70] sm:$0xff]
    %v3112 = vld [vmem:[#allocation6 + $0xe78] sm:$0xff]
    %v3113 = vld [vmem:[#allocation6 + $0xe80] sm:$0xff]
    %v3114 = vld [vmem:[#allocation6 + $0xe88] sm:$0xff]
    %v3115 = vld [vmem:[#allocation6 + $0xe90] sm:$0xff]
    %v3116 = vld [vmem:[#allocation6 + $0xe98] sm:$0xff]
    %v3117 = vld [vmem:[#allocation6 + $0xea0] sm:$0xff]
    %v3118 = vld [vmem:[#allocation6 + $0xea8] sm:$0xff]
    %v3119 = vld [vmem:[#allocation6 + $0xeb0] sm:$0xff]
    %v3120 = vld [vmem:[#allocation6 + $0xeb8] sm:$0xff]
    %v3121 = vld [vmem:[#allocation6 + $0xec0] sm:$0xff]
    %v3122 = vld [vmem:[#allocation6 + $0xec8] sm:$0xff]
    %v3123 = vld [vmem:[#allocation6 + $0xed0] sm:$0xff]
    %v3124 = vld [vmem:[#allocation6 + $0xed8] sm:$0xff]
    %v3125 = vld [vmem:[#allocation6 + $0xee0] sm:$0xff]
    %v3126 = vld [vmem:[#allocation6 + $0xee8] sm:$0xff]
    %v3127 = vld [vmem:[#allocation6 + $0xef0] sm:$0xff]
    %v3128 = vld [vmem:[#allocation6 + $0xef8] sm:$0xff]
    %v3129 = vld [vmem:[#allocation6 + $0xf00] sm:$0xff]
    %v3130 = vld [vmem:[#allocation6 + $0xf08] sm:$0xff]
    %v3131 = vld [vmem:[#allocation6 + $0xf10] sm:$0xff]
    %v3132 = vld [vmem:[#allocation6 + $0xf18] sm:$0xff]
    %v3133 = vld [vmem:[#allocation6 + $0xf20] sm:$0xff]
    %v3134 = vld [vmem:[#allocation6 + $0xf28] sm:$0xff]
    %v3135 = vld [vmem:[#allocation6 + $0xf30] sm:$0xff]
    %v3136 = vld [vmem:[#allocation6 + $0xf38] sm:$0xff]
    %v3137 = vld [vmem:[#allocation6 + $0xf40] sm:$0xff]
    %v3138 = vld [vmem:[#allocation6 + $0xf48] sm:$0xff]
    %v3139 = vld [vmem:[#allocation6 + $0xf50] sm:$0xff]
    %v3140 = vld [vmem:[#allocation6 + $0xf58] sm:$0xff]
    %v3141 = vld [vmem:[#allocation6 + $0xf60] sm:$0xff]
    %v3142 = vld [vmem:[#allocation6 + $0xf68] sm:$0xff]
    %v3143 = vld [vmem:[#allocation6 + $0xf70] sm:$0xff]
    %v3144 = vld [vmem:[#allocation6 + $0xf78] sm:$0xff]
    %v3145 = vld [vmem:[#allocation6 + $0xf80] sm:$0xff]
    %v3146 = vld [vmem:[#allocation6 + $0xf88] sm:$0xff]
    %v3147 = vld [vmem:[#allocation6 + $0xf90] sm:$0xff]
    %v3148 = vld [vmem:[#allocation6 + $0xf98] sm:$0xff]
    %v3149 = vld [vmem:[#allocation6 + $0xfa0] sm:$0xff]
    %v3150 = vld [vmem:[#allocation6 + $0xfa8] sm:$0xff]
    %v3151 = vld [vmem:[#allocation6 + $0xfb0] sm:$0xff]
    %v3152 = vld [vmem:[#allocation6 + $0xfb8] sm:$0xff]
    %v3153 = vld [vmem:[#allocation6 + $0xfc0] sm:$0xff]
    %v3154 = vld [vmem:[#allocation6 + $0xfc8] sm:$0xff]
    %v3155 = vld [vmem:[#allocation6 + $0xfd0] sm:$0xff]
    %v3156 = vld [vmem:[#allocation6 + $0xfd8] sm:$0xff]
    %v3157 = vld [vmem:[#allocation6 + $0xfe0] sm:$0xff]
    %v3158 = vld [vmem:[#allocation6 + $0xfe8] sm:$0xff]
    %v3159 = vld [vmem:[#allocation6 + $0xff0] sm:$0xff]
    %v3160 = vld [vmem:[#allocation6 + $0xff8] sm:$0xff]
    %v3161 = vld [vmem:[#allocation6 + $0x1000] sm:$0xff]
    %v3162 = vld [vmem:[#allocation6 + $0x1008] sm:$0xff]
    %v3163 = vld [vmem:[#allocation6 + $0x1010] sm:$0xff]
    %v3164 = vld [vmem:[#allocation6 + $0x1018] sm:$0xff]
    %v3165 = vld [vmem:[#allocation6 + $0x1020] sm:$0xff]
    %v3166 = vld [vmem:[#allocation6 + $0x1028] sm:$0xff]
    %v3167 = vld [vmem:[#allocation6 + $0x1030] sm:$0xff]
    %v3168 = vld [vmem:[#allocation6 + $0x1038] sm:$0xff]
    %v3169 = vld [vmem:[#allocation6 + $0x1040] sm:$0xff]
    %v3170 = vld [vmem:[#allocation6 + $0x1048] sm:$0xff]
    %v3171 = vld [vmem:[#allocation6 + $0x1050] sm:$0xff]
    %v3172 = vld [vmem:[#allocation6 + $0x1058] sm:$0xff]
    %v3173 = vld [vmem:[#allocation6 + $0x1060] sm:$0xff]
    %v3174 = vld [vmem:[#allocation6 + $0x1068] sm:$0xff]
    %v3175 = vld [vmem:[#allocation6 + $0x1070] sm:$0xff]
    %v3176 = vld [vmem:[#allocation6 + $0x1078] sm:$0xff]
    %v3177 = vld [vmem:[#allocation6 + $0x1080] sm:$0xff]
    %v3178 = vld [vmem:[#allocation6 + $0x1088] sm:$0xff]
    %v3179 = vld [vmem:[#allocation6 + $0x1090] sm:$0xff]
    %v3180 = vld [vmem:[#allocation6 + $0x1098] sm:$0xff]
    %v3181 = vld [vmem:[#allocation6 + $0x10a0] sm:$0xff]
    %v3182 = vld [vmem:[#allocation6 + $0x10a8] sm:$0xff]
    %v3183 = vld [vmem:[#allocation6 + $0x10b0] sm:$0xff]
    %v3184 = vld [vmem:[#allocation6 + $0x10b8] sm:$0xff]
    %v3185 = vld [vmem:[#allocation6 + $0x10c0] sm:$0xff]
    %v3186 = vld [vmem:[#allocation6 + $0x10c8] sm:$0xff]
    %v3187 = vld [vmem:[#allocation6 + $0x10d0] sm:$0xff]
    %v3188 = vld [vmem:[#allocation6 + $0x10d8] sm:$0xff]
    %v3189 = vld [vmem:[#allocation6 + $0x10e0] sm:$0xff]
    %v3190 = vld [vmem:[#allocation6 + $0x10e8] sm:$0xff]
    %v3191 = vld [vmem:[#allocation6 + $0x10f0] sm:$0xff]
    %v3192 = vld [vmem:[#allocation6 + $0x10f8] sm:$0xff]
    %v3193 = vld [vmem:[#allocation6 + $0x1100] sm:$0xff]
    %v3194 = vld [vmem:[#allocation6 + $0x1108] sm:$0xff]
    %v3195 = vld [vmem:[#allocation6 + $0x1110] sm:$0xff]
    %v3196 = vld [vmem:[#allocation6 + $0x1118] sm:$0xff]
    %v3197 = vld [vmem:[#allocation6 + $0x1120] sm:$0xff]
    %v3198 = vld [vmem:[#allocation6 + $0x1128] sm:$0xff]
    %v3199 = vld [vmem:[#allocation6 + $0x1130] sm:$0xff]
    %v3200 = vld [vmem:[#allocation6 + $0x1138] sm:$0xff]
    %v3201 = vld [vmem:[#allocation6 + $0x1140] sm:$0xff]
    %v3202 = vld [vmem:[#allocation6 + $0x1148] sm:$0xff]
    %v3203 = vld [vmem:[#allocation6 + $0x1150] sm:$0xff]
    %v3204 = vld [vmem:[#allocation6 + $0x1158] sm:$0xff]
    %v3205 = vld [vmem:[#allocation6 + $0x1160] sm:$0xff]
    %v3206 = vld [vmem:[#allocation6 + $0x1168] sm:$0xff]
    %v3207 = vld [vmem:[#allocation6 + $0x1170] sm:$0xff]
    %v3208 = vld [vmem:[#allocation6 + $0x1178] sm:$0xff]
    %v3209 = vld [vmem:[#allocation6 + $0x1180] sm:$0xff]
    %v3210 = vld [vmem:[#allocation6 + $0x1188] sm:$0xff]
    %v3211 = vld [vmem:[#allocation6 + $0x1190] sm:$0xff]
    %v3212 = vld [vmem:[#allocation6 + $0x1198] sm:$0xff]
    %v3213 = vld [vmem:[#allocation6 + $0x11a0] sm:$0xff]
    %v3214 = vld [vmem:[#allocation6 + $0x11a8] sm:$0xff]
    %v3215 = vld [vmem:[#allocation6 + $0x11b0] sm:$0xff]
    %v3216 = vld [vmem:[#allocation6 + $0x11b8] sm:$0xff]
    %v3217 = vld [vmem:[#allocation6 + $0x11c0] sm:$0xff]
    %v3218 = vld [vmem:[#allocation6 + $0x11c8] sm:$0xff]
    %v3219 = vld [vmem:[#allocation6 + $0x11d0] sm:$0xff]
    %v3220 = vld [vmem:[#allocation6 + $0x11d8] sm:$0xff]
    %v3221 = vld [vmem:[#allocation6 + $0x11e0] sm:$0xff]
    %v3222 = vld [vmem:[#allocation6 + $0x11e8] sm:$0xff]
    %v3223 = vld [vmem:[#allocation6 + $0x11f0] sm:$0xff]
    %v3224 = vld [vmem:[#allocation6 + $0x11f8] sm:$0xff]
    %v3225 = vld [vmem:[#allocation6 + $0x1200] sm:$0xff]
    %v3226 = vld [vmem:[#allocation6 + $0x1208] sm:$0xff]
    %v3227 = vld [vmem:[#allocation6 + $0x1210] sm:$0xff]
    %v3228 = vld [vmem:[#allocation6 + $0x1218] sm:$0xff]
    %v3229 = vld [vmem:[#allocation6 + $0x1220] sm:$0xff]
    %v3230 = vld [vmem:[#allocation6 + $0x1228] sm:$0xff]
    %v3231 = vld [vmem:[#allocation6 + $0x1230] sm:$0xff]
    %v3232 = vld [vmem:[#allocation6 + $0x1238] sm:$0xff]
    %v3233 = vld [vmem:[#allocation6 + $0x1240] sm:$0xff]
    %v3234 = vld [vmem:[#allocation6 + $0x1248] sm:$0xff]
    %v3235 = vld [vmem:[#allocation6 + $0x1250] sm:$0xff]
    %v3236 = vld [vmem:[#allocation6 + $0x1258] sm:$0xff]
    %v3237 = vld [vmem:[#allocation6 + $0x1260] sm:$0xff]
    %v3238 = vld [vmem:[#allocation6 + $0x1268] sm:$0xff]
    %v3239 = vld [vmem:[#allocation6 + $0x1270] sm:$0xff]
    %v3240 = vld [vmem:[#allocation6 + $0x1278] sm:$0xff]
    %v3241 = vld [vmem:[#allocation6 + $0x1280] sm:$0xff]
    %v3242 = vld [vmem:[#allocation6 + $0x1288] sm:$0xff]
    %v3243 = vld [vmem:[#allocation6 + $0x1290] sm:$0xff]
    %v3244 = vld [vmem:[#allocation6 + $0x1298] sm:$0xff]
    %v3245 = vld [vmem:[#allocation6 + $0x12a0] sm:$0xff]
    %v3246 = vld [vmem:[#allocation6 + $0x12a8] sm:$0xff]
    %v3247 = vld [vmem:[#allocation6 + $0x12b0] sm:$0xff]
    %v3248 = vld [vmem:[#allocation6 + $0x12b8] sm:$0xff]
    %v3249 = vld [vmem:[#allocation6 + $0x12c0] sm:$0xff]
    %v3250 = vld [vmem:[#allocation6 + $0x12c8] sm:$0xff]
    %v3251 = vld [vmem:[#allocation6 + $0x12d0] sm:$0xff]
    %v3252 = vld [vmem:[#allocation6 + $0x12d8] sm:$0xff]
    %v3253 = vld [vmem:[#allocation6 + $0x12e0] sm:$0xff]
    %v3254 = vld [vmem:[#allocation6 + $0x12e8] sm:$0xff]
    %v3255 = vld [vmem:[#allocation6 + $0x12f0] sm:$0xff]
    %v3256 = vld [vmem:[#allocation6 + $0x12f8] sm:$0xff]
    %v3257 = vld [vmem:[#allocation6 + $0x1300] sm:$0xff]
    %v3258 = vld [vmem:[#allocation6 + $0x1308] sm:$0xff]
    %v3259 = vld [vmem:[#allocation6 + $0x1310] sm:$0xff]
    %v3260 = vld [vmem:[#allocation6 + $0x1318] sm:$0xff]
    %v3261 = vld [vmem:[#allocation6 + $0x1320] sm:$0xff]
    %v3262 = vld [vmem:[#allocation6 + $0x1328] sm:$0xff]
    %v3263 = vld [vmem:[#allocation6 + $0x1330] sm:$0xff]
    %v3264 = vld [vmem:[#allocation6 + $0x1338] sm:$0xff]
    %v3265 = vld [vmem:[#allocation6 + $0x1340] sm:$0xff]
    %v3266 = vld [vmem:[#allocation6 + $0x1348] sm:$0xff]
    %v3267 = vld [vmem:[#allocation6 + $0x1350] sm:$0xff]
    %v3268 = vld [vmem:[#allocation6 + $0x1358] sm:$0xff]
    %v3269 = vld [vmem:[#allocation6 + $0x1360] sm:$0xff]
    %v3270 = vld [vmem:[#allocation6 + $0x1368] sm:$0xff]
    %v3271 = vld [vmem:[#allocation6 + $0x1370] sm:$0xff]
    %v3272 = vld [vmem:[#allocation6 + $0x1378] sm:$0xff]
    %v3273 = vld [vmem:[#allocation6 + $0x1380] sm:$0xff]
    %v3274 = vld [vmem:[#allocation6 + $0x1388] sm:$0xff]
    %v3275 = vld [vmem:[#allocation6 + $0x1390] sm:$0xff]
    %v3276 = vld [vmem:[#allocation6 + $0x1398] sm:$0xff]
    %v3277 = vld [vmem:[#allocation6 + $0x13a0] sm:$0xff]
    %v3278 = vld [vmem:[#allocation6 + $0x13a8] sm:$0xff]
    %v3279 = vld [vmem:[#allocation6 + $0x13b0] sm:$0xff]
    %v3280 = vld [vmem:[#allocation6 + $0x13b8] sm:$0xff]
    %v3281 = vld [vmem:[#allocation6 + $0x13c0] sm:$0xff]
    %v3282 = vld [vmem:[#allocation6 + $0x13c8] sm:$0xff]
    %v3283 = vld [vmem:[#allocation6 + $0x13d0] sm:$0xff]
    %v3284 = vld [vmem:[#allocation6 + $0x13d8] sm:$0xff]
    %v3285 = vld [vmem:[#allocation6 + $0x13e0] sm:$0xff]
    %v3286 = vld [vmem:[#allocation6 + $0x13e8] sm:$0xff]
    %v3287 = vld [vmem:[#allocation6 + $0x13f0] sm:$0xff]
    %v3288 = vld [vmem:[#allocation6 + $0x13f8] sm:$0xff]
    %v3289 = vld [vmem:[#allocation7] sm:$0xf]
    %v3291 = vperm.slane %v3289, 0
    %v3292 = vperm.slane %v3289, 1
    %v3293 = vperm.slane %v3289, 2
    %v3294 = vperm.slane %v3289, 3
    %3299 = vmatpush.msra.mxu0 %v2709
    %3300 = vmatpush.msra.mxu0 %v2705
    %3301 = vmatpush.msra.mxu0 %v2701
    %3302 = vmatpush.msra.mxu0 %v2697
    %3303 = vmatpush.msra.mxu0 %v2693
    %3304 = vmatpush.msra.mxu0 %v2689
    %3305 = vmatpush.msra.mxu0 %v2685
    %3306 = vmatpush.msra.mxu0 %v2681
    %3307 = vmatpush.msra.mxu0 %v2677
    %3308 = vmatpush.msra.mxu0 %v2673
    %3309 = vmatpush.msra.mxu0 %v2669
    %3310 = vmatpush.msra.mxu0 %v2665
    %3311 = vmatpush.msra.mxu0 %v2661
    %3312 = vmatpush.msra.mxu0 %v2657
    %3313 = vmatpush.msra.mxu0 %v2653
    %3314 = vmatpush.msra.mxu0 %v2649
    %3315 = vmatmul.f32.gmra.mxu0 %v2639
    %v3316 = vpop.f32.mrf.mxu0
    %v3317 = vadd.f32 %v3291, %v3316
    %3318 = vdwg.mxu0
    %3319 = vmatpush.msra.mxu0 %v2773
    %3320 = vmatpush.msra.mxu0 %v2769
    %3321 = vmatpush.msra.mxu0 %v2765
    %3322 = vmatpush.msra.mxu0 %v2761
    %3323 = vmatpush.msra.mxu0 %v2757
    %3324 = vmatpush.msra.mxu0 %v2753
    %3325 = vmatpush.msra.mxu0 %v2749
    %3326 = vmatpush.msra.mxu0 %v2745
    %3327 = vmatpush.msra.mxu0 %v2741
    %3328 = vmatpush.msra.mxu0 %v2737
    %3329 = vmatpush.msra.mxu0 %v2733
    %3330 = vmatpush.msra.mxu0 %v2729
    %3331 = vmatpush.msra.mxu0 %v2725
    %3332 = vmatpush.msra.mxu0 %v2721
    %3333 = vmatpush.msra.mxu0 %v2717
    %3334 = vmatpush.msra.mxu0 %v2713
    %3335 = vmatmul.f32.gmra.mxu0 %v2640
    %v3336 = vpop.f32.mrf.mxu0
    %v3337 = vadd.f32 %v3317, %v3336
    %3338 = vdwg.mxu0
    %3339 = vmatpush.msra.mxu0 %v2837
    %3340 = vmatpush.msra.mxu0 %v2833
    %3341 = vmatpush.msra.mxu0 %v2829
    %3342 = vmatpush.msra.mxu0 %v2825
    %3343 = vmatpush.msra.mxu0 %v2821
    %3344 = vmatpush.msra.mxu0 %v2817
    %3345 = vmatpush.msra.mxu0 %v2813
    %3346 = vmatpush.msra.mxu0 %v2809
    %3347 = vmatpush.msra.mxu0 %v2805
    %3348 = vmatpush.msra.mxu0 %v2801
    %3349 = vmatpush.msra.mxu0 %v2797
    %3350 = vmatpush.msra.mxu0 %v2793
    %3351 = vmatpush.msra.mxu0 %v2789
    %3352 = vmatpush.msra.mxu0 %v2785
    %3353 = vmatpush.msra.mxu0 %v2781
    %3354 = vmatpush.msra.mxu0 %v2777
    %3355 = vmatmul.f32.gmra.mxu0 %v2641
    %v3356 = vpop.f32.mrf.mxu0
    %v3357 = vadd.f32 %v3337, %v3356
    %3358 = vdwg.mxu0
    %3359 = vmatpush.msra.mxu0 %v2901
    %3360 = vmatpush.msra.mxu0 %v2897
    %3361 = vmatpush.msra.mxu0 %v2893
    %3362 = vmatpush.msra.mxu0 %v2889
    %3363 = vmatpush.msra.mxu0 %v2885
    %3364 = vmatpush.msra.mxu0 %v2881
    %3365 = vmatpush.msra.mxu0 %v2877
    %3366 = vmatpush.msra.mxu0 %v2873
    %3367 = vmatpush.msra.mxu0 %v2869
    %3368 = vmatpush.msra.mxu0 %v2865
    %3369 = vmatpush.msra.mxu0 %v2861
    %3370 = vmatpush.msra.mxu0 %v2857
    %3371 = vmatpush.msra.mxu0 %v2853
    %3372 = vmatpush.msra.mxu0 %v2849
    %3373 = vmatpush.msra.mxu0 %v2845
    %3374 = vmatpush.msra.mxu0 %v2841
    %3375 = vmatmul.f32.gmra.mxu0 %v2642
    %v3376 = vpop.f32.mrf.mxu0
    %v3377 = vadd.f32 %v3357, %v3376
    %3378 = vdwg.mxu0
    %3379 = vmatpush.msra.mxu0 %v2965
    %3380 = vmatpush.msra.mxu0 %v2961
    %3381 = vmatpush.msra.mxu0 %v2957
    %3382 = vmatpush.msra.mxu0 %v2953
    %3383 = vmatpush.msra.mxu0 %v2949
    %3384 = vmatpush.msra.mxu0 %v2945
    %3385 = vmatpush.msra.mxu0 %v2941
    %3386 = vmatpush.msra.mxu0 %v2937
    %3387 = vmatpush.msra.mxu0 %v2933
    %3388 = vmatpush.msra.mxu0 %v2929
    %3389 = vmatpush.msra.mxu0 %v2925
    %3390 = vmatpush.msra.mxu0 %v2921
    %3391 = vmatpush.msra.mxu0 %v2917
    %3392 = vmatpush.msra.mxu0 %v2913
    %3393 = vmatpush.msra.mxu0 %v2909
    %3394 = vmatpush.msra.mxu0 %v2905
    %3395 = vmatmul.f32.gmra.mxu0 %v2643
    %v3396 = vpop.f32.mrf.mxu0
    %v3397 = vadd.f32 %v3377, %v3396
    %3398 = vdwg.mxu0
    %3399 = vmatpush.msra.mxu0 %v3029
    %3400 = vmatpush.msra.mxu0 %v3025
    %3401 = vmatpush.msra.mxu0 %v3021
    %3402 = vmatpush.msra.mxu0 %v3017
    %3403 = vmatpush.msra.mxu0 %v3013
    %3404 = vmatpush.msra.mxu0 %v3009
    %3405 = vmatpush.msra.mxu0 %v3005
    %3406 = vmatpush.msra.mxu0 %v3001
    %3407 = vmatpush.msra.mxu0 %v2997
    %3408 = vmatpush.msra.mxu0 %v2993
    %3409 = vmatpush.msra.mxu0 %v2989
    %3410 = vmatpush.msra.mxu0 %v2985
    %3411 = vmatpush.msra.mxu0 %v2981
    %3412 = vmatpush.msra.mxu0 %v2977
    %3413 = vmatpush.msra.mxu0 %v2973
    %3414 = vmatpush.msra.mxu0 %v2969
    %3415 = vmatmul.f32.gmra.mxu0 %v2644
    %v3416 = vpop.f32.mrf.mxu0
    %v3417 = vadd.f32 %v3397, %v3416
    %3418 = vdwg.mxu0
    %3419 = vmatpush.msra.mxu0 %v3093
    %3420 = vmatpush.msra.mxu0 %v3089
    %3421 = vmatpush.msra.mxu0 %v3085
    %3422 = vmatpush.msra.mxu0 %v3081
    %3423 = vmatpush.msra.mxu0 %v3077
    %3424 = vmatpush.msra.mxu0 %v3073
    %3425 = vmatpush.msra.mxu0 %v3069
    %3426 = vmatpush.msra.mxu0 %v3065
    %3427 = vmatpush.msra.mxu0 %v3061
    %3428 = vmatpush.msra.mxu0 %v3057
    %3429 = vmatpush.msra.mxu0 %v3053
    %3430 = vmatpush.msra.mxu0 %v3049
    %3431 = vmatpush.msra.mxu0 %v3045
    %3432 = vmatpush.msra.mxu0 %v3041
    %3433 = vmatpush.msra.mxu0 %v3037
    %3434 = vmatpush.msra.mxu0 %v3033
    %3435 = vmatmul.f32.gmra.mxu0 %v2645
    %v3436 = vpop.f32.mrf.mxu0
    %v3437 = vadd.f32 %v3417, %v3436
    %3438 = vdwg.mxu0
    %3439 = vmatpush.msra.mxu0 %v3157
    %3440 = vmatpush.msra.mxu0 %v3153
    %3441 = vmatpush.msra.mxu0 %v3149
    %3442 = vmatpush.msra.mxu0 %v3145
    %3443 = vmatpush.msra.mxu0 %v3141
    %3444 = vmatpush.msra.mxu0 %v3137
    %3445 = vmatpush.msra.mxu0 %v3133
    %3446 = vmatpush.msra.mxu0 %v3129
    %3447 = vmatpush.msra.mxu0 %v3125
    %3448 = vmatpush.msra.mxu0 %v3121
    %3449 = vmatpush.msra.mxu0 %v3117
    %3450 = vmatpush.msra.mxu0 %v3113
    %3451 = vmatpush.msra.mxu0 %v3109
    %3452 = vmatpush.msra.mxu0 %v3105
    %3453 = vmatpush.msra.mxu0 %v3101
    %3454 = vmatpush.msra.mxu0 %v3097
    %3455 = vmatmul.f32.gmra.mxu0 %v2646
    %v3456 = vpop.f32.mrf.mxu0
    %v3457 = vadd.f32 %v3437, %v3456
    %3458 = vdwg.mxu0
    %3459 = vmatpush.msra.mxu0 %v3221
    %3460 = vmatpush.msra.mxu0 %v3217
    %3461 = vmatpush.msra.mxu0 %v3213
    %3462 = vmatpush.msra.mxu0 %v3209
    %3463 = vmatpush.msra.mxu0 %v3205
    %3464 = vmatpush.msra.mxu0 %v3201
    %3465 = vmatpush.msra.mxu0 %v3197
    %3466 = vmatpush.msra.mxu0 %v3193
    %3467 = vmatpush.msra.mxu0 %v3189
    %3468 = vmatpush.msra.mxu0 %v3185
    %3469 = vmatpush.msra.mxu0 %v3181
    %3470 = vmatpush.msra.mxu0 %v3177
    %3471 = vmatpush.msra.mxu0 %v3173
    %3472 = vmatpush.msra.mxu0 %v3169
    %3473 = vmatpush.msra.mxu0 %v3165
    %3474 = vmatpush.msra.mxu0 %v3161
    %3475 = vmatmul.f32.gmra.mxu0 %v2647
    %v3476 = vpop.f32.mrf.mxu0
    %v3477 = vadd.f32 %v3457, %v3476
    %3478 = vdwg.mxu0
    %3479 = vmatpush.msra.mxu0 %v3285
    %3480 = vmatpush.msra.mxu0 %v3281
    %3481 = vmatpush.msra.mxu0 %v3277
    %3482 = vmatpush.msra.mxu0 %v3273
    %3483 = vmatpush.msra.mxu0 %v3269
    %3484 = vmatpush.msra.mxu0 %v3265
    %3485 = vmatpush.msra.mxu0 %v3261
    %3486 = vmatpush.msra.mxu0 %v3257
    %3487 = vmatpush.msra.mxu0 %v3253
    %3488 = vmatpush.msra.mxu0 %v3249
    %3489 = vmatpush.msra.mxu0 %v3245
    %3490 = vmatpush.msra.mxu0 %v3241
    %3491 = vmatpush.msra.mxu0 %v3237
    %3492 = vmatpush.msra.mxu0 %v3233
    %3493 = vmatpush.msra.mxu0 %v3229
    %3494 = vmatpush.msra.mxu0 %v3225
    %3495 = vmatmul.f32.gmra.mxu0 %v2648
    %v3496 = vpop.f32.mrf.mxu0
    %v3497 = vadd.f32 %v3477, %v3496
    %3498 = vdwg.mxu0
    %3499 = vmatpush.msra.mxu0 %v2710
    %3500 = vmatpush.msra.mxu0 %v2706
    %3501 = vmatpush.msra.mxu0 %v2702
    %3502 = vmatpush.msra.mxu0 %v2698
    %3503 = vmatpush.msra.mxu0 %v2694
    %3504 = vmatpush.msra.mxu0 %v2690
    %3505 = vmatpush.msra.mxu0 %v2686
    %3506 = vmatpush.msra.mxu0 %v2682
    %3507 = vmatpush.msra.mxu0 %v2678
    %3508 = vmatpush.msra.mxu0 %v2674
    %3509 = vmatpush.msra.mxu0 %v2670
    %3510 = vmatpush.msra.mxu0 %v2666
    %3511 = vmatpush.msra.mxu0 %v2662
    %3512 = vmatpush.msra.mxu0 %v2658
    %3513 = vmatpush.msra.mxu0 %v2654
    %3514 = vmatpush.msra.mxu0 %v2650
    %3515 = vmatmul.f32.gmra.mxu0 %v2639
    %v3516 = vpop.f32.mrf.mxu0
    %v3517 = vadd.f32 %v3292, %v3516
    %3518 = vdwg.mxu0
    %3519 = vmatpush.msra.mxu0 %v2774
    %3520 = vmatpush.msra.mxu0 %v2770
    %3521 = vmatpush.msra.mxu0 %v2766
    %3522 = vmatpush.msra.mxu0 %v2762
    %3523 = vmatpush.msra.mxu0 %v2758
    %3524 = vmatpush.msra.mxu0 %v2754
    %3525 = vmatpush.msra.mxu0 %v2750
    %3526 = vmatpush.msra.mxu0 %v2746
    %3527 = vmatpush.msra.mxu0 %v2742
    %3528 = vmatpush.msra.mxu0 %v2738
    %3529 = vmatpush.msra.mxu0 %v2734
    %3530 = vmatpush.msra.mxu0 %v2730
    %3531 = vmatpush.msra.mxu0 %v2726
    %3532 = vmatpush.msra.mxu0 %v2722
    %3533 = vmatpush.msra.mxu0 %v2718
    %3534 = vmatpush.msra.mxu0 %v2714
    %3535 = vmatmul.f32.gmra.mxu0 %v2640
    %v3536 = vpop.f32.mrf.mxu0
    %v3537 = vadd.f32 %v3517, %v3536
    %3538 = vdwg.mxu0
    %3539 = vmatpush.msra.mxu0 %v2838
    %3540 = vmatpush.msra.mxu0 %v2834
    %3541 = vmatpush.msra.mxu0 %v2830
    %3542 = vmatpush.msra.mxu0 %v2826
    %3543 = vmatpush.msra.mxu0 %v2822
    %3544 = vmatpush.msra.mxu0 %v2818
    %3545 = vmatpush.msra.mxu0 %v2814
    %3546 = vmatpush.msra.mxu0 %v2810
    %3547 = vmatpush.msra.mxu0 %v2806
    %3548 = vmatpush.msra.mxu0 %v2802
    %3549 = vmatpush.msra.mxu0 %v2798
    %3550 = vmatpush.msra.mxu0 %v2794
    %3551 = vmatpush.msra.mxu0 %v2790
    %3552 = vmatpush.msra.mxu0 %v2786
    %3553 = vmatpush.msra.mxu0 %v2782
    %3554 = vmatpush.msra.mxu0 %v2778
    %3555 = vmatmul.f32.gmra.mxu0 %v2641
    %v3556 = vpop.f32.mrf.mxu0
    %v3557 = vadd.f32 %v3537, %v3556
    %3558 = vdwg.mxu0
    %3559 = vmatpush.msra.mxu0 %v2902
    %3560 = vmatpush.msra.mxu0 %v2898
    %3561 = vmatpush.msra.mxu0 %v2894
    %3562 = vmatpush.msra.mxu0 %v2890
    %3563 = vmatpush.msra.mxu0 %v2886
    %3564 = vmatpush.msra.mxu0 %v2882
    %3565 = vmatpush.msra.mxu0 %v2878
    %3566 = vmatpush.msra.mxu0 %v2874
    %3567 = vmatpush.msra.mxu0 %v2870
    %3568 = vmatpush.msra.mxu0 %v2866
    %3569 = vmatpush.msra.mxu0 %v2862
    %3570 = vmatpush.msra.mxu0 %v2858
    %3571 = vmatpush.msra.mxu0 %v2854
    %3572 = vmatpush.msra.mxu0 %v2850
    %3573 = vmatpush.msra.mxu0 %v2846
    %3574 = vmatpush.msra.mxu0 %v2842
    %3575 = vmatmul.f32.gmra.mxu0 %v2642
    %v3576 = vpop.f32.mrf.mxu0
    %v3577 = vadd.f32 %v3557, %v3576
    %3578 = vdwg.mxu0
    %3579 = vmatpush.msra.mxu0 %v2966
    %3580 = vmatpush.msra.mxu0 %v2962
    %3581 = vmatpush.msra.mxu0 %v2958
    %3582 = vmatpush.msra.mxu0 %v2954
    %3583 = vmatpush.msra.mxu0 %v2950
    %3584 = vmatpush.msra.mxu0 %v2946
    %3585 = vmatpush.msra.mxu0 %v2942
    %3586 = vmatpush.msra.mxu0 %v2938
    %3587 = vmatpush.msra.mxu0 %v2934
    %3588 = vmatpush.msra.mxu0 %v2930
    %3589 = vmatpush.msra.mxu0 %v2926
    %3590 = vmatpush.msra.mxu0 %v2922
    %3591 = vmatpush.msra.mxu0 %v2918
    %3592 = vmatpush.msra.mxu0 %v2914
    %3593 = vmatpush.msra.mxu0 %v2910
    %3594 = vmatpush.msra.mxu0 %v2906
    %3595 = vmatmul.f32.gmra.mxu0 %v2643
    %v3596 = vpop.f32.mrf.mxu0
    %v3597 = vadd.f32 %v3577, %v3596
    %3598 = vdwg.mxu0
    %3599 = vmatpush.msra.mxu0 %v3030
    %3600 = vmatpush.msra.mxu0 %v3026
    %3601 = vmatpush.msra.mxu0 %v3022
    %3602 = vmatpush.msra.mxu0 %v3018
    %3603 = vmatpush.msra.mxu0 %v3014
    %3604 = vmatpush.msra.mxu0 %v3010
    %3605 = vmatpush.msra.mxu0 %v3006
    %3606 = vmatpush.msra.mxu0 %v3002
    %3607 = vmatpush.msra.mxu0 %v2998
    %3608 = vmatpush.msra.mxu0 %v2994
    %3609 = vmatpush.msra.mxu0 %v2990
    %3610 = vmatpush.msra.mxu0 %v2986
    %3611 = vmatpush.msra.mxu0 %v2982
    %3612 = vmatpush.msra.mxu0 %v2978
    %3613 = vmatpush.msra.mxu0 %v2974
    %3614 = vmatpush.msra.mxu0 %v2970
    %3615 = vmatmul.f32.gmra.mxu0 %v2644
    %v3616 = vpop.f32.mrf.mxu0
    %v3617 = vadd.f32 %v3597, %v3616
    %3618 = vdwg.mxu0
    %3619 = vmatpush.msra.mxu0 %v3094
    %3620 = vmatpush.msra.mxu0 %v3090
    %3621 = vmatpush.msra.mxu0 %v3086
    %3622 = vmatpush.msra.mxu0 %v3082
    %3623 = vmatpush.msra.mxu0 %v3078
    %3624 = vmatpush.msra.mxu0 %v3074
    %3625 = vmatpush.msra.mxu0 %v3070
    %3626 = vmatpush.msra.mxu0 %v3066
    %3627 = vmatpush.msra.mxu0 %v3062
    %3628 = vmatpush.msra.mxu0 %v3058
    %3629 = vmatpush.msra.mxu0 %v3054
    %3630 = vmatpush.msra.mxu0 %v3050
    %3631 = vmatpush.msra.mxu0 %v3046
    %3632 = vmatpush.msra.mxu0 %v3042
    %3633 = vmatpush.msra.mxu0 %v3038
    %3634 = vmatpush.msra.mxu0 %v3034
    %3635 = vmatmul.f32.gmra.mxu0 %v2645
    %v3636 = vpop.f32.mrf.mxu0
    %v3637 = vadd.f32 %v3617, %v3636
    %3638 = vdwg.mxu0
    %3639 = vmatpush.msra.mxu0 %v3158
    %3640 = vmatpush.msra.mxu0 %v3154
    %3641 = vmatpush.msra.mxu0 %v3150
    %3642 = vmatpush.msra.mxu0 %v3146
    %3643 = vmatpush.msra.mxu0 %v3142
    %3644 = vmatpush.msra.mxu0 %v3138
    %3645 = vmatpush.msra.mxu0 %v3134
    %3646 = vmatpush.msra.mxu0 %v3130
    %3647 = vmatpush.msra.mxu0 %v3126
    %3648 = vmatpush.msra.mxu0 %v3122
    %3649 = vmatpush.msra.mxu0 %v3118
    %3650 = vmatpush.msra.mxu0 %v3114
    %3651 = vmatpush.msra.mxu0 %v3110
    %3652 = vmatpush.msra.mxu0 %v3106
    %3653 = vmatpush.msra.mxu0 %v3102
    %3654 = vmatpush.msra.mxu0 %v3098
    %3655 = vmatmul.f32.gmra.mxu0 %v2646
    %v3656 = vpop.f32.mrf.mxu0
    %v3657 = vadd.f32 %v3637, %v3656
    %3658 = vdwg.mxu0
    %3659 = vmatpush.msra.mxu0 %v3222
    %3660 = vmatpush.msra.mxu0 %v3218
    %3661 = vmatpush.msra.mxu0 %v3214
    %3662 = vmatpush.msra.mxu0 %v3210
    %3663 = vmatpush.msra.mxu0 %v3206
    %3664 = vmatpush.msra.mxu0 %v3202
    %3665 = vmatpush.msra.mxu0 %v3198
    %3666 = vmatpush.msra.mxu0 %v3194
    %3667 = vmatpush.msra.mxu0 %v3190
    %3668 = vmatpush.msra.mxu0 %v3186
    %3669 = vmatpush.msra.mxu0 %v3182
    %3670 = vmatpush.msra.mxu0 %v3178
    %3671 = vmatpush.msra.mxu0 %v3174
    %3672 = vmatpush.msra.mxu0 %v3170
    %3673 = vmatpush.msra.mxu0 %v3166
    %3674 = vmatpush.msra.mxu0 %v3162
    %3675 = vmatmul.f32.gmra.mxu0 %v2647
    %v3676 = vpop.f32.mrf.mxu0
    %v3677 = vadd.f32 %v3657, %v3676
    %3678 = vdwg.mxu0
    %3679 = vmatpush.msra.mxu0 %v3286
    %3680 = vmatpush.msra.mxu0 %v3282
    %3681 = vmatpush.msra.mxu0 %v3278
    %3682 = vmatpush.msra.mxu0 %v3274
    %3683 = vmatpush.msra.mxu0 %v3270
    %3684 = vmatpush.msra.mxu0 %v3266
    %3685 = vmatpush.msra.mxu0 %v3262
    %3686 = vmatpush.msra.mxu0 %v3258
    %3687 = vmatpush.msra.mxu0 %v3254
    %3688 = vmatpush.msra.mxu0 %v3250
    %3689 = vmatpush.msra.mxu0 %v3246
    %3690 = vmatpush.msra.mxu0 %v3242
    %3691 = vmatpush.msra.mxu0 %v3238
    %3692 = vmatpush.msra.mxu0 %v3234
    %3693 = vmatpush.msra.mxu0 %v3230
    %3694 = vmatpush.msra.mxu0 %v3226
    %3695 = vmatmul.f32.gmra.mxu0 %v2648
    %v3696 = vpop.f32.mrf.mxu0
    %v3697 = vadd.f32 %v3677, %v3696
    %3698 = vdwg.mxu0
    %3699 = vmatpush.msra.mxu0 %v2711
    %3700 = vmatpush.msra.mxu0 %v2707
    %3701 = vmatpush.msra.mxu0 %v2703
    %3702 = vmatpush.msra.mxu0 %v2699
    %3703 = vmatpush.msra.mxu0 %v2695
    %3704 = vmatpush.msra.mxu0 %v2691
    %3705 = vmatpush.msra.mxu0 %v2687
    %3706 = vmatpush.msra.mxu0 %v2683
    %3707 = vmatpush.msra.mxu0 %v2679
    %3708 = vmatpush.msra.mxu0 %v2675
    %3709 = vmatpush.msra.mxu0 %v2671
    %3710 = vmatpush.msra.mxu0 %v2667
    %3711 = vmatpush.msra.mxu0 %v2663
    %3712 = vmatpush.msra.mxu0 %v2659
    %3713 = vmatpush.msra.mxu0 %v2655
    %3714 = vmatpush.msra.mxu0 %v2651
    %3715 = vmatmul.f32.gmra.mxu0 %v2639
    %v3716 = vpop.f32.mrf.mxu0
    %v3717 = vadd.f32 %v3293, %v3716
    %3718 = vdwg.mxu0
    %3719 = vmatpush.msra.mxu0 %v2775
    %3720 = vmatpush.msra.mxu0 %v2771
    %3721 = vmatpush.msra.mxu0 %v2767
    %3722 = vmatpush.msra.mxu0 %v2763
    %3723 = vmatpush.msra.mxu0 %v2759
    %3724 = vmatpush.msra.mxu0 %v2755
    %3725 = vmatpush.msra.mxu0 %v2751
    %3726 = vmatpush.msra.mxu0 %v2747
    %3727 = vmatpush.msra.mxu0 %v2743
    %3728 = vmatpush.msra.mxu0 %v2739
    %3729 = vmatpush.msra.mxu0 %v2735
    %3730 = vmatpush.msra.mxu0 %v2731
    %3731 = vmatpush.msra.mxu0 %v2727
    %3732 = vmatpush.msra.mxu0 %v2723
    %3733 = vmatpush.msra.mxu0 %v2719
    %3734 = vmatpush.msra.mxu0 %v2715
    %3735 = vmatmul.f32.gmra.mxu0 %v2640
    %v3736 = vpop.f32.mrf.mxu0
    %v3737 = vadd.f32 %v3717, %v3736
    %3738 = vdwg.mxu0
    %3739 = vmatpush.msra.mxu0 %v2839
    %3740 = vmatpush.msra.mxu0 %v2835
    %3741 = vmatpush.msra.mxu0 %v2831
    %3742 = vmatpush.msra.mxu0 %v2827
    %3743 = vmatpush.msra.mxu0 %v2823
    %3744 = vmatpush.msra.mxu0 %v2819
    %3745 = vmatpush.msra.mxu0 %v2815
    %3746 = vmatpush.msra.mxu0 %v2811
    %3747 = vmatpush.msra.mxu0 %v2807
    %3748 = vmatpush.msra.mxu0 %v2803
    %3749 = vmatpush.msra.mxu0 %v2799
    %3750 = vmatpush.msra.mxu0 %v2795
    %3751 = vmatpush.msra.mxu0 %v2791
    %3752 = vmatpush.msra.mxu0 %v2787
    %3753 = vmatpush.msra.mxu0 %v2783
    %3754 = vmatpush.msra.mxu0 %v2779
    %3755 = vmatmul.f32.gmra.mxu0 %v2641
    %v3756 = vpop.f32.mrf.mxu0
    %v3757 = vadd.f32 %v3737, %v3756
    %3758 = vdwg.mxu0
    %3759 = vmatpush.msra.mxu0 %v2903
    %3760 = vmatpush.msra.mxu0 %v2899
    %3761 = vmatpush.msra.mxu0 %v2895
    %3762 = vmatpush.msra.mxu0 %v2891
    %3763 = vmatpush.msra.mxu0 %v2887
    %3764 = vmatpush.msra.mxu0 %v2883
    %3765 = vmatpush.msra.mxu0 %v2879
    %3766 = vmatpush.msra.mxu0 %v2875
    %3767 = vmatpush.msra.mxu0 %v2871
    %3768 = vmatpush.msra.mxu0 %v2867
    %3769 = vmatpush.msra.mxu0 %v2863
    %3770 = vmatpush.msra.mxu0 %v2859
    %3771 = vmatpush.msra.mxu0 %v2855
    %3772 = vmatpush.msra.mxu0 %v2851
    %3773 = vmatpush.msra.mxu0 %v2847
    %3774 = vmatpush.msra.mxu0 %v2843
    %3775 = vmatmul.f32.gmra.mxu0 %v2642
    %v3776 = vpop.f32.mrf.mxu0
    %v3777 = vadd.f32 %v3757, %v3776
    %3778 = vdwg.mxu0
    %3779 = vmatpush.msra.mxu0 %v2967
    %3780 = vmatpush.msra.mxu0 %v2963
    %3781 = vmatpush.msra.mxu0 %v2959
    %3782 = vmatpush.msra.mxu0 %v2955
    %3783 = vmatpush.msra.mxu0 %v2951
    %3784 = vmatpush.msra.mxu0 %v2947
    %3785 = vmatpush.msra.mxu0 %v2943
    %3786 = vmatpush.msra.mxu0 %v2939
    %3787 = vmatpush.msra.mxu0 %v2935
    %3788 = vmatpush.msra.mxu0 %v2931
    %3789 = vmatpush.msra.mxu0 %v2927
    %3790 = vmatpush.msra.mxu0 %v2923
    %3791 = vmatpush.msra.mxu0 %v2919
    %3792 = vmatpush.msra.mxu0 %v2915
    %3793 = vmatpush.msra.mxu0 %v2911
    %3794 = vmatpush.msra.mxu0 %v2907
    %3795 = vmatmul.f32.gmra.mxu0 %v2643
    %v3796 = vpop.f32.mrf.mxu0
    %v3797 = vadd.f32 %v3777, %v3796
    %3798 = vdwg.mxu0
    %3799 = vmatpush.msra.mxu0 %v3031
    %3800 = vmatpush.msra.mxu0 %v3027
    %3801 = vmatpush.msra.mxu0 %v3023
    %3802 = vmatpush.msra.mxu0 %v3019
    %3803 = vmatpush.msra.mxu0 %v3015
    %3804 = vmatpush.msra.mxu0 %v3011
    %3805 = vmatpush.msra.mxu0 %v3007
    %3806 = vmatpush.msra.mxu0 %v3003
    %3807 = vmatpush.msra.mxu0 %v2999
    %3808 = vmatpush.msra.mxu0 %v2995
    %3809 = vmatpush.msra.mxu0 %v2991
    %3810 = vmatpush.msra.mxu0 %v2987
    %3811 = vmatpush.msra.mxu0 %v2983
    %3812 = vmatpush.msra.mxu0 %v2979
    %3813 = vmatpush.msra.mxu0 %v2975
    %3814 = vmatpush.msra.mxu0 %v2971
    %3815 = vmatmul.f32.gmra.mxu0 %v2644
    %v3816 = vpop.f32.mrf.mxu0
    %v3817 = vadd.f32 %v3797, %v3816
    %3818 = vdwg.mxu0
    %3819 = vmatpush.msra.mxu0 %v3095
    %3820 = vmatpush.msra.mxu0 %v3091
    %3821 = vmatpush.msra.mxu0 %v3087
    %3822 = vmatpush.msra.mxu0 %v3083
    %3823 = vmatpush.msra.mxu0 %v3079
    %3824 = vmatpush.msra.mxu0 %v3075
    %3825 = vmatpush.msra.mxu0 %v3071
    %3826 = vmatpush.msra.mxu0 %v3067
    %3827 = vmatpush.msra.mxu0 %v3063
    %3828 = vmatpush.msra.mxu0 %v3059
    %3829 = vmatpush.msra.mxu0 %v3055
    %3830 = vmatpush.msra.mxu0 %v3051
    %3831 = vmatpush.msra.mxu0 %v3047
    %3832 = vmatpush.msra.mxu0 %v3043
    %3833 = vmatpush.msra.mxu0 %v3039
    %3834 = vmatpush.msra.mxu0 %v3035
    %3835 = vmatmul.f32.gmra.mxu0 %v2645
    %v3836 = vpop.f32.mrf.mxu0
    %v3837 = vadd.f32 %v3817, %v3836
    %3838 = vdwg.mxu0
    %3839 = vmatpush.msra.mxu0 %v3159
    %3840 = vmatpush.msra.mxu0 %v3155
    %3841 = vmatpush.msra.mxu0 %v3151
    %3842 = vmatpush.msra.mxu0 %v3147
    %3843 = vmatpush.msra.mxu0 %v3143
    %3844 = vmatpush.msra.mxu0 %v3139
    %3845 = vmatpush.msra.mxu0 %v3135
    %3846 = vmatpush.msra.mxu0 %v3131
    %3847 = vmatpush.msra.mxu0 %v3127
    %3848 = vmatpush.msra.mxu0 %v3123
    %3849 = vmatpush.msra.mxu0 %v3119
    %3850 = vmatpush.msra.mxu0 %v3115
    %3851 = vmatpush.msra.mxu0 %v3111
    %3852 = vmatpush.msra.mxu0 %v3107
    %3853 = vmatpush.msra.mxu0 %v3103
    %3854 = vmatpush.msra.mxu0 %v3099
    %3855 = vmatmul.f32.gmra.mxu0 %v2646
    %v3856 = vpop.f32.mrf.mxu0
    %v3857 = vadd.f32 %v3837, %v3856
    %3858 = vdwg.mxu0
    %3859 = vmatpush.msra.mxu0 %v3223
    %3860 = vmatpush.msra.mxu0 %v3219
    %3861 = vmatpush.msra.mxu0 %v3215
    %3862 = vmatpush.msra.mxu0 %v3211
    %3863 = vmatpush.msra.mxu0 %v3207
    %3864 = vmatpush.msra.mxu0 %v3203
    %3865 = vmatpush.msra.mxu0 %v3199
    %3866 = vmatpush.msra.mxu0 %v3195
    %3867 = vmatpush.msra.mxu0 %v3191
    %3868 = vmatpush.msra.mxu0 %v3187
    %3869 = vmatpush.msra.mxu0 %v3183
    %3870 = vmatpush.msra.mxu0 %v3179
    %3871 = vmatpush.msra.mxu0 %v3175
    %3872 = vmatpush.msra.mxu0 %v3171
    %3873 = vmatpush.msra.mxu0 %v3167
    %3874 = vmatpush.msra.mxu0 %v3163
    %3875 = vmatmul.f32.gmra.mxu0 %v2647
    %v3876 = vpop.f32.mrf.mxu0
    %v3877 = vadd.f32 %v3857, %v3876
    %3878 = vdwg.mxu0
    %3879 = vmatpush.msra.mxu0 %v3287
    %3880 = vmatpush.msra.mxu0 %v3283
    %3881 = vmatpush.msra.mxu0 %v3279
    %3882 = vmatpush.msra.mxu0 %v3275
    %3883 = vmatpush.msra.mxu0 %v3271
    %3884 = vmatpush.msra.mxu0 %v3267
    %3885 = vmatpush.msra.mxu0 %v3263
    %3886 = vmatpush.msra.mxu0 %v3259
    %3887 = vmatpush.msra.mxu0 %v3255
    %3888 = vmatpush.msra.mxu0 %v3251
    %3889 = vmatpush.msra.mxu0 %v3247
    %3890 = vmatpush.msra.mxu0 %v3243
    %3891 = vmatpush.msra.mxu0 %v3239
    %3892 = vmatpush.msra.mxu0 %v3235
    %3893 = vmatpush.msra.mxu0 %v3231
    %3894 = vmatpush.msra.mxu0 %v3227
    %3895 = vmatmul.f32.gmra.mxu0 %v2648
    %v3896 = vpop.f32.mrf.mxu0
    %v3897 = vadd.f32 %v3877, %v3896
    %3898 = vdwg.mxu0
    %3899 = vmatpush.msra.mxu0 %v2712
    %3900 = vmatpush.msra.mxu0 %v2708
    %3901 = vmatpush.msra.mxu0 %v2704
    %3902 = vmatpush.msra.mxu0 %v2700
    %3903 = vmatpush.msra.mxu0 %v2696
    %3904 = vmatpush.msra.mxu0 %v2692
    %3905 = vmatpush.msra.mxu0 %v2688
    %3906 = vmatpush.msra.mxu0 %v2684
    %3907 = vmatpush.msra.mxu0 %v2680
    %3908 = vmatpush.msra.mxu0 %v2676
    %3909 = vmatpush.msra.mxu0 %v2672
    %3910 = vmatpush.msra.mxu0 %v2668
    %3911 = vmatpush.msra.mxu0 %v2664
    %3912 = vmatpush.msra.mxu0 %v2660
    %3913 = vmatpush.msra.mxu0 %v2656
    %3914 = vmatpush.msra.mxu0 %v2652
    %3915 = vmatmul.f32.gmra.mxu0 %v2639
    %v3916 = vpop.f32.mrf.mxu0
    %v3917 = vadd.f32 %v3294, %v3916
    %3918 = vdwg.mxu0
    %3919 = vmatpush.msra.mxu0 %v2776
    %3920 = vmatpush.msra.mxu0 %v2772
    %3921 = vmatpush.msra.mxu0 %v2768
    %3922 = vmatpush.msra.mxu0 %v2764
    %3923 = vmatpush.msra.mxu0 %v2760
    %3924 = vmatpush.msra.mxu0 %v2756
    %3925 = vmatpush.msra.mxu0 %v2752
    %3926 = vmatpush.msra.mxu0 %v2748
    %3927 = vmatpush.msra.mxu0 %v2744
    %3928 = vmatpush.msra.mxu0 %v2740
    %3929 = vmatpush.msra.mxu0 %v2736
    %3930 = vmatpush.msra.mxu0 %v2732
    %3931 = vmatpush.msra.mxu0 %v2728
    %3932 = vmatpush.msra.mxu0 %v2724
    %3933 = vmatpush.msra.mxu0 %v2720
    %3934 = vmatpush.msra.mxu0 %v2716
    %3935 = vmatmul.f32.gmra.mxu0 %v2640
    %v3936 = vpop.f32.mrf.mxu0
    %v3937 = vadd.f32 %v3917, %v3936
    %3938 = vdwg.mxu0
    %3939 = vmatpush.msra.mxu0 %v2840
    %3940 = vmatpush.msra.mxu0 %v2836
    %3941 = vmatpush.msra.mxu0 %v2832
    %3942 = vmatpush.msra.mxu0 %v2828
    %3943 = vmatpush.msra.mxu0 %v2824
    %3944 = vmatpush.msra.mxu0 %v2820
    %3945 = vmatpush.msra.mxu0 %v2816
    %3946 = vmatpush.msra.mxu0 %v2812
    %3947 = vmatpush.msra.mxu0 %v2808
    %3948 = vmatpush.msra.mxu0 %v2804
    %3949 = vmatpush.msra.mxu0 %v2800
    %3950 = vmatpush.msra.mxu0 %v2796
    %3951 = vmatpush.msra.mxu0 %v2792
    %3952 = vmatpush.msra.mxu0 %v2788
    %3953 = vmatpush.msra.mxu0 %v2784
    %3954 = vmatpush.msra.mxu0 %v2780
    %3955 = vmatmul.f32.gmra.mxu0 %v2641
    %v3956 = vpop.f32.mrf.mxu0
    %v3957 = vadd.f32 %v3937, %v3956
    %3958 = vdwg.mxu0
    %3959 = vmatpush.msra.mxu0 %v2904
    %3960 = vmatpush.msra.mxu0 %v2900
    %3961 = vmatpush.msra.mxu0 %v2896
    %3962 = vmatpush.msra.mxu0 %v2892
    %3963 = vmatpush.msra.mxu0 %v2888
    %3964 = vmatpush.msra.mxu0 %v2884
    %3965 = vmatpush.msra.mxu0 %v2880
    %3966 = vmatpush.msra.mxu0 %v2876
    %3967 = vmatpush.msra.mxu0 %v2872
    %3968 = vmatpush.msra.mxu0 %v2868
    %3969 = vmatpush.msra.mxu0 %v2864
    %3970 = vmatpush.msra.mxu0 %v2860
    %3971 = vmatpush.msra.mxu0 %v2856
    %3972 = vmatpush.msra.mxu0 %v2852
    %3973 = vmatpush.msra.mxu0 %v2848
    %3974 = vmatpush.msra.mxu0 %v2844
    %3975 = vmatmul.f32.gmra.mxu0 %v2642
    %v3976 = vpop.f32.mrf.mxu0
    %v3977 = vadd.f32 %v3957, %v3976
    %3978 = vdwg.mxu0
    %3979 = vmatpush.msra.mxu0 %v2968
    %3980 = vmatpush.msra.mxu0 %v2964
    %3981 = vmatpush.msra.mxu0 %v2960
    %3982 = vmatpush.msra.mxu0 %v2956
    %3983 = vmatpush.msra.mxu0 %v2952
    %3984 = vmatpush.msra.mxu0 %v2948
    %3985 = vmatpush.msra.mxu0 %v2944
    %3986 = vmatpush.msra.mxu0 %v2940
    %3987 = vmatpush.msra.mxu0 %v2936
    %3988 = vmatpush.msra.mxu0 %v2932
    %3989 = vmatpush.msra.mxu0 %v2928
    %3990 = vmatpush.msra.mxu0 %v2924
    %3991 = vmatpush.msra.mxu0 %v2920
    %3992 = vmatpush.msra.mxu0 %v2916
    %3993 = vmatpush.msra.mxu0 %v2912
    %3994 = vmatpush.msra.mxu0 %v2908
    %3995 = vmatmul.f32.gmra.mxu0 %v2643
    %v3996 = vpop.f32.mrf.mxu0
    %v3997 = vadd.f32 %v3977, %v3996
    %3998 = vdwg.mxu0
    %3999 = vmatpush.msra.mxu0 %v3032
    %4000 = vmatpush.msra.mxu0 %v3028
    %4001 = vmatpush.msra.mxu0 %v3024
    %4002 = vmatpush.msra.mxu0 %v3020
    %4003 = vmatpush.msra.mxu0 %v3016
    %4004 = vmatpush.msra.mxu0 %v3012
    %4005 = vmatpush.msra.mxu0 %v3008
    %4006 = vmatpush.msra.mxu0 %v3004
    %4007 = vmatpush.msra.mxu0 %v3000
    %4008 = vmatpush.msra.mxu0 %v2996
    %4009 = vmatpush.msra.mxu0 %v2992
    %4010 = vmatpush.msra.mxu0 %v2988
    %4011 = vmatpush.msra.mxu0 %v2984
    %4012 = vmatpush.msra.mxu0 %v2980
    %4013 = vmatpush.msra.mxu0 %v2976
    %4014 = vmatpush.msra.mxu0 %v2972
    %4015 = vmatmul.f32.gmra.mxu0 %v2644
    %v4016 = vpop.f32.mrf.mxu0
    %v4017 = vadd.f32 %v3997, %v4016
    %4018 = vdwg.mxu0
    %4019 = vmatpush.msra.mxu0 %v3096
    %4020 = vmatpush.msra.mxu0 %v3092
    %4021 = vmatpush.msra.mxu0 %v3088
    %4022 = vmatpush.msra.mxu0 %v3084
    %4023 = vmatpush.msra.mxu0 %v3080
    %4024 = vmatpush.msra.mxu0 %v3076
    %4025 = vmatpush.msra.mxu0 %v3072
    %4026 = vmatpush.msra.mxu0 %v3068
    %4027 = vmatpush.msra.mxu0 %v3064
    %4028 = vmatpush.msra.mxu0 %v3060
    %4029 = vmatpush.msra.mxu0 %v3056
    %4030 = vmatpush.msra.mxu0 %v3052
    %4031 = vmatpush.msra.mxu0 %v3048
    %4032 = vmatpush.msra.mxu0 %v3044
    %4033 = vmatpush.msra.mxu0 %v3040
    %4034 = vmatpush.msra.mxu0 %v3036
    %4035 = vmatmul.f32.gmra.mxu0 %v2645
    %v4036 = vpop.f32.mrf.mxu0
    %v4037 = vadd.f32 %v4017, %v4036
    %4038 = vdwg.mxu0
    %4039 = vmatpush.msra.mxu0 %v3160
    %4040 = vmatpush.msra.mxu0 %v3156
    %4041 = vmatpush.msra.mxu0 %v3152
    %4042 = vmatpush.msra.mxu0 %v3148
    %4043 = vmatpush.msra.mxu0 %v3144
    %4044 = vmatpush.msra.mxu0 %v3140
    %4045 = vmatpush.msra.mxu0 %v3136
    %4046 = vmatpush.msra.mxu0 %v3132
    %4047 = vmatpush.msra.mxu0 %v3128
    %4048 = vmatpush.msra.mxu0 %v3124
    %4049 = vmatpush.msra.mxu0 %v3120
    %4050 = vmatpush.msra.mxu0 %v3116
    %4051 = vmatpush.msra.mxu0 %v3112
    %4052 = vmatpush.msra.mxu0 %v3108
    %4053 = vmatpush.msra.mxu0 %v3104
    %4054 = vmatpush.msra.mxu0 %v3100
    %4055 = vmatmul.f32.gmra.mxu0 %v2646
    %v4056 = vpop.f32.mrf.mxu0
    %v4057 = vadd.f32 %v4037, %v4056
    %4058 = vdwg.mxu0
    %4059 = vmatpush.msra.mxu0 %v3224
    %4060 = vmatpush.msra.mxu0 %v3220
    %4061 = vmatpush.msra.mxu0 %v3216
    %4062 = vmatpush.msra.mxu0 %v3212
    %4063 = vmatpush.msra.mxu0 %v3208
    %4064 = vmatpush.msra.mxu0 %v3204
    %4065 = vmatpush.msra.mxu0 %v3200
    %4066 = vmatpush.msra.mxu0 %v3196
    %4067 = vmatpush.msra.mxu0 %v3192
    %4068 = vmatpush.msra.mxu0 %v3188
    %4069 = vmatpush.msra.mxu0 %v3184
    %4070 = vmatpush.msra.mxu0 %v3180
    %4071 = vmatpush.msra.mxu0 %v3176
    %4072 = vmatpush.msra.mxu0 %v3172
    %4073 = vmatpush.msra.mxu0 %v3168
    %4074 = vmatpush.msra.mxu0 %v3164
    %4075 = vmatmul.f32.gmra.mxu0 %v2647
    %v4076 = vpop.f32.mrf.mxu0
    %v4077 = vadd.f32 %v4057, %v4076
    %4078 = vdwg.mxu0
    %4079 = vmatpush.msra.mxu0 %v3288
    %4080 = vmatpush.msra.mxu0 %v3284
    %4081 = vmatpush.msra.mxu0 %v3280
    %4082 = vmatpush.msra.mxu0 %v3276
    %4083 = vmatpush.msra.mxu0 %v3272
    %4084 = vmatpush.msra.mxu0 %v3268
    %4085 = vmatpush.msra.mxu0 %v3264
    %4086 = vmatpush.msra.mxu0 %v3260
    %4087 = vmatpush.msra.mxu0 %v3256
    %4088 = vmatpush.msra.mxu0 %v3252
    %4089 = vmatpush.msra.mxu0 %v3248
    %4090 = vmatpush.msra.mxu0 %v3244
    %4091 = vmatpush.msra.mxu0 %v3240
    %4092 = vmatpush.msra.mxu0 %v3236
    %4093 = vmatpush.msra.mxu0 %v3232
    %4094 = vmatpush.msra.mxu0 %v3228
    %4095 = vmatmul.f32.gmra.mxu0 %v2648
    %v4096 = vpop.f32.mrf.mxu0
    %v4097 = vadd.f32 %v4077, %v4096
    %4098 = vdwg.mxu0
    %v4099 = vmul.f32 %v3497, 0.01
    %v4100 = vmul.f32 %v3697, 0.01
    %v4101 = vmul.f32 %v3897, 0.01
    %v4102 = vmul.f32 %v4097, 0.01
    %v4103 = vmax.f32 %v3497, %v4099
    %v4104 = vmax.f32 %v3697, %v4100
    %v4105 = vmax.f32 %v3897, %v4101
    %v4106 = vmax.f32 %v4097, %v4102
    %v4107 = vld [vmem:[#allocation9] sm:$0xff]
    %v4108 = vld [vmem:[#allocation9 + $0x8] sm:$0xff]
    %v4109 = vld [vmem:[#allocation9 + $0x10] sm:$0xff]
    %v4110 = vld [vmem:[#allocation9 + $0x18] sm:$0xff]
    %v4111 = vld [vmem:[#allocation9 + $0x20] sm:$0xff]
    %v4112 = vld [vmem:[#allocation9 + $0x28] sm:$0xff]
    %v4113 = vld [vmem:[#allocation9 + $0x30] sm:$0xff]
    %v4114 = vld [vmem:[#allocation9 + $0x38] sm:$0xff]
    %v4115 = vld [vmem:[#allocation9 + $0x40] sm:$0xff]
    %v4116 = vld [vmem:[#allocation9 + $0x48] sm:$0xff]
    %v4117 = vld [vmem:[#allocation9 + $0x50] sm:$0xff]
    %v4118 = vld [vmem:[#allocation9 + $0x58] sm:$0xff]
    %v4119 = vld [vmem:[#allocation9 + $0x60] sm:$0xff]
    %v4120 = vld [vmem:[#allocation9 + $0x68] sm:$0xff]
    %v4121 = vld [vmem:[#allocation9 + $0x70] sm:$0xff]
    %v4122 = vld [vmem:[#allocation9 + $0x78] sm:$0xff]
    %v4123 = vld [vmem:[#allocation9 + $0x80] sm:$0xff]
    %v4124 = vld [vmem:[#allocation9 + $0x88] sm:$0xff]
    %v4125 = vld [vmem:[#allocation9 + $0x90] sm:$0xff]
    %v4126 = vld [vmem:[#allocation9 + $0x98] sm:$0xff]
    %v4127 = vld [vmem:[#allocation9 + $0xa0] sm:$0xff]
    %v4128 = vld [vmem:[#allocation9 + $0xa8] sm:$0xff]
    %v4129 = vld [vmem:[#allocation9 + $0xb0] sm:$0xff]
    %v4130 = vld [vmem:[#allocation9 + $0xb8] sm:$0xff]
    %v4131 = vld [vmem:[#allocation9 + $0xc0] sm:$0xff]
    %v4132 = vld [vmem:[#allocation9 + $0xc8] sm:$0xff]
    %v4133 = vld [vmem:[#allocation9 + $0xd0] sm:$0xff]
    %v4134 = vld [vmem:[#allocation9 + $0xd8] sm:$0xff]
    %v4135 = vld [vmem:[#allocation9 + $0xe0] sm:$0xff]
    %v4136 = vld [vmem:[#allocation9 + $0xe8] sm:$0xff]
    %v4137 = vld [vmem:[#allocation9 + $0xf0] sm:$0xff]
    %v4138 = vld [vmem:[#allocation9 + $0xf8] sm:$0xff]
    %v4139 = vld [vmem:[#allocation9 + $0x100] sm:$0xff]
    %v4140 = vld [vmem:[#allocation9 + $0x108] sm:$0xff]
    %v4141 = vld [vmem:[#allocation9 + $0x110] sm:$0xff]
    %v4142 = vld [vmem:[#allocation9 + $0x118] sm:$0xff]
    %v4143 = vld [vmem:[#allocation9 + $0x120] sm:$0xff]
    %v4144 = vld [vmem:[#allocation9 + $0x128] sm:$0xff]
    %v4145 = vld [vmem:[#allocation9 + $0x130] sm:$0xff]
    %v4146 = vld [vmem:[#allocation9 + $0x138] sm:$0xff]
    %v4147 = vld [vmem:[#allocation9 + $0x140] sm:$0xff]
    %v4148 = vld [vmem:[#allocation9 + $0x148] sm:$0xff]
    %v4149 = vld [vmem:[#allocation9 + $0x150] sm:$0xff]
    %v4150 = vld [vmem:[#allocation9 + $0x158] sm:$0xff]
    %v4151 = vld [vmem:[#allocation9 + $0x160] sm:$0xff]
    %v4152 = vld [vmem:[#allocation9 + $0x168] sm:$0xff]
    %v4153 = vld [vmem:[#allocation9 + $0x170] sm:$0xff]
    %v4154 = vld [vmem:[#allocation9 + $0x178] sm:$0xff]
    %v4155 = vld [vmem:[#allocation9 + $0x180] sm:$0xff]
    %v4156 = vld [vmem:[#allocation9 + $0x188] sm:$0xff]
    %v4157 = vld [vmem:[#allocation9 + $0x190] sm:$0xff]
    %v4158 = vld [vmem:[#allocation9 + $0x198] sm:$0xff]
    %v4159 = vld [vmem:[#allocation9 + $0x1a0] sm:$0xff]
    %v4160 = vld [vmem:[#allocation9 + $0x1a8] sm:$0xff]
    %v4161 = vld [vmem:[#allocation9 + $0x1b0] sm:$0xff]
    %v4162 = vld [vmem:[#allocation9 + $0x1b8] sm:$0xff]
    %v4163 = vld [vmem:[#allocation9 + $0x1c0] sm:$0xff]
    %v4164 = vld [vmem:[#allocation9 + $0x1c8] sm:$0xff]
    %v4165 = vld [vmem:[#allocation9 + $0x1d0] sm:$0xff]
    %v4166 = vld [vmem:[#allocation9 + $0x1d8] sm:$0xff]
    %v4167 = vld [vmem:[#allocation9 + $0x1e0] sm:$0xff]
    %v4168 = vld [vmem:[#allocation9 + $0x1e8] sm:$0xff]
    %v4169 = vld [vmem:[#allocation9 + $0x1f0] sm:$0xff]
    %v4170 = vld [vmem:[#allocation9 + $0x1f8] sm:$0xff]
    %v4171 = vld [vmem:[#allocation9 + $0x200] sm:$0xff]
    %v4172 = vld [vmem:[#allocation9 + $0x208] sm:$0xff]
    %v4173 = vld [vmem:[#allocation9 + $0x210] sm:$0xff]
    %v4174 = vld [vmem:[#allocation9 + $0x218] sm:$0xff]
    %v4175 = vld [vmem:[#allocation9 + $0x220] sm:$0xff]
    %v4176 = vld [vmem:[#allocation9 + $0x228] sm:$0xff]
    %v4177 = vld [vmem:[#allocation9 + $0x230] sm:$0xff]
    %v4178 = vld [vmem:[#allocation9 + $0x238] sm:$0xff]
    %v4179 = vld [vmem:[#allocation9 + $0x240] sm:$0xff]
    %v4180 = vld [vmem:[#allocation9 + $0x248] sm:$0xff]
    %v4181 = vld [vmem:[#allocation9 + $0x250] sm:$0xff]
    %v4182 = vld [vmem:[#allocation9 + $0x258] sm:$0xff]
    %v4183 = vld [vmem:[#allocation9 + $0x260] sm:$0xff]
    %v4184 = vld [vmem:[#allocation9 + $0x268] sm:$0xff]
    %v4185 = vld [vmem:[#allocation9 + $0x270] sm:$0xff]
    %v4186 = vld [vmem:[#allocation9 + $0x278] sm:$0xff]
    %v4187 = vld [vmem:[#allocation9 + $0x280] sm:$0xff]
    %v4188 = vld [vmem:[#allocation9 + $0x288] sm:$0xff]
    %v4189 = vld [vmem:[#allocation9 + $0x290] sm:$0xff]
    %v4190 = vld [vmem:[#allocation9 + $0x298] sm:$0xff]
    %v4191 = vld [vmem:[#allocation9 + $0x2a0] sm:$0xff]
    %v4192 = vld [vmem:[#allocation9 + $0x2a8] sm:$0xff]
    %v4193 = vld [vmem:[#allocation9 + $0x2b0] sm:$0xff]
    %v4194 = vld [vmem:[#allocation9 + $0x2b8] sm:$0xff]
    %v4195 = vld [vmem:[#allocation9 + $0x2c0] sm:$0xff]
    %v4196 = vld [vmem:[#allocation9 + $0x2c8] sm:$0xff]
    %v4197 = vld [vmem:[#allocation9 + $0x2d0] sm:$0xff]
    %v4198 = vld [vmem:[#allocation9 + $0x2d8] sm:$0xff]
    %v4199 = vld [vmem:[#allocation9 + $0x2e0] sm:$0xff]
    %v4200 = vld [vmem:[#allocation9 + $0x2e8] sm:$0xff]
    %v4201 = vld [vmem:[#allocation9 + $0x2f0] sm:$0xff]
    %v4202 = vld [vmem:[#allocation9 + $0x2f8] sm:$0xff]
    %v4203 = vld [vmem:[#allocation9 + $0x300] sm:$0xff]
    %v4204 = vld [vmem:[#allocation9 + $0x308] sm:$0xff]
    %v4205 = vld [vmem:[#allocation9 + $0x310] sm:$0xff]
    %v4206 = vld [vmem:[#allocation9 + $0x318] sm:$0xff]
    %v4207 = vld [vmem:[#allocation9 + $0x320] sm:$0xff]
    %v4208 = vld [vmem:[#allocation9 + $0x328] sm:$0xff]
    %v4209 = vld [vmem:[#allocation9 + $0x330] sm:$0xff]
    %v4210 = vld [vmem:[#allocation9 + $0x338] sm:$0xff]
    %v4211 = vld [vmem:[#allocation9 + $0x340] sm:$0xff]
    %v4212 = vld [vmem:[#allocation9 + $0x348] sm:$0xff]
    %v4213 = vld [vmem:[#allocation9 + $0x350] sm:$0xff]
    %v4214 = vld [vmem:[#allocation9 + $0x358] sm:$0xff]
    %v4215 = vld [vmem:[#allocation9 + $0x360] sm:$0xff]
    %v4216 = vld [vmem:[#allocation9 + $0x368] sm:$0xff]
    %v4217 = vld [vmem:[#allocation9 + $0x370] sm:$0xff]
    %v4218 = vld [vmem:[#allocation9 + $0x378] sm:$0xff]
    %v4219 = vld [vmem:[#allocation9 + $0x380] sm:$0xff]
    %v4220 = vld [vmem:[#allocation9 + $0x388] sm:$0xff]
    %v4221 = vld [vmem:[#allocation9 + $0x390] sm:$0xff]
    %v4222 = vld [vmem:[#allocation9 + $0x398] sm:$0xff]
    %v4223 = vld [vmem:[#allocation9 + $0x3a0] sm:$0xff]
    %v4224 = vld [vmem:[#allocation9 + $0x3a8] sm:$0xff]
    %v4225 = vld [vmem:[#allocation9 + $0x3b0] sm:$0xff]
    %v4226 = vld [vmem:[#allocation9 + $0x3b8] sm:$0xff]
    %v4227 = vld [vmem:[#allocation9 + $0x3c0] sm:$0xff]
    %v4228 = vld [vmem:[#allocation9 + $0x3c8] sm:$0xff]
    %v4229 = vld [vmem:[#allocation9 + $0x3d0] sm:$0xff]
    %v4230 = vld [vmem:[#allocation9 + $0x3d8] sm:$0xff]
    %v4231 = vld [vmem:[#allocation9 + $0x3e0] sm:$0xff]
    %v4232 = vld [vmem:[#allocation9 + $0x3e8] sm:$0xff]
    %v4233 = vld [vmem:[#allocation9 + $0x3f0] sm:$0xff]
    %v4234 = vld [vmem:[#allocation9 + $0x3f8] sm:$0xff]
    %v4235 = vld [vmem:[#allocation10] sm:$0x3]
    %v4237 = vperm.slane %v4235, 0
    %v4238 = vperm.slane %v4235, 1
    %4241 = vmatpush.msra.mxu0 %v4137
    %4242 = vmatpush.msra.mxu0 %v4135
    %4243 = vmatpush.msra.mxu0 %v4133
    %4244 = vmatpush.msra.mxu0 %v4131
    %4245 = vmatpush.msra.mxu0 %v4129
    %4246 = vmatpush.msra.mxu0 %v4127
    %4247 = vmatpush.msra.mxu0 %v4125
    %4248 = vmatpush.msra.mxu0 %v4123
    %4249 = vmatpush.msra.mxu0 %v4121
    %4250 = vmatpush.msra.mxu0 %v4119
    %4251 = vmatpush.msra.mxu0 %v4117
    %4252 = vmatpush.msra.mxu0 %v4115
    %4253 = vmatpush.msra.mxu0 %v4113
    %4254 = vmatpush.msra.mxu0 %v4111
    %4255 = vmatpush.msra.mxu0 %v4109
    %4256 = vmatpush.msra.mxu0 %v4107
    %4257 = vmatmul.f32.gmra.mxu0 %v4103
    %v4258 = vpop.f32.mrf.mxu0
    %v4259 = vadd.f32 %v4237, %v4258
    %4260 = vdwg.mxu0
    %4261 = vmatpush.msra.mxu0 %v4169
    %4262 = vmatpush.msra.mxu0 %v4167
    %4263 = vmatpush.msra.mxu0 %v4165
    %4264 = vmatpush.msra.mxu0 %v4163
    %4265 = vmatpush.msra.mxu0 %v4161
    %4266 = vmatpush.msra.mxu0 %v4159
    %4267 = vmatpush.msra.mxu0 %v4157
    %4268 = vmatpush.msra.mxu0 %v4155
    %4269 = vmatpush.msra.mxu0 %v4153
    %4270 = vmatpush.msra.mxu0 %v4151
    %4271 = vmatpush.msra.mxu0 %v4149
    %4272 = vmatpush.msra.mxu0 %v4147
    %4273 = vmatpush.msra.mxu0 %v4145
    %4274 = vmatpush.msra.mxu0 %v4143
    %4275 = vmatpush.msra.mxu0 %v4141
    %4276 = vmatpush.msra.mxu0 %v4139
    %4277 = vmatmul.f32.gmra.mxu0 %v4104
    %v4278 = vpop.f32.mrf.mxu0
    %v4279 = vadd.f32 %v4259, %v4278
    %4280 = vdwg.mxu0
    %4281 = vmatpush.msra.mxu0 %v4201
    %4282 = vmatpush.msra.mxu0 %v4199
    %4283 = vmatpush.msra.mxu0 %v4197
    %4284 = vmatpush.msra.mxu0 %v4195
    %4285 = vmatpush.msra.mxu0 %v4193
    %4286 = vmatpush.msra.mxu0 %v4191
    %4287 = vmatpush.msra.mxu0 %v4189
    %4288 = vmatpush.msra.mxu0 %v4187
    %4289 = vmatpush.msra.mxu0 %v4185
    %4290 = vmatpush.msra.mxu0 %v4183
    %4291 = vmatpush.msra.mxu0 %v4181
    %4292 = vmatpush.msra.mxu0 %v4179
    %4293 = vmatpush.msra.mxu0 %v4177
    %4294 = vmatpush.msra.mxu0 %v4175
    %4295 = vmatpush.msra.mxu0 %v4173
    %4296 = vmatpush.msra.mxu0 %v4171
    %4297 = vmatmul.f32.gmra.mxu0 %v4105
    %v4298 = vpop.f32.mrf.mxu0
    %v4299 = vadd.f32 %v4279, %v4298
    %4300 = vdwg.mxu0
    %4301 = vmatpush.msra.mxu0 %v4233
    %4302 = vmatpush.msra.mxu0 %v4231
    %4303 = vmatpush.msra.mxu0 %v4229
    %4304 = vmatpush.msra.mxu0 %v4227
    %4305 = vmatpush.msra.mxu0 %v4225
    %4306 = vmatpush.msra.mxu0 %v4223
    %4307 = vmatpush.msra.mxu0 %v4221
    %4308 = vmatpush.msra.mxu0 %v4219
    %4309 = vmatpush.msra.mxu0 %v4217
    %4310 = vmatpush.msra.mxu0 %v4215
    %4311 = vmatpush.msra.mxu0 %v4213
    %4312 = vmatpush.msra.mxu0 %v4211
    %4313 = vmatpush.msra.mxu0 %v4209
    %4314 = vmatpush.msra.mxu0 %v4207
    %4315 = vmatpush.msra.mxu0 %v4205
    %4316 = vmatpush.msra.mxu0 %v4203
    %4317 = vmatmul.f32.gmra.mxu0 %v4106
    %v4318 = vpop.f32.mrf.mxu0
    %v4319 = vadd.f32 %v4299, %v4318
    %4320 = vdwg.mxu0
    %4321 = vmatpush.msra.mxu0 %v4138
    %4322 = vmatpush.msra.mxu0 %v4136
    %4323 = vmatpush.msra.mxu0 %v4134
    %4324 = vmatpush.msra.mxu0 %v4132
    %4325 = vmatpush.msra.mxu0 %v4130
    %4326 = vmatpush.msra.mxu0 %v4128
    %4327 = vmatpush.msra.mxu0 %v4126
    %4328 = vmatpush.msra.mxu0 %v4124
    %4329 = vmatpush.msra.mxu0 %v4122
    %4330 = vmatpush.msra.mxu0 %v4120
    %4331 = vmatpush.msra.mxu0 %v4118
    %4332 = vmatpush.msra.mxu0 %v4116
    %4333 = vmatpush.msra.mxu0 %v4114
    %4334 = vmatpush.msra.mxu0 %v4112
    %4335 = vmatpush.msra.mxu0 %v4110
    %4336 = vmatpush.msra.mxu0 %v4108
    %4337 = vmatmul.f32.gmra.mxu0 %v4103
    %v4338 = vpop.f32.mrf.mxu0
    %v4339 = vadd.f32 %v4238, %v4338
    %4340 = vdwg.mxu0
    %4341 = vmatpush.msra.mxu0 %v4170
    %4342 = vmatpush.msra.mxu0 %v4168
    %4343 = vmatpush.msra.mxu0 %v4166
    %4344 = vmatpush.msra.mxu0 %v4164
    %4345 = vmatpush.msra.mxu0 %v4162
    %4346 = vmatpush.msra.mxu0 %v4160
    %4347 = vmatpush.msra.mxu0 %v4158
    %4348 = vmatpush.msra.mxu0 %v4156
    %4349 = vmatpush.msra.mxu0 %v4154
    %4350 = vmatpush.msra.mxu0 %v4152
    %4351 = vmatpush.msra.mxu0 %v4150
    %4352 = vmatpush.msra.mxu0 %v4148
    %4353 = vmatpush.msra.mxu0 %v4146
    %4354 = vmatpush.msra.mxu0 %v4144
    %4355 = vmatpush.msra.mxu0 %v4142
    %4356 = vmatpush.msra.mxu0 %v4140
    %4357 = vmatmul.f32.gmra.mxu0 %v4104
    %v4358 = vpop.f32.mrf.mxu0
    %v4359 = vadd.f32 %v4339, %v4358
    %4360 = vdwg.mxu0
    %4361 = vmatpush.msra.mxu0 %v4202
    %4362 = vmatpush.msra.mxu0 %v4200
    %4363 = vmatpush.msra.mxu0 %v4198
    %4364 = vmatpush.msra.mxu0 %v4196
    %4365 = vmatpush.msra.mxu0 %v4194
    %4366 = vmatpush.msra.mxu0 %v4192
    %4367 = vmatpush.msra.mxu0 %v4190
    %4368 = vmatpush.msra.mxu0 %v4188
    %4369 = vmatpush.msra.mxu0 %v4186
    %4370 = vmatpush.msra.mxu0 %v4184
    %4371 = vmatpush.msra.mxu0 %v4182
    %4372 = vmatpush.msra.mxu0 %v4180
    %4373 = vmatpush.msra.mxu0 %v4178
    %4374 = vmatpush.msra.mxu0 %v4176
    %4375 = vmatpush.msra.mxu0 %v4174
    %4376 = vmatpush.msra.mxu0 %v4172
    %4377 = vmatmul.f32.gmra.mxu0 %v4105
    %v4378 = vpop.f32.mrf.mxu0
    %v4379 = vadd.f32 %v4359, %v4378
    %4380 = vdwg.mxu0
    %4381 = vmatpush.msra.mxu0 %v4234
    %4382 = vmatpush.msra.mxu0 %v4232
    %4383 = vmatpush.msra.mxu0 %v4230
    %4384 = vmatpush.msra.mxu0 %v4228
    %4385 = vmatpush.msra.mxu0 %v4226
    %4386 = vmatpush.msra.mxu0 %v4224
    %4387 = vmatpush.msra.mxu0 %v4222
    %4388 = vmatpush.msra.mxu0 %v4220
    %4389 = vmatpush.msra.mxu0 %v4218
    %4390 = vmatpush.msra.mxu0 %v4216
    %4391 = vmatpush.msra.mxu0 %v4214
    %4392 = vmatpush.msra.mxu0 %v4212
    %4393 = vmatpush.msra.mxu0 %v4210
    %4394 = vmatpush.msra.mxu0 %v4208
    %4395 = vmatpush.msra.mxu0 %v4206
    %4396 = vmatpush.msra.mxu0 %v4204
    %4397 = vmatmul.f32.gmra.mxu0 %v4106
    %v4398 = vpop.f32.mrf.mxu0
    %v4399 = vadd.f32 %v4379, %v4398
    %4400 = vdwg.mxu0
    %v4401 = vmul.f32 %v4319, 0.01
    %v4402 = vmul.f32 %v4399, 0.01
    %v4403 = vmax.f32 %v4319, %v4401
    %v4404 = vmax.f32 %v4399, %v4402
    %v4405 = vld [vmem:[#allocation12] sm:$0xff]
    %v4406 = vld [vmem:[#allocation12 + $0x8] sm:$0xff]
    %v4407 = vld [vmem:[#allocation12 + $0x10] sm:$0xff]
    %v4408 = vld [vmem:[#allocation12 + $0x18] sm:$0xff]
    %v4409 = vld [vmem:[#allocation12 + $0x20] sm:$0xff]
    %v4410 = vld [vmem:[#allocation12 + $0x28] sm:$0xff]
    %v4411 = vld [vmem:[#allocation12 + $0x30] sm:$0xff]
    %v4412 = vld [vmem:[#allocation12 + $0x38] sm:$0xff]
    %v4413 = vld [vmem:[#allocation12 + $0x40] sm:$0xff]
    %v4414 = vld [vmem:[#allocation12 + $0x48] sm:$0xff]
    %v4415 = vld [vmem:[#allocation12 + $0x50] sm:$0xff]
    %v4416 = vld [vmem:[#allocation12 + $0x58] sm:$0xff]
    %v4417 = vld [vmem:[#allocation12 + $0x60] sm:$0xff]
    %v4418 = vld [vmem:[#allocation12 + $0x68] sm:$0xff]
    %v4419 = vld [vmem:[#allocation12 + $0x70] sm:$0xff]
    %v4420 = vld [vmem:[#allocation12 + $0x78] sm:$0xff]
    %v4421 = vld [vmem:[#allocation12 + $0x80] sm:$0xff]
    %v4422 = vld [vmem:[#allocation12 + $0x88] sm:$0xff]
    %v4423 = vld [vmem:[#allocation12 + $0x90] sm:$0xff]
    %v4424 = vld [vmem:[#allocation12 + $0x98] sm:$0xff]
    %v4425 = vld [vmem:[#allocation12 + $0xa0] sm:$0xff]
    %v4426 = vld [vmem:[#allocation12 + $0xa8] sm:$0xff]
    %v4427 = vld [vmem:[#allocation12 + $0xb0] sm:$0xff]
    %v4428 = vld [vmem:[#allocation12 + $0xb8] sm:$0xff]
    %v4429 = vld [vmem:[#allocation12 + $0xc0] sm:$0xff]
    %v4430 = vld [vmem:[#allocation12 + $0xc8] sm:$0xff]
    %v4431 = vld [vmem:[#allocation12 + $0xd0] sm:$0xff]
    %v4432 = vld [vmem:[#allocation12 + $0xd8] sm:$0xff]
    %v4433 = vld [vmem:[#allocation12 + $0xe0] sm:$0xff]
    %v4434 = vld [vmem:[#allocation12 + $0xe8] sm:$0xff]
    %v4435 = vld [vmem:[#allocation12 + $0xf0] sm:$0xff]
    %v4436 = vld [vmem:[#allocation12 + $0xf8] sm:$0xff]
    %v4437 = vld [vmem:[#allocation13] sm:$0x1]
    %v4439 = vperm.slane %v4437, 0
    %4441 = vmatpush.msra.mxu0 %v4420
    %4442 = vmatpush.msra.mxu0 %v4419
    %4443 = vmatpush.msra.mxu0 %v4418
    %4444 = vmatpush.msra.mxu0 %v4417
    %4445 = vmatpush.msra.mxu0 %v4416
    %4446 = vmatpush.msra.mxu0 %v4415
    %4447 = vmatpush.msra.mxu0 %v4414
    %4448 = vmatpush.msra.mxu0 %v4413
    %4449 = vmatpush.msra.mxu0 %v4412
    %4450 = vmatpush.msra.mxu0 %v4411
    %4451 = vmatpush.msra.mxu0 %v4410
    %4452 = vmatpush.msra.mxu0 %v4409
    %4453 = vmatpush.msra.mxu0 %v4408
    %4454 = vmatpush.msra.mxu0 %v4407
    %4455 = vmatpush.msra.mxu0 %v4406
    %4456 = vmatpush.msra.mxu0 %v4405
    %4457 = vmatmul.f32.gmra.mxu0 %v4403
    %v4458 = vpop.f32.mrf.mxu0
    %v4459 = vadd.f32 %v4439, %v4458
    %4460 = vdwg.mxu0
    %4461 = vmatpush.msra.mxu0 %v4436
    %4462 = vmatpush.msra.mxu0 %v4435
    %4463 = vmatpush.msra.mxu0 %v4434
    %4464 = vmatpush.msra.mxu0 %v4433
    %4465 = vmatpush.msra.mxu0 %v4432
    %4466 = vmatpush.msra.mxu0 %v4431
    %4467 = vmatpush.msra.mxu0 %v4430
    %4468 = vmatpush.msra.mxu0 %v4429
    %4469 = vmatpush.msra.mxu0 %v4428
    %4470 = vmatpush.msra.mxu0 %v4427
    %4471 = vmatpush.msra.mxu0 %v4426
    %4472 = vmatpush.msra.mxu0 %v4425
    %4473 = vmatpush.msra.mxu0 %v4424
    %4474 = vmatpush.msra.mxu0 %v4423
    %4475 = vmatpush.msra.mxu0 %v4422
    %4476 = vmatpush.msra.mxu0 %v4421
    %4477 = vmatmul.f32.gmra.mxu0 %v4404
    %v4478 = vpop.f32.mrf.mxu0
    %v4479 = vadd.f32 %v4459, %v4478
    %4480 = vdwg.mxu0
    %4481 = vst [vmem:[%s16] sm:$0x3] %v4479
    // Predicated region
    $region98: #{critic2_forward.1} parent=1 // pred_check
      _
    $region99: #{critic2_forward.1} parent=1 // pred_check_branch
      %4483 = sbr.rel (0) target = $region101
    $region100: #{critic2_forward.1} parent=1 // pred_region
      _
    $region101: #{critic2_forward.1} parent=1 // pred_fallthru
      _
    // Predicated region
    $region102: #{critic2_forward.1} parent=1 // pred_check
      _
    $region103: #{critic2_forward.1} parent=1 // pred_check_branch
      %4485 = sbr.rel (0) target = $region105
    $region104: #{critic2_forward.1} parent=1 // pred_region
      _
    $region105: #{critic2_forward.1} parent=1 // pred_fallthru
      _
    %4486 = vsyncpa [#allocation3], 1
    %4487 = vsyncpa [#allocation5], 1
    %4488 = vsyncpa [#allocation8], 1
    %4489 = vsyncpa [#allocation11], 1
    %4490 = vsyncpa [#allocation14], 1

</llo_original>
